<compile_context>
chip_gen: v7x
topology: tpu7x:2x2x1
jax: 0.10.0
libtpu: 0.0.40
codegen_flags: <defaults>
</compile_context>

<pallas_src>
import warnings
import numpy as np
import jax
import jax.numpy as jnp
from jax.experimental import pallas as pl
from jax.experimental.pallas import tpu as pltpu


def _recon_kernel(bead_pos_ref, rel_ref, lvl_mask_ref, anchor_oh_ref,
                  scat_oh_ref, w_ref, inv_cnt_ref, out_ref):
    # Per bead-tile shapes:
    #   bead_pos_ref : [TB, 3, 1]    f32
    #   rel_ref      : [TB, 3, K]    f32
    #   lvl_mask_ref : [L, TB, K]    f32  ({0,1})
    #   anchor_oh_ref: [L, TB, K, K] bf16 one-hot: [l,i,k,j]=1 iff anchor(l,i,j)==k
    #   scat_oh_ref  : [TB, K, A]    bf16 one-hot slot->atom (0 on invalid slots)
    #   w_ref        : [TB, K]       f32  (0 on invalid slots)
    #   inv_cnt_ref  : [1, A]        f32  1/count, NaN where count==0
    #   out_ref      : [3, A]        f32  resident accumulator across the grid
    bead_pos = bead_pos_ref[...]                       # [TB, 3, 1]
    rel = rel_ref[...]                                 # [TB, 3, K]
    TB, _, K = rel_ref.shape
    L = lvl_mask_ref.shape[0]

    # level 0: every slot starts at its bead position (lane broadcast)
    slot_pos = jnp.broadcast_to(bead_pos, (TB, 3, K))

    # hierarchical placement, levels 1..L-1 (static unroll).  Anchors are read
    # from the *pre-level* positions, matching the reference gather-then-write.
    for lvl in range(1, L):
        aoh = anchor_oh_ref[lvl].astype(jnp.float32)   # [TB, K, K]
        # anchor_pos[i,c,j] = slot_pos[i, c, anchor_slot[i,j]]   (MXU, K lanes)
        anchor_pos = jnp.einsum('ick,ikj->icj', slot_pos, aoh,
                                preferred_element_type=jnp.float32)
        m = lvl_mask_ref[lvl][:, None, :]              # [TB, 1, K] in {0,1}
        # arithmetic blend: m=1 -> anchor_pos + rel, m=0 -> keep (pure FMA)
        slot_pos = slot_pos + m * (anchor_pos + rel - slot_pos)

    # centre-of-mass correction (weights are 0 on invalid slots)
    w = w_ref[...][:, None, :]                         # [TB, 1, K]
    cm = jnp.sum(w * slot_pos, axis=2, keepdims=True)  # [TB, 3, 1]
    slot_pos = slot_pos - cm + bead_pos

    # scatter contribution of this bead tile: MXU matmul, atoms on lanes
    soh = scat_oh_ref[...].astype(jnp.float32)         # [TB, K, A]
    per_bead = jnp.einsum('ick,ika->ica', slot_pos, soh,
                          preferred_element_type=jnp.float32)   # [TB, 3, A]
    partial = jnp.sum(per_bead, axis=0)                # [3, A]

    tile = pl.program_id(0)

    @pl.when(tile == 0)
    def _():
        out_ref[...] = jnp.zeros_like(out_ref)

    out_ref[...] += partial

    @pl.when(tile == pl.num_programs(0) - 1)
    def _():
        # nanmean: unmapped atoms have acc==0, inv_cnt==NaN -> 0*NaN = NaN
        out_ref[...] = out_ref[...] * inv_cnt_ref[...]


def hierarchical_reconstruction(bead_pos, rel_vecs, lvl_mask, anchor_oh_t,
                                scat_oh, weights, inv_cnt, n_atoms,
                                *, bead_tile=8):
    N, K = weights.shape
    L = lvl_mask.shape[0]
    A_pad = inv_cnt.shape[-1]
    assert N % bead_tile == 0
    grid = (N // bead_tile,)

    flops = int(N * (L - 1) * 2 * 3 * K * K + N * 2 * 3 * K * A_pad)
    bytes_accessed = int((bead_pos.size + rel_vecs.size + lvl_mask.size
                          + weights.size + inv_cnt.size) * 4
                         + (anchor_oh_t.size + scat_oh.size) * 2
                         + 3 * A_pad * 4)

    out_t = pl.pallas_call(
        _recon_kernel,
        out_shape=jax.ShapeDtypeStruct((3, A_pad), jnp.float32),
        grid_spec=pltpu.PrefetchScalarGridSpec(
            num_scalar_prefetch=0,
            grid=grid,
            in_specs=[
                pl.BlockSpec((bead_tile, 3, 1), lambda i: (i, 0, 0)),      # bead_pos
                pl.BlockSpec((bead_tile, 3, K), lambda i: (i, 0, 0)),      # rel
                pl.BlockSpec((L, bead_tile, K), lambda i: (0, i, 0)),      # lvl_mask
                pl.BlockSpec((L, bead_tile, K, K), lambda i: (0, i, 0, 0)),# anchor one-hot
                pl.BlockSpec((bead_tile, K, A_pad), lambda i: (i, 0, 0)),  # scatter one-hot
                pl.BlockSpec((bead_tile, K), lambda i: (i, 0)),            # weights
                pl.BlockSpec((1, A_pad), lambda i: (0, 0)),                # 1/count
            ],
            out_specs=pl.BlockSpec((3, A_pad), lambda i: (0, 0)),
        ),
        compiler_params=pltpu.CompilerParams(
            dimension_semantics=("arbitrary",)),
        cost_estimate=pl.CostEstimate(flops=flops, transcendentals=0,
                                      bytes_accessed=bytes_accessed),
    )(bead_pos[:, :, None],               # [N, 3, 1]
      rel_vecs.transpose(0, 2, 1),        # [N, 3, K]
      lvl_mask, anchor_oh_t, scat_oh, weights, inv_cnt)

    # strip atom padding, back to the module's [A, 3] layout (free plumbing)
    return out_t[:, :n_atoms].T


def reference_numpy(bead_pos, rel_vecs, b2a_idcs, weights, lvl_mask,
                    anchor_slot, n_atoms):
    """Direct transcription of the PyTorch forward (single batch)."""
    bead_pos = np.asarray(bead_pos, np.float32)
    rel = np.asarray(rel_vecs, np.float32)
    N, K = b2a_idcs.shape
    L = lvl_mask.shape[0]
    recon = np.full((N, n_atoms, 3), np.nan, dtype=np.float32)
    rows, cols = np.nonzero(b2a_idcs >= 0)
    recon[rows, b2a_idcs[rows, cols]] = bead_pos[rows]
    for lvl in range(1, L):
        mrow, mcol = np.nonzero(lvl_mask[lvl] > 0.5)
        anchor_atom = b2a_idcs[mrow, anchor_slot[lvl, mrow, mcol]]
        upd = recon[mrow, anchor_atom] + rel[mrow, mcol]
        recon[mrow, b2a_idcs[mrow, mcol]] = upd
    cm = np.zeros((N, 3), dtype=np.float32)
    np.add.at(cm, rows,
              recon[rows, b2a_idcs[rows, cols]] * weights[rows, cols][:, None])
    shifts = cm - bead_pos
    recon[rows, b2a_idcs[rows, cols]] -= shifts[rows]
    with np.errstate(invalid="ignore"), warnings.catch_warnings():
        warnings.simplefilter("ignore")
        out = np.nanmean(recon, axis=0)
    return out.astype(np.float32)


if __name__ == "__main__":
    # small, deterministic synthetic problem
    N, K, A, L = 16, 8, 20, 4      # beads, slots per bead, total atoms, levels
    n_valid = 4                    # valid slots per bead
    A_PAD = 128                    # lane-dense padded atom axis
    TB = 8                         # bead tile

    # bead -> atom mapping (-1 = unused slot); atoms 16..19 are never mapped
    b2a_idcs = np.full((N, K), -1, dtype=np.int32)
    for i in range(N):
        for j in range(n_valid):
            b2a_idcs[i, j] = (2 * i + j) % 16

    # hierarchy: slot l is placed at level l, anchored on slot l-1
    lvl_mask = np.zeros((L, N, K), dtype=np.float32)
    lvl_mask[0, :, 0] = 1.0                       # level 0 (skipped by the loop)
    anchor_slot = np.zeros((L, N, K), dtype=np.int32)
    for lvl in range(1, L):
        lvl_mask[lvl, :, lvl] = 1.0
        anchor_slot[lvl, :, lvl] = lvl - 1

    key = jax.random.PRNGKey(0)
    k1, k2, k3 = jax.random.split(key, 3)
    bead_pos = jax.random.normal(k1, (N, 3), jnp.float32) * 2.0
    rel_vecs = jax.random.normal(k2, (N, K, 3), jnp.float32) * 0.5

    valid = (b2a_idcs >= 0).astype(np.float32)
    w_raw = np.asarray(jax.random.uniform(k3, (N, K), jnp.float32)) + 0.1
    weights = w_raw * valid
    weights = (weights / weights.sum(axis=1, keepdims=True)).astype(np.float32)

    # dense encodings of the integer gather/scatter maps (host glue)
    # anchor_oh_t[l, i, k, j] = 1  iff  anchor_slot[l, i, j] == k   (transposed)
    anchor_oh_t = (anchor_slot[:, :, None, :] ==
                   np.arange(K)[None, None, :, None]).astype(np.float32)
    # scat_oh[i, k, a] = 1 iff bead i slot k maps to atom a (0 on invalid slots)
    scat_oh = ((b2a_idcs[:, :, None] == np.arange(A_PAD)[None, None, :]) &
               (b2a_idcs[:, :, None] >= 0)).astype(np.float32)
    cnt = scat_oh.sum(axis=(0, 1))
    inv_cnt = np.where(cnt > 0, 1.0 / np.maximum(cnt, 1.0),
                       np.nan).astype(np.float32)[None, :]

    out = hierarchical_reconstruction(
        bead_pos,
        rel_vecs,
        jnp.asarray(lvl_mask, jnp.float32),
        jnp.asarray(anchor_oh_t, jnp.bfloat16),
        jnp.asarray(scat_oh, jnp.bfloat16),
        jnp.asarray(weights, jnp.float32),
        jnp.asarray(inv_cnt, jnp.float32),
        A,
        bead_tile=TB,
    )
    out = jax.block_until_ready(out)

    ref = reference_numpy(np.asarray(bead_pos), np.asarray(rel_vecs),
                          b2a_idcs, weights, lvl_mask, anchor_slot, A)

    if not np.allclose(np.asarray(out), ref, atol=1e-5, rtol=1e-5,
                       equal_nan=True):
        raise AssertionError(
            f"mismatch vs reference\nkernel:\n{np.asarray(out)}\nref:\n{ref}")
    print("KERNEL_OK")
</pallas_src>

<mosaic_0001>
module attributes {stable_mosaic.version = 11 : i64} {
  func.func @_recon_kernel(%arg0: i32, %arg1: memref<8x3x1xf32, #tpu.memory_space<vmem>>, %arg2: memref<8x3x8xf32, #tpu.memory_space<vmem>>, %arg3: memref<4x8x8xf32, #tpu.memory_space<vmem>>, %arg4: memref<4x8x8x8xbf16, #tpu.memory_space<vmem>>, %arg5: memref<8x8x128xbf16, #tpu.memory_space<vmem>>, %arg6: memref<8x8xf32, #tpu.memory_space<vmem>>, %arg7: memref<1x128xf32, #tpu.memory_space<vmem>>, %arg8: memref<3x128xf32, #tpu.memory_space<vmem>>) attributes {dimension_semantics = [#tpu.dimension_semantics<arbitrary>], iteration_bounds = array<i64: 2>, scalar_prefetch = 0 : i64, scratch_operands = 0 : i64, tpu.core_type = #tpu.core_type<tc>, window_params = [{transform_indices = @transform_0, window_bounds = array<i64: 8, 3, 1>}, {transform_indices = @transform_1, window_bounds = array<i64: 8, 3, 8>}, {transform_indices = @transform_2, window_bounds = array<i64: 4, 8, 8>}, {transform_indices = @transform_3, window_bounds = array<i64: 4, 8, 8, 8>}, {transform_indices = @transform_4, window_bounds = array<i64: 8, 8, 128>}, {transform_indices = @transform_5, window_bounds = array<i64: 8, 8>}, {pipeline_mode = #tpu.pipeline_mode<synchronous>, transform_indices = @transform_6, window_bounds = array<i64: 1, 128>}, {pipeline_mode = #tpu.pipeline_mode<synchronous>, transform_indices = @transform_7, window_bounds = array<i64: 3, 128>}]} {
    %c0 = arith.constant 0 : index
    %c0_0 = arith.constant 0 : index
    %c0_1 = arith.constant 0 : index
    %0 = vector.load %arg1[%c0, %c0_0, %c0_1] : memref<8x3x1xf32, #tpu.memory_space<vmem>>, vector<8x3x1xf32>
    %c0_2 = arith.constant 0 : index
    %c0_3 = arith.constant 0 : index
    %c0_4 = arith.constant 0 : index
    %1 = vector.load %arg2[%c0_2, %c0_3, %c0_4] : memref<8x3x8xf32, #tpu.memory_space<vmem>>, vector<8x3x8xf32>
    %2 = vector.shape_cast %0 : vector<8x3x1xf32> to vector<8x3x1xf32>
    %3 = vector.broadcast %2 : vector<8x3x1xf32> to vector<8x3x8xf32>
    %c1 = arith.constant 1 : index
    %c0_5 = arith.constant 0 : index
    %c0_6 = arith.constant 0 : index
    %c0_7 = arith.constant 0 : index
    %4 = vector.load %arg4[%c1, %c0_5, %c0_6, %c0_7] : memref<4x8x8x8xbf16, #tpu.memory_space<vmem>>, vector<1x8x8x8xbf16>
    %5 = vector.shape_cast %4 : vector<1x8x8x8xbf16> to vector<8x8x8xbf16>
    %6 = arith.extf %5 : vector<8x8x8xbf16> to vector<8x8x8xf32>
    "tpu.trace_start"() <{level = 10 : i32, message = "ick,ikj->icj"}> : () -> ()
    %cst = arith.constant dense<0.000000e+00> : vector<8x3x8xf32>
    %7 = tpu.matmul %3, %6, %cst {dimension_numbers = #tpu.dot_dimension_numbers<[2], [1], [1], [2], [0, 0, 0, 1, 1, 2], [0], [0]>} : vector<8x3x8xf32>, vector<8x8x8xf32>, vector<8x3x8xf32> -> vector<8x3x8xf32>
    "tpu.trace_stop"() : () -> ()
    %c1_8 = arith.constant 1 : index
    %c0_9 = arith.constant 0 : index
    %c0_10 = arith.constant 0 : index
    %8 = vector.load %arg3[%c1_8, %c0_9, %c0_10] : memref<4x8x8xf32, #tpu.memory_space<vmem>>, vector<1x8x8xf32>
    %9 = vector.shape_cast %8 : vector<1x8x8xf32> to vector<8x8xf32>
    %10 = vector.shape_cast %9 : vector<8x8xf32> to vector<8x1x8xf32>
    %11 = arith.addf %7, %1 : vector<8x3x8xf32>
    %12 = arith.subf %11, %3 : vector<8x3x8xf32>
    %13 = vector.broadcast %10 : vector<8x1x8xf32> to vector<8x3x8xf32>
    %14 = arith.mulf %13, %12 : vector<8x3x8xf32>
    %15 = arith.addf %3, %14 : vector<8x3x8xf32>
    %c2 = arith.constant 2 : index
    %c0_11 = arith.constant 0 : index
    %c0_12 = arith.constant 0 : index
    %c0_13 = arith.constant 0 : index
    %16 = vector.load %arg4[%c2, %c0_11, %c0_12, %c0_13] : memref<4x8x8x8xbf16, #tpu.memory_space<vmem>>, vector<1x8x8x8xbf16>
    %17 = vector.shape_cast %16 : vector<1x8x8x8xbf16> to vector<8x8x8xbf16>
    %18 = arith.extf %17 : vector<8x8x8xbf16> to vector<8x8x8xf32>
    "tpu.trace_start"() <{level = 10 : i32, message = "ick,ikj->icj"}> : () -> ()
    %cst_14 = arith.constant dense<0.000000e+00> : vector<8x3x8xf32>
    %19 = tpu.matmul %15, %18, %cst_14 {dimension_numbers = #tpu.dot_dimension_numbers<[2], [1], [1], [2], [0, 0, 0, 1, 1, 2], [0], [0]>} : vector<8x3x8xf32>, vector<8x8x8xf32>, vector<8x3x8xf32> -> vector<8x3x8xf32>
    "tpu.trace_stop"() : () -> ()
    %c2_15 = arith.constant 2 : index
    %c0_16 = arith.constant 0 : index
    %c0_17 = arith.constant 0 : index
    %20 = vector.load %arg3[%c2_15, %c0_16, %c0_17] : memref<4x8x8xf32, #tpu.memory_space<vmem>>, vector<1x8x8xf32>
    %21 = vector.shape_cast %20 : vector<1x8x8xf32> to vector<8x8xf32>
    %22 = vector.shape_cast %21 : vector<8x8xf32> to vector<8x1x8xf32>
    %23 = arith.addf %19, %1 : vector<8x3x8xf32>
    %24 = arith.subf %23, %15 : vector<8x3x8xf32>
    %25 = vector.broadcast %22 : vector<8x1x8xf32> to vector<8x3x8xf32>
    %26 = arith.mulf %25, %24 : vector<8x3x8xf32>
    %27 = arith.addf %15, %26 : vector<8x3x8xf32>
    %c3 = arith.constant 3 : index
    %c0_18 = arith.constant 0 : index
    %c0_19 = arith.constant 0 : index
    %c0_20 = arith.constant 0 : index
    %28 = vector.load %arg4[%c3, %c0_18, %c0_19, %c0_20] : memref<4x8x8x8xbf16, #tpu.memory_space<vmem>>, vector<1x8x8x8xbf16>
    %29 = vector.shape_cast %28 : vector<1x8x8x8xbf16> to vector<8x8x8xbf16>
    %30 = arith.extf %29 : vector<8x8x8xbf16> to vector<8x8x8xf32>
    "tpu.trace_start"() <{level = 10 : i32, message = "ick,ikj->icj"}> : () -> ()
    %cst_21 = arith.constant dense<0.000000e+00> : vector<8x3x8xf32>
    %31 = tpu.matmul %27, %30, %cst_21 {dimension_numbers = #tpu.dot_dimension_numbers<[2], [1], [1], [2], [0, 0, 0, 1, 1, 2], [0], [0]>} : vector<8x3x8xf32>, vector<8x8x8xf32>, vector<8x3x8xf32> -> vector<8x3x8xf32>
    "tpu.trace_stop"() : () -> ()
    %c3_22 = arith.constant 3 : index
    %c0_23 = arith.constant 0 : index
    %c0_24 = arith.constant 0 : index
    %32 = vector.load %arg3[%c3_22, %c0_23, %c0_24] : memref<4x8x8xf32, #tpu.memory_space<vmem>>, vector<1x8x8xf32>
    %33 = vector.shape_cast %32 : vector<1x8x8xf32> to vector<8x8xf32>
    %34 = vector.shape_cast %33 : vector<8x8xf32> to vector<8x1x8xf32>
    %35 = arith.addf %31, %1 : vector<8x3x8xf32>
    %36 = arith.subf %35, %27 : vector<8x3x8xf32>
    %37 = vector.broadcast %34 : vector<8x1x8xf32> to vector<8x3x8xf32>
    %38 = arith.mulf %37, %36 : vector<8x3x8xf32>
    %39 = arith.addf %27, %38 : vector<8x3x8xf32>
    %c0_25 = arith.constant 0 : index
    %c0_26 = arith.constant 0 : index
    %40 = vector.load %arg6[%c0_25, %c0_26] : memref<8x8xf32, #tpu.memory_space<vmem>>, vector<8x8xf32>
    %41 = vector.shape_cast %40 : vector<8x8xf32> to vector<8x1x8xf32>
    %42 = vector.broadcast %41 : vector<8x1x8xf32> to vector<8x3x8xf32>
    %43 = arith.mulf %42, %39 : vector<8x3x8xf32>
    %cst_27 = arith.constant dense<0.000000e+00> : vector<8x3xf32>
    %44 = vector.multi_reduction <add>, %43, %cst_27 [2] : vector<8x3x8xf32> to vector<8x3xf32>
    %45 = vector.shape_cast %44 : vector<8x3xf32> to vector<8x3x1xf32>
    %46 = vector.broadcast %45 : vector<8x3x1xf32> to vector<8x3x8xf32>
    %47 = arith.subf %39, %46 : vector<8x3x8xf32>
    %48 = vector.broadcast %0 : vector<8x3x1xf32> to vector<8x3x8xf32>
    %49 = arith.addf %47, %48 : vector<8x3x8xf32>
    %c0_28 = arith.constant 0 : index
    %c0_29 = arith.constant 0 : index
    %c0_30 = arith.constant 0 : index
    %50 = vector.load %arg5[%c0_28, %c0_29, %c0_30] : memref<8x8x128xbf16, #tpu.memory_space<vmem>>, vector<8x8x128xbf16>
    %51 = arith.extf %50 : vector<8x8x128xbf16> to vector<8x8x128xf32>
    "tpu.trace_start"() <{level = 10 : i32, message = "ick,ika->ica"}> : () -> ()
    %cst_31 = arith.constant dense<0.000000e+00> : vector<8x3x128xf32>
    %52 = tpu.matmul %49, %51, %cst_31 {dimension_numbers = #tpu.dot_dimension_numbers<[2], [1], [1], [2], [0, 0, 0, 1, 1, 2], [0], [0]>} : vector<8x3x8xf32>, vector<8x8x128xf32>, vector<8x3x128xf32> -> vector<8x3x128xf32>
    "tpu.trace_stop"() : () -> ()
    %cst_32 = arith.constant dense<0.000000e+00> : vector<3x128xf32>
    %53 = vector.multi_reduction <add>, %52, %cst_32 [0] : vector<8x3x128xf32> to vector<3x128xf32>
    %c0_i32 = arith.constant 0 : i32
    %54 = arith.cmpi eq, %arg0, %c0_i32 : i32
    %55 = arith.extui %54 : i1 to i32
    %c0_i32_33 = arith.constant 0 : i32
    %56 = arith.cmpi ne, %55, %c0_i32_33 : i32
    scf.if %56 {
      %cst_39 = arith.constant 0.000000e+00 : f32
      %63 = vector.broadcast %cst_39 : f32 to vector<3x128xf32>
      %c0_40 = arith.constant 0 : index
      %c0_41 = arith.constant 0 : index
      %64 = vector.load %arg8[%c0_40, %c0_41] : memref<3x128xf32, #tpu.memory_space<vmem>>, vector<3x128xf32>
      tpu.vector_store %arg8[%c0_40, %c0_41], %63 {strides = array<i32>} : memref<3x128xf32, #tpu.memory_space<vmem>>, vector<3x128xf32>,
    } else {
    }
    %c0_34 = arith.constant 0 : index
    %c0_35 = arith.constant 0 : index
    %57 = vector.load %arg8[%c0_34, %c0_35] : memref<3x128xf32, #tpu.memory_space<vmem>>, vector<3x128xf32>
    %58 = arith.addf %57, %53 : vector<3x128xf32>
    %c0_36 = arith.constant 0 : index
    %c0_37 = arith.constant 0 : index
    %59 = vector.load %arg8[%c0_36, %c0_37] : memref<3x128xf32, #tpu.memory_space<vmem>>, vector<3x128xf32>
    tpu.vector_store %arg8[%c0_36, %c0_37], %58 {strides = array<i32>} : memref<3x128xf32, #tpu.memory_space<vmem>>, vector<3x128xf32>,
    %c1_i32 = arith.constant 1 : i32
    %60 = arith.cmpi eq, %arg0, %c1_i32 : i32
    %61 = arith.extui %60 : i1 to i32
    %c0_i32_38 = arith.constant 0 : i32
    %62 = arith.cmpi ne, %61, %c0_i32_38 : i32
    scf.if %62 {
      %c0_39 = arith.constant 0 : index
      %c0_40 = arith.constant 0 : index
      %63 = vector.load %arg8[%c0_39, %c0_40] : memref<3x128xf32, #tpu.memory_space<vmem>>, vector<3x128xf32>
      %c0_41 = arith.constant 0 : index
      %c0_42 = arith.constant 0 : index
      %64 = vector.load %arg7[%c0_41, %c0_42] : memref<1x128xf32, #tpu.memory_space<vmem>>, vector<1x128xf32>
      %65 = vector.broadcast %64 : vector<1x128xf32> to vector<3x128xf32>
      %66 = arith.mulf %63, %65 : vector<3x128xf32>
      %c0_43 = arith.constant 0 : index
      %c0_44 = arith.constant 0 : index
      %67 = vector.load %arg8[%c0_43, %c0_44] : memref<3x128xf32, #tpu.memory_space<vmem>>, vector<3x128xf32>
      tpu.vector_store %arg8[%c0_43, %c0_44], %66 {strides = array<i32>} : memref<3x128xf32, #tpu.memory_space<vmem>>, vector<3x128xf32>,
    } else {
    }
    return
  }
  func.func @transform_0(%arg0: i32) -> (i32, i32, i32) {
    %c0_i32 = arith.constant 0 : i32
    %c0_i32_0 = arith.constant 0 : i32
    %c0_i32_1 = arith.constant 0 : i32
    return %arg0, %c0_i32, %c0_i32_0 : i32, i32, i32
  }
  func.func @transform_1(%arg0: i32) -> (i32, i32, i32) {
    %c0_i32 = arith.constant 0 : i32
    %c0_i32_0 = arith.constant 0 : i32
    %c0_i32_1 = arith.constant 0 : i32
    return %arg0, %c0_i32, %c0_i32_0 : i32, i32, i32
  }
  func.func @transform_2(%arg0: i32) -> (i32, i32, i32) {
    %c0_i32 = arith.constant 0 : i32
    %c0_i32_0 = arith.constant 0 : i32
    %c0_i32_1 = arith.constant 0 : i32
    return %c0_i32, %arg0, %c0_i32_0 : i32, i32, i32
  }
  func.func @transform_3(%arg0: i32) -> (i32, i32, i32, i32) {
    %c0_i32 = arith.constant 0 : i32
    %c0_i32_0 = arith.constant 0 : i32
    %c0_i32_1 = arith.constant 0 : i32
    %c0_i32_2 = arith.constant 0 : i32
    return %c0_i32, %arg0, %c0_i32_0, %c0_i32_1 : i32, i32, i32, i32
  }
  func.func @transform_4(%arg0: i32) -> (i32, i32, i32) {
    %c0_i32 = arith.constant 0 : i32
    %c0_i32_0 = arith.constant 0 : i32
    %c0_i32_1 = arith.constant 0 : i32
    return %arg0, %c0_i32, %c0_i32_0 : i32, i32, i32
  }
  func.func @transform_5(%arg0: i32) -> (i32, i32) {
    %c0_i32 = arith.constant 0 : i32
    %c0_i32_0 = arith.constant 0 : i32
    return %arg0, %c0_i32 : i32, i32
  }
  func.func @transform_6(%arg0: i32) -> (i32, i32) {
    %c0_i32 = arith.constant 0 : i32
    %c0_i32_0 = arith.constant 0 : i32
    %c0_i32_1 = arith.constant 0 : i32
    return %c0_i32, %c0_i32_0 : i32, i32
  }
  func.func @transform_7(%arg0: i32) -> (i32, i32) {
    %c0_i32 = arith.constant 0 : i32
    %c0_i32_0 = arith.constant 0 : i32
    %c0_i32_1 = arith.constant 0 : i32
    return %c0_i32, %c0_i32_0 : i32, i32
  }
}

</mosaic_0001>

<llo_original>
// kernel: tpu_custom_call.1
$region0: #{tpu_custom_call.1}
  #allocation0 [shape = 'u32[]', space=smem, size = 0x4, offset = 0x4, fixed_abs, tag = 'smem constant byte address 0x4 - core index']
  #allocation1 [shape = 'u32[144,128]{1,0:T(1,128)}', space=vmem, size = 0x12000, scoped, tag = 'internal scratch']
  %s0 = inlined_call_operand.vmem [shape: f32[16,3,1], index: 0, kind: input, shape index: {}]
  %s1 = inlined_call_operand.vmem [shape: f32[16,3,8], index: 1, kind: input, shape index: {}]
  %s2 = inlined_call_operand.vmem [shape: f32[4,16,8], index: 2, kind: input, shape index: {}]
  %s3 = inlined_call_operand.vmem [shape: bf16[4,16,8,8], index: 3, kind: input, shape index: {}]
  %s4 = inlined_call_operand.vmem [shape: bf16[16,8,128], index: 4, kind: input, shape index: {}]
  %s5 = inlined_call_operand.vmem [shape: f32[16,8], index: 5, kind: input, shape index: {}]
  %s6 = inlined_call_operand.vmem [shape: f32[1,128], index: 6, kind: input, shape index: {}]
  %s7 = inlined_call_operand.hbm [shape: f32[3,128], index: 7, kind: output, shape index: {}]
  %s8 = sld [smem:[#allocation0]]
  $region148: #{tpu_custom_call.1} parent=0
    _
  %s10 = ssub.s32 1, %s8
  %s11 = scalar_select 0, %s10, %s8
  $region1: #{tpu_custom_call.1} parent=0
    #allocation2 [shape = 'u8[32768]{0}', space=vmem, size = 0x8000, scoped, tag = 'input window, operand 2']
    #allocation3 [shape = 'u8[131072]{0}', space=vmem, size = 0x20000, scoped, tag = 'input window, operand 3']
    #allocation4 [shape = 'u8[2048]{0}', space=vmem, size = 0x800, scoped, tag = 'output window, operand 0, single buffered']
    #allocation5 [shape = 's32[2]{0}', space=sflag, size = 0x8, scoped, tag = 'scoped memory for tpu_custom_call.1']
    %12 = vsyncpa [#allocation5], 0
    loop: start=0, step=1, limit=4
    $region2: #{tpu_custom_call.1} parent=1 // loop_pre_header
      _
    $region3: #{tpu_custom_call.1} parent=1 // loop_header
      %s14 = sphi 0, %s18
      %p15 = scmp.ge.s32.totalorder %s14, 4
      %s24 = sphi 0, %s26
      %s27 = sphi 0, %s24
      %s28 = sphi 0, %s27
      %s44 = sphi 0, %s28
      %s50 = sphi 0, %s52
      %s53 = sphi 0, %s50
      %s54 = sphi 0, %s53
      %s70 = sphi 0, %s54
      %s76 = sphi 0, %s78
      %s79 = sphi 0, %s76
      %s80 = sphi 0, %s79
      %s96 = sphi 0, %s80
      %s102 = sphi 0, %s104
      %s105 = sphi 0, %s102
      %s106 = sphi 0, %s105
      %s122 = sphi 0, %s106
      %s128 = sphi 0, %s130
      %s131 = sphi 0, %s128
      %s132 = sphi 0, %s131
      %s148 = sphi 0, %s132
      %s154 = sphi 0, %s156
      %s157 = sphi 0, %s154
      %s158 = sphi 0, %s157
      %s174 = sphi 0, %s158
      %s178 = sphi 0, %s178
      %s180 = sphi 0, %s178
      %s181 = sphi 0, %s180
      %s195 = sphi 0, %s181
      %s199 = sphi 0, %s199
      %s201 = sphi 0, %s199
      %s202 = sphi 0, %s201
      %s216 = sphi 0, %s202
    $region4: #{tpu_custom_call.1} parent=1 // loop_header_branch
      %17 = sbr.rel (%p15) target = $region8
    $region5: #{tpu_custom_call.1} parent=1 // loop_body
      %s19 = ssub.s32 %s14, 1
      %s20 = ssub.s32 %s14, 2
      %s21 = sadd.s32 %s14, 1
      %s22 = ssub.s32 %s14, %s21
      %p23 = scmp.eq.s32.totalorder %s22, 0
      %s25 = sadd.s32 %s24, 1
      %s26 = scalar_select %p23, %s24, %s25
      %p29 = pneg %p23
      %p30 = scmp.eq.s32.totalorder %s14, 1
      %p31 = por %p29, %p30
      %p32 = scmp.ne.s32.totalorder %s24, %s27
      %p33 = scmp.eq.s32.totalorder %s14, 0
      %p34 = por %p32, %p33
      %p35 = scmp.ne.s32.totalorder %s24, %s27
      %p36 = scmp.eq.s32.totalorder %s19, 1
      %p37 = por %p35, %p36
      %p38 = scmp.ne.s32.totalorder %s27, %s28
      %p39 = scmp.eq.s32.totalorder %s19, 0
      %p40 = por %p38, %p39
      %p41 = scmp.ne.s32.totalorder %s27, %s28
      %p42 = scmp.eq.s32.totalorder %s20, 1
      %p43 = por %p41, %p42
      %p45 = scmp.ne.s32.totalorder %s28, %s44
      %p46 = scmp.eq.s32.totalorder %s20, 0
      %p47 = por %p45, %p46
      %s48 = ssub.s32 %s14, %s21
      %p49 = scmp.eq.s32.totalorder %s48, 0
      %s51 = sadd.s32 %s50, 1
      %s52 = scalar_select %p49, %s50, %s51
      %p55 = pneg %p49
      %p56 = scmp.eq.s32.totalorder %s14, 1
      %p57 = por %p55, %p56
      %p58 = scmp.ne.s32.totalorder %s50, %s53
      %p59 = scmp.eq.s32.totalorder %s14, 0
      %p60 = por %p58, %p59
      %p61 = scmp.ne.s32.totalorder %s50, %s53
      %p62 = scmp.eq.s32.totalorder %s19, 1
      %p63 = por %p61, %p62
      %p64 = scmp.ne.s32.totalorder %s53, %s54
      %p65 = scmp.eq.s32.totalorder %s19, 0
      %p66 = por %p64, %p65
      %p67 = scmp.ne.s32.totalorder %s53, %s54
      %p68 = scmp.eq.s32.totalorder %s20, 1
      %p69 = por %p67, %p68
      %p71 = scmp.ne.s32.totalorder %s54, %s70
      %p72 = scmp.eq.s32.totalorder %s20, 0
      %p73 = por %p71, %p72
      %s74 = ssub.s32 %s14, %s21
      %p75 = scmp.eq.s32.totalorder %s74, 0
      %s77 = sadd.s32 %s76, 1
      %s78 = scalar_select %p75, %s76, %s77
      %p81 = pneg %p75
      %p82 = scmp.eq.s32.totalorder %s14, 1
      %p83 = por %p81, %p82
      %p84 = scmp.ne.s32.totalorder %s76, %s79
      %p85 = scmp.eq.s32.totalorder %s14, 0
      %p86 = por %p84, %p85
      %p87 = scmp.ne.s32.totalorder %s76, %s79
      %p88 = scmp.eq.s32.totalorder %s19, 1
      %p89 = por %p87, %p88
      %p90 = scmp.ne.s32.totalorder %s79, %s80
      %p91 = scmp.eq.s32.totalorder %s19, 0
      %p92 = por %p90, %p91
      %p93 = scmp.ne.s32.totalorder %s79, %s80
      %p94 = scmp.eq.s32.totalorder %s20, 1
      %p95 = por %p93, %p94
      %p97 = scmp.ne.s32.totalorder %s80, %s96
      %p98 = scmp.eq.s32.totalorder %s20, 0
      %p99 = por %p97, %p98
      %s100 = ssub.s32 %s14, %s21
      %p101 = scmp.eq.s32.totalorder %s100, 0
      %s103 = sadd.s32 %s102, 1
      %s104 = scalar_select %p101, %s102, %s103
      %p107 = pneg %p101
      %p108 = scmp.eq.s32.totalorder %s14, 1
      %p109 = por %p107, %p108
      %p110 = scmp.ne.s32.totalorder %s102, %s105
      %p111 = scmp.eq.s32.totalorder %s14, 0
      %p112 = por %p110, %p111
      %p113 = scmp.ne.s32.totalorder %s102, %s105
      %p114 = scmp.eq.s32.totalorder %s19, 1
      %p115 = por %p113, %p114
      %p116 = scmp.ne.s32.totalorder %s105, %s106
      %p117 = scmp.eq.s32.totalorder %s19, 0
      %p118 = por %p116, %p117
      %p119 = scmp.ne.s32.totalorder %s105, %s106
      %p120 = scmp.eq.s32.totalorder %s20, 1
      %p121 = por %p119, %p120
      %p123 = scmp.ne.s32.totalorder %s106, %s122
      %p124 = scmp.eq.s32.totalorder %s20, 0
      %p125 = por %p123, %p124
      %s126 = ssub.s32 %s14, %s21
      %p127 = scmp.eq.s32.totalorder %s126, 0
      %s129 = sadd.s32 %s128, 1
      %s130 = scalar_select %p127, %s128, %s129
      %p133 = pneg %p127
      %p134 = scmp.eq.s32.totalorder %s14, 1
      %p135 = por %p133, %p134
      %p136 = scmp.ne.s32.totalorder %s128, %s131
      %p137 = scmp.eq.s32.totalorder %s14, 0
      %p138 = por %p136, %p137
      %p139 = scmp.ne.s32.totalorder %s128, %s131
      %p140 = scmp.eq.s32.totalorder %s19, 1
      %p141 = por %p139, %p140
      %p142 = scmp.ne.s32.totalorder %s131, %s132
      %p143 = scmp.eq.s32.totalorder %s19, 0
      %p144 = por %p142, %p143
      %p145 = scmp.ne.s32.totalorder %s131, %s132
      %p146 = scmp.eq.s32.totalorder %s20, 1
      %p147 = por %p145, %p146
      %p149 = scmp.ne.s32.totalorder %s132, %s148
      %p150 = scmp.eq.s32.totalorder %s20, 0
      %p151 = por %p149, %p150
      %s152 = ssub.s32 %s14, %s21
      %p153 = scmp.eq.s32.totalorder %s152, 0
      %s155 = sadd.s32 %s154, 1
      %s156 = scalar_select %p153, %s154, %s155
      %p159 = pneg %p153
      %p160 = scmp.eq.s32.totalorder %s14, 1
      %p161 = por %p159, %p160
      %p162 = scmp.ne.s32.totalorder %s154, %s157
      %p163 = scmp.eq.s32.totalorder %s14, 0
      %p164 = por %p162, %p163
      %p165 = scmp.ne.s32.totalorder %s154, %s157
      %p166 = scmp.eq.s32.totalorder %s19, 1
      %p167 = por %p165, %p166
      %p168 = scmp.ne.s32.totalorder %s157, %s158
      %p169 = scmp.eq.s32.totalorder %s19, 0
      %p170 = por %p168, %p169
      %p171 = scmp.ne.s32.totalorder %s157, %s158
      %p172 = scmp.eq.s32.totalorder %s20, 1
      %p173 = por %p171, %p172
      %p175 = scmp.ne.s32.totalorder %s158, %s174
      %p176 = scmp.eq.s32.totalorder %s20, 0
      %p177 = por %p175, %p176
      %s179 = sadd.s32 %s178, 1
      %p182 = scmp.eq.s32.totalorder %s14, 1
      %p183 = scmp.ne.s32.totalorder %s178, %s180
      %p184 = scmp.eq.s32.totalorder %s14, 0
      %p185 = por %p183, %p184
      %p186 = scmp.ne.s32.totalorder %s178, %s180
      %p187 = scmp.eq.s32.totalorder %s19, 1
      %p188 = por %p186, %p187
      %p189 = scmp.ne.s32.totalorder %s180, %s181
      %p190 = scmp.eq.s32.totalorder %s19, 0
      %p191 = por %p189, %p190
      %p192 = scmp.ne.s32.totalorder %s180, %s181
      %p193 = scmp.eq.s32.totalorder %s20, 1
      %p194 = por %p192, %p193
      %p196 = scmp.ne.s32.totalorder %s181, %s195
      %p197 = scmp.eq.s32.totalorder %s20, 0
      %p198 = por %p196, %p197
      %s200 = sadd.s32 %s199, 1
      %p203 = scmp.eq.s32.totalorder %s14, 1
      %p204 = scmp.ne.s32.totalorder %s199, %s201
      %p205 = scmp.eq.s32.totalorder %s14, 0
      %p206 = por %p204, %p205
      %p207 = scmp.ne.s32.totalorder %s199, %s201
      %p208 = scmp.eq.s32.totalorder %s19, 1
      %p209 = por %p207, %p208
      %p210 = scmp.ne.s32.totalorder %s201, %s202
      %p211 = scmp.eq.s32.totalorder %s19, 0
      %p212 = por %p210, %p211
      %p213 = scmp.ne.s32.totalorder %s201, %s202
      %p214 = scmp.eq.s32.totalorder %s20, 1
      %p215 = por %p213, %p214
      %p217 = scmp.ne.s32.totalorder %s202, %s216
      %p218 = scmp.eq.s32.totalorder %s20, 0
      %p219 = por %p217, %p218
      %p220 = scmp.le.s32.totalorder 1, %s14
      %p221 = scmp.lt.s32.totalorder %s14, 3
      %p222 = pnand %p220, %p221
      %p223 = pneg %p222
      // Predicated region
      $region9: #{tpu_custom_call.1} parent=5 // pred_check
        _
      $region10: #{tpu_custom_call.1} parent=5 // pred_check_branch
        %225 = sbr.rel (%p222) target = $region12
      $region11: #{tpu_custom_call.1} parent=5 // pred_region
        %s226 = ssub.s32 %s14, 1
        // Predicated region
        $region13: #{tpu_custom_call.1} parent=11 // pred_check
          %p227 = pneg %p191
        $region14: #{tpu_custom_call.1} parent=11 // pred_check_branch
          %229 = sbr.rel (%p227) target = $region16
        $region15: #{tpu_custom_call.1} parent=11 // pred_region
          _
        $region16: #{tpu_custom_call.1} parent=11 // pred_fallthru
          _
      $region12: #{tpu_custom_call.1} parent=5 // pred_fallthru
        _
      %p230 = scmp.lt.s32.totalorder %s14, 2
      // Predicated region
      $region17: #{tpu_custom_call.1} parent=5 // pred_check
        %p231 = pneg %p230
      $region18: #{tpu_custom_call.1} parent=5 // pred_check_branch
        %233 = sbr.rel (%p231) target = $region20
      $region19: #{tpu_custom_call.1} parent=5 // pred_region
        // Predicated region
        $region21: #{tpu_custom_call.1} parent=19 // pred_check
          %p234 = pneg %p34
        $region22: #{tpu_custom_call.1} parent=19 // pred_check_branch
          %236 = sbr.rel (%p234) target = $region24
        $region23: #{tpu_custom_call.1} parent=19 // pred_region
          %s237 = smul.u32 8, %s14
          %p238 = scmp.lt.s32.totalorder %s237, 15
          %s239 = scalar_select %p238, %s237, 15
          %s240 = smul.addr %s239, 4
          %s241 = scalar_lea.vmem %s0, %s240
          %s242 = smul.u32 8, %s14
        $region24: #{tpu_custom_call.1} parent=19 // pred_fallthru
          _
        // Predicated region
        $region25: #{tpu_custom_call.1} parent=19 // pred_check
          %p243 = pneg %p60
        $region26: #{tpu_custom_call.1} parent=19 // pred_check_branch
          %245 = sbr.rel (%p243) target = $region28
        $region27: #{tpu_custom_call.1} parent=19 // pred_region
          %s246 = smul.u32 8, %s14
          %p247 = scmp.lt.s32.totalorder %s246, 15
          %s248 = scalar_select %p247, %s246, 15
          %s249 = smul.addr %s248, 4
          %s250 = scalar_lea.vmem %s1, %s249
          %s251 = smul.u32 8, %s14
        $region28: #{tpu_custom_call.1} parent=19 // pred_fallthru
          _
        // Predicated region
        $region29: #{tpu_custom_call.1} parent=19 // pred_check
          %p252 = pneg %p86
        $region30: #{tpu_custom_call.1} parent=19 // pred_check_branch
          %254 = sbr.rel (%p252) target = $region32
        $region31: #{tpu_custom_call.1} parent=19 // pred_region
          %s255 = sand.u32 %s76, 1
          %s256 = sand.u32 %s76, 1
          %s257 = smul.addr %s256, 32
          %s258 = scalar_lea.vmem [#allocation2], %s257
          %s259 = smul.addr %s14, 8
          %s260 = scalar_lea.vmem %s2, %s259
          // Predicated region
          $region33: #{tpu_custom_call.1} parent=31 // pred_check
            _
          $region34: #{tpu_custom_call.1} parent=31 // pred_check_branch
            %262 = sbr.rel (0) target = $region36
          $region35: #{tpu_custom_call.1} parent=31 // pred_region
            // Predicated region
            $region37: #{tpu_custom_call.1} parent=35 // pred_check
              _
            $region38: #{tpu_custom_call.1} parent=35 // pred_check_branch
              %264 = sbr.rel (0) target = $region40
            $region39: #{tpu_custom_call.1} parent=35 // pred_region
              // Predicated region
              $region52: #{tpu_custom_call.1} parent=39 // pred_check
                _
              $region53: #{tpu_custom_call.1} parent=39 // pred_check_branch
                %285 = sbr.rel (0) target = $region55
              $region54: #{tpu_custom_call.1} parent=39 // pred_region
                loop: start=0, step=1, limit=1
                $region56: #{tpu_custom_call.1} parent=54 // loop_pre_header
                  _
                $region57: #{tpu_custom_call.1} parent=54 // loop_header
                  %s287 = sphi 0, %s291
                  %p288 = scmp.ge.s32.totalorder %s287, 1
                  %s292 = sphi %s260, %s260
                  %s293 = sphi %s258, %s258
                $region58: #{tpu_custom_call.1} parent=54 // loop_header_branch
                  %290 = sbr.rel (%p288) target = $region62
                $region59: #{tpu_custom_call.1} parent=54 // loop_body
                  %v294 = vld [vmem:[%s292] sm:$0xff]
                  %295 = vst [vmem:[%s293] sm:$0xff] %v294
                  %v296 = vld [vmem:[%s292 + $0x10] sm:$0xff]
                  %297 = vst [vmem:[%s293 + $0x8] sm:$0xff] %v296
                  %v298 = vld [vmem:[%s292 + $0x20] sm:$0xff]
                  %299 = vst [vmem:[%s293 + $0x10] sm:$0xff] %v298
                  %v300 = vld [vmem:[%s292 + $0x30] sm:$0xff]
                  %301 = vst [vmem:[%s293 + $0x18] sm:$0xff] %v300
                $region60: #{tpu_custom_call.1} parent=54 // loop_footer
                  %s291 = sadd.s32 1, %s287
                $region61: #{tpu_custom_call.1} parent=54 // loop_footer_branch
                  %286 = sbr.rel target = $region57
                $region62: #{tpu_custom_call.1} parent=54 // loop_exit
                  _
              $region55: #{tpu_custom_call.1} parent=39 // pred_fallthru
                _
              // Predicated region
              $region63: #{tpu_custom_call.1} parent=39 // pred_check
                _
              $region64: #{tpu_custom_call.1} parent=39 // pred_check_branch
                %303 = sbr.rel target = $region66
              $region65: #{tpu_custom_call.1} parent=39 // pred_region
                _
              $region66: #{tpu_custom_call.1} parent=39 // pred_fallthru
                _
            $region40: #{tpu_custom_call.1} parent=35 // pred_fallthru
              _
            // Predicated region
            $region41: #{tpu_custom_call.1} parent=35 // pred_check
              _
            $region42: #{tpu_custom_call.1} parent=35 // pred_check_branch
              %266 = sbr.rel target = $region44
            $region43: #{tpu_custom_call.1} parent=35 // pred_region
              loop: start=0, step=1, limit=1
              $region45: #{tpu_custom_call.1} parent=43 // loop_pre_header
                _
              $region46: #{tpu_custom_call.1} parent=43 // loop_header
                %s269 = sphi 0, %s273
                %p270 = scmp.ge.s32.totalorder %s269, 1
                %s274 = sphi %s260, %s260
                %s275 = sphi %s258, %s258
              $region47: #{tpu_custom_call.1} parent=43 // loop_header_branch
                %272 = sbr.rel (%p270) target = $region51
              $region48: #{tpu_custom_call.1} parent=43 // loop_body
                %v276 = vld [vmem:[%s274] sm:$0xff]
                %277 = vst [vmem:[%s275] sm:$0xff] %v276
                %v278 = vld [vmem:[%s274 + $0x10] sm:$0xff]
                %279 = vst [vmem:[%s275 + $0x8] sm:$0xff] %v278
                %v280 = vld [vmem:[%s274 + $0x20] sm:$0xff]
                %281 = vst [vmem:[%s275 + $0x10] sm:$0xff] %v280
                %v282 = vld [vmem:[%s274 + $0x30] sm:$0xff]
                %283 = vst [vmem:[%s275 + $0x18] sm:$0xff] %v282
              $region49: #{tpu_custom_call.1} parent=43 // loop_footer
                %s273 = sadd.s32 1, %s269
              $region50: #{tpu_custom_call.1} parent=43 // loop_footer_branch
                %268 = sbr.rel target = $region46
              $region51: #{tpu_custom_call.1} parent=43 // loop_exit
                _
            $region44: #{tpu_custom_call.1} parent=35 // pred_fallthru
              _
          $region36: #{tpu_custom_call.1} parent=31 // pred_fallthru
            _
          %304 = vnop
        $region32: #{tpu_custom_call.1} parent=19 // pred_fallthru
          _
        // Predicated region
        $region67: #{tpu_custom_call.1} parent=19 // pred_check
          %p305 = pneg %p112
        $region68: #{tpu_custom_call.1} parent=19 // pred_check_branch
          %307 = sbr.rel (%p305) target = $region70
        $region69: #{tpu_custom_call.1} parent=19 // pred_region
          %s308 = sand.u32 %s102, 1
          %s309 = sand.u32 %s102, 1
          %s310 = smul.addr %s309, 128
          %s311 = scalar_lea.vmem [#allocation3], %s310
          %s312 = smul.u32 8, %s14
          %s313 = smul.addr %s312, 4
          %s314 = scalar_lea.vmem %s3, %s313
          // Predicated region
          $region71: #{tpu_custom_call.1} parent=69 // pred_check
            _
          $region72: #{tpu_custom_call.1} parent=69 // pred_check_branch
            %316 = sbr.rel (0) target = $region74
          $region73: #{tpu_custom_call.1} parent=69 // pred_region
            // Predicated region
            $region75: #{tpu_custom_call.1} parent=73 // pred_check
              _
            $region76: #{tpu_custom_call.1} parent=73 // pred_check_branch
              %318 = sbr.rel target = $region78
            $region77: #{tpu_custom_call.1} parent=73 // pred_region
              // Predicated region
              $region90: #{tpu_custom_call.1} parent=77 // pred_check
                _
              $region91: #{tpu_custom_call.1} parent=77 // pred_check_branch
                %395 = sbr.rel (0) target = $region93
              $region92: #{tpu_custom_call.1} parent=77 // pred_region
                loop: start=0, step=1, limit=1
                $region94: #{tpu_custom_call.1} parent=92 // loop_pre_header
                  _
                $region95: #{tpu_custom_call.1} parent=92 // loop_header
                  %s397 = sphi 0, %s401
                  %p398 = scmp.ge.s32.totalorder %s397, 1
                  %s402 = sphi %s314, %s314
                  %s403 = sphi %s311, %s311
                $region96: #{tpu_custom_call.1} parent=92 // loop_header_branch
                  %400 = sbr.rel (%p398) target = $region100
                $region97: #{tpu_custom_call.1} parent=92 // loop_body
                  _
                $region98: #{tpu_custom_call.1} parent=92 // loop_footer
                  %s401 = sadd.s32 1, %s397
                $region99: #{tpu_custom_call.1} parent=92 // loop_footer_branch
                  %396 = sbr.rel target = $region95
                $region100: #{tpu_custom_call.1} parent=92 // loop_exit
                  _
                loop: start=0, step=1, limit=1
                $region101: #{tpu_custom_call.1} parent=92 // loop_pre_header
                  _
                $region102: #{tpu_custom_call.1} parent=92 // loop_header
                  %s406 = sphi 0, %s410
                  %p407 = scmp.ge.s32.totalorder %s406, 1
                  %s411 = sphi %s314, %s314
                  %s412 = sphi %s311, %s311
                $region103: #{tpu_custom_call.1} parent=92 // loop_header_branch
                  %409 = sbr.rel (%p407) target = $region107
                $region104: #{tpu_custom_call.1} parent=92 // loop_body
                  %v413 = vld [vmem:[%s411] sm:$0xf]
                  %414 = vst [vmem:[%s412] sm:$0xf] %v413
                  %v415 = vld [vmem:[%s411 + $0x4] sm:$0xf]
                  %416 = vst [vmem:[%s412 + $0x4] sm:$0xf] %v415
                  %v417 = vld [vmem:[%s411 + $0x8] sm:$0xf]
                  %418 = vst [vmem:[%s412 + $0x8] sm:$0xf] %v417
                  %v419 = vld [vmem:[%s411 + $0xc] sm:$0xf]
                  %420 = vst [vmem:[%s412 + $0xc] sm:$0xf] %v419
                  %v421 = vld [vmem:[%s411 + $0x10] sm:$0xf]
                  %422 = vst [vmem:[%s412 + $0x10] sm:$0xf] %v421
                  %v423 = vld [vmem:[%s411 + $0x14] sm:$0xf]
                  %424 = vst [vmem:[%s412 + $0x14] sm:$0xf] %v423
                  %v425 = vld [vmem:[%s411 + $0x18] sm:$0xf]
                  %426 = vst [vmem:[%s412 + $0x18] sm:$0xf] %v425
                  %v427 = vld [vmem:[%s411 + $0x1c] sm:$0xf]
                  %428 = vst [vmem:[%s412 + $0x1c] sm:$0xf] %v427
                  %v429 = vld [vmem:[%s411 + $0x40] sm:$0xf]
                  %430 = vst [vmem:[%s412 + $0x20] sm:$0xf] %v429
                  %v431 = vld [vmem:[%s411 + $0x44] sm:$0xf]
                  %432 = vst [vmem:[%s412 + $0x24] sm:$0xf] %v431
                  %v433 = vld [vmem:[%s411 + $0x48] sm:$0xf]
                  %434 = vst [vmem:[%s412 + $0x28] sm:$0xf] %v433
                  %v435 = vld [vmem:[%s411 + $0x4c] sm:$0xf]
                  %436 = vst [vmem:[%s412 + $0x2c] sm:$0xf] %v435
                  %v437 = vld [vmem:[%s411 + $0x50] sm:$0xf]
                  %438 = vst [vmem:[%s412 + $0x30] sm:$0xf] %v437
                  %v439 = vld [vmem:[%s411 + $0x54] sm:$0xf]
                  %440 = vst [vmem:[%s412 + $0x34] sm:$0xf] %v439
                  %v441 = vld [vmem:[%s411 + $0x58] sm:$0xf]
                  %442 = vst [vmem:[%s412 + $0x38] sm:$0xf] %v441
                  %v443 = vld [vmem:[%s411 + $0x5c] sm:$0xf]
                  %444 = vst [vmem:[%s412 + $0x3c] sm:$0xf] %v443
                  %v445 = vld [vmem:[%s411 + $0x80] sm:$0xf]
                  %446 = vst [vmem:[%s412 + $0x40] sm:$0xf] %v445
                  %v447 = vld [vmem:[%s411 + $0x84] sm:$0xf]
                  %448 = vst [vmem:[%s412 + $0x44] sm:$0xf] %v447
                  %v449 = vld [vmem:[%s411 + $0x88] sm:$0xf]
                  %450 = vst [vmem:[%s412 + $0x48] sm:$0xf] %v449
                  %v451 = vld [vmem:[%s411 + $0x8c] sm:$0xf]
                  %452 = vst [vmem:[%s412 + $0x4c] sm:$0xf] %v451
                  %v453 = vld [vmem:[%s411 + $0x90] sm:$0xf]
                  %454 = vst [vmem:[%s412 + $0x50] sm:$0xf] %v453
                  %v455 = vld [vmem:[%s411 + $0x94] sm:$0xf]
                  %456 = vst [vmem:[%s412 + $0x54] sm:$0xf] %v455
                  %v457 = vld [vmem:[%s411 + $0x98] sm:$0xf]
                  %458 = vst [vmem:[%s412 + $0x58] sm:$0xf] %v457
                  %v459 = vld [vmem:[%s411 + $0x9c] sm:$0xf]
                  %460 = vst [vmem:[%s412 + $0x5c] sm:$0xf] %v459
                  %v461 = vld [vmem:[%s411 + $0xc0] sm:$0xf]
                  %462 = vst [vmem:[%s412 + $0x60] sm:$0xf] %v461
                  %v463 = vld [vmem:[%s411 + $0xc4] sm:$0xf]
                  %464 = vst [vmem:[%s412 + $0x64] sm:$0xf] %v463
                  %v465 = vld [vmem:[%s411 + $0xc8] sm:$0xf]
                  %466 = vst [vmem:[%s412 + $0x68] sm:$0xf] %v465
                  %v467 = vld [vmem:[%s411 + $0xcc] sm:$0xf]
                  %468 = vst [vmem:[%s412 + $0x6c] sm:$0xf] %v467
                  %v469 = vld [vmem:[%s411 + $0xd0] sm:$0xf]
                  %470 = vst [vmem:[%s412 + $0x70] sm:$0xf] %v469
                  %v471 = vld [vmem:[%s411 + $0xd4] sm:$0xf]
                  %472 = vst [vmem:[%s412 + $0x74] sm:$0xf] %v471
                  %v473 = vld [vmem:[%s411 + $0xd8] sm:$0xf]
                  %474 = vst [vmem:[%s412 + $0x78] sm:$0xf] %v473
                  %v475 = vld [vmem:[%s411 + $0xdc] sm:$0xf]
                  %476 = vst [vmem:[%s412 + $0x7c] sm:$0xf] %v475
                $region105: #{tpu_custom_call.1} parent=92 // loop_footer
                  %s410 = sadd.s32 1, %s406
                $region106: #{tpu_custom_call.1} parent=92 // loop_footer_branch
                  %405 = sbr.rel target = $region102
                $region107: #{tpu_custom_call.1} parent=92 // loop_exit
                  _
              $region93: #{tpu_custom_call.1} parent=77 // pred_fallthru
                _
            $region78: #{tpu_custom_call.1} parent=73 // pred_fallthru
              _
            // Predicated region
            $region79: #{tpu_custom_call.1} parent=73 // pred_check
              _
            $region80: #{tpu_custom_call.1} parent=73 // pred_check_branch
              %320 = sbr.rel (0) target = $region82
            $region81: #{tpu_custom_call.1} parent=73 // pred_region
              loop: start=0, step=1, limit=1
              $region83: #{tpu_custom_call.1} parent=81 // loop_pre_header
                _
              $region84: #{tpu_custom_call.1} parent=81 // loop_header
                %s323 = sphi 0, %s327
                %p324 = scmp.ge.s32.totalorder %s323, 1
                %s328 = sphi %s314, %s314
                %s329 = sphi %s311, %s311
              $region85: #{tpu_custom_call.1} parent=81 // loop_header_branch
                %326 = sbr.rel (%p324) target = $region89
              $region86: #{tpu_custom_call.1} parent=81 // loop_body
                %v330 = vld [vmem:[%s328] sm:$0xf]
                %331 = vst [vmem:[%s329] sm:$0xf] %v330
                %v332 = vld [vmem:[%s328 + $0x4] sm:$0xf]
                %333 = vst [vmem:[%s329 + $0x4] sm:$0xf] %v332
                %v334 = vld [vmem:[%s328 + $0x8] sm:$0xf]
                %335 = vst [vmem:[%s329 + $0x8] sm:$0xf] %v334
                %v336 = vld [vmem:[%s328 + $0xc] sm:$0xf]
                %337 = vst [vmem:[%s329 + $0xc] sm:$0xf] %v336
                %v338 = vld [vmem:[%s328 + $0x10] sm:$0xf]
                %339 = vst [vmem:[%s329 + $0x10] sm:$0xf] %v338
                %v340 = vld [vmem:[%s328 + $0x14] sm:$0xf]
                %341 = vst [vmem:[%s329 + $0x14] sm:$0xf] %v340
                %v342 = vld [vmem:[%s328 + $0x18] sm:$0xf]
                %343 = vst [vmem:[%s329 + $0x18] sm:$0xf] %v342
                %v344 = vld [vmem:[%s328 + $0x1c] sm:$0xf]
                %345 = vst [vmem:[%s329 + $0x1c] sm:$0xf] %v344
                %v346 = vld [vmem:[%s328 + $0x40] sm:$0xf]
                %347 = vst [vmem:[%s329 + $0x20] sm:$0xf] %v346
                %v348 = vld [vmem:[%s328 + $0x44] sm:$0xf]
                %349 = vst [vmem:[%s329 + $0x24] sm:$0xf] %v348
                %v350 = vld [vmem:[%s328 + $0x48] sm:$0xf]
                %351 = vst [vmem:[%s329 + $0x28] sm:$0xf] %v350
                %v352 = vld [vmem:[%s328 + $0x4c] sm:$0xf]
                %353 = vst [vmem:[%s329 + $0x2c] sm:$0xf] %v352
                %v354 = vld [vmem:[%s328 + $0x50] sm:$0xf]
                %355 = vst [vmem:[%s329 + $0x30] sm:$0xf] %v354
                %v356 = vld [vmem:[%s328 + $0x54] sm:$0xf]
                %357 = vst [vmem:[%s329 + $0x34] sm:$0xf] %v356
                %v358 = vld [vmem:[%s328 + $0x58] sm:$0xf]
                %359 = vst [vmem:[%s329 + $0x38] sm:$0xf] %v358
                %v360 = vld [vmem:[%s328 + $0x5c] sm:$0xf]
                %361 = vst [vmem:[%s329 + $0x3c] sm:$0xf] %v360
                %v362 = vld [vmem:[%s328 + $0x80] sm:$0xf]
                %363 = vst [vmem:[%s329 + $0x40] sm:$0xf] %v362
                %v364 = vld [vmem:[%s328 + $0x84] sm:$0xf]
                %365 = vst [vmem:[%s329 + $0x44] sm:$0xf] %v364
                %v366 = vld [vmem:[%s328 + $0x88] sm:$0xf]
                %367 = vst [vmem:[%s329 + $0x48] sm:$0xf] %v366
                %v368 = vld [vmem:[%s328 + $0x8c] sm:$0xf]
                %369 = vst [vmem:[%s329 + $0x4c] sm:$0xf] %v368
                %v370 = vld [vmem:[%s328 + $0x90] sm:$0xf]
                %371 = vst [vmem:[%s329 + $0x50] sm:$0xf] %v370
                %v372 = vld [vmem:[%s328 + $0x94] sm:$0xf]
                %373 = vst [vmem:[%s329 + $0x54] sm:$0xf] %v372
                %v374 = vld [vmem:[%s328 + $0x98] sm:$0xf]
                %375 = vst [vmem:[%s329 + $0x58] sm:$0xf] %v374
                %v376 = vld [vmem:[%s328 + $0x9c] sm:$0xf]
                %377 = vst [vmem:[%s329 + $0x5c] sm:$0xf] %v376
                %v378 = vld [vmem:[%s328 + $0xc0] sm:$0xf]
                %379 = vst [vmem:[%s329 + $0x60] sm:$0xf] %v378
                %v380 = vld [vmem:[%s328 + $0xc4] sm:$0xf]
                %381 = vst [vmem:[%s329 + $0x64] sm:$0xf] %v380
                %v382 = vld [vmem:[%s328 + $0xc8] sm:$0xf]
                %383 = vst [vmem:[%s329 + $0x68] sm:$0xf] %v382
                %v384 = vld [vmem:[%s328 + $0xcc] sm:$0xf]
                %385 = vst [vmem:[%s329 + $0x6c] sm:$0xf] %v384
                %v386 = vld [vmem:[%s328 + $0xd0] sm:$0xf]
                %387 = vst [vmem:[%s329 + $0x70] sm:$0xf] %v386
                %v388 = vld [vmem:[%s328 + $0xd4] sm:$0xf]
                %389 = vst [vmem:[%s329 + $0x74] sm:$0xf] %v388
                %v390 = vld [vmem:[%s328 + $0xd8] sm:$0xf]
                %391 = vst [vmem:[%s329 + $0x78] sm:$0xf] %v390
                %v392 = vld [vmem:[%s328 + $0xdc] sm:$0xf]
                %393 = vst [vmem:[%s329 + $0x7c] sm:$0xf] %v392
              $region87: #{tpu_custom_call.1} parent=81 // loop_footer
                %s327 = sadd.s32 1, %s323
              $region88: #{tpu_custom_call.1} parent=81 // loop_footer_branch
                %322 = sbr.rel target = $region84
              $region89: #{tpu_custom_call.1} parent=81 // loop_exit
                _
            $region82: #{tpu_custom_call.1} parent=73 // pred_fallthru
              _
          $region74: #{tpu_custom_call.1} parent=69 // pred_fallthru
            _
          %477 = vnop
        $region70: #{tpu_custom_call.1} parent=19 // pred_fallthru
          _
        // Predicated region
        $region108: #{tpu_custom_call.1} parent=19 // pred_check
          %p478 = pneg %p138
        $region109: #{tpu_custom_call.1} parent=19 // pred_check_branch
          %480 = sbr.rel (%p478) target = $region111
        $region110: #{tpu_custom_call.1} parent=19 // pred_region
          %s481 = smul.u32 8, %s14
          %p482 = scmp.lt.s32.totalorder %s481, 15
          %s483 = scalar_select %p482, %s481, 15
          %s484 = smul.addr %s483, 4
          %s485 = scalar_lea.vmem %s4, %s484
          %s486 = smul.u32 8, %s14
        $region111: #{tpu_custom_call.1} parent=19 // pred_fallthru
          _
        // Predicated region
        $region112: #{tpu_custom_call.1} parent=19 // pred_check
          %p487 = pneg %p164
        $region113: #{tpu_custom_call.1} parent=19 // pred_check_branch
          %489 = sbr.rel (%p487) target = $region115
        $region114: #{tpu_custom_call.1} parent=19 // pred_region
          %p490 = scmp.lt.s32.totalorder %s14, 1
          %s491 = scalar_select %p490, %s14, 1
          %s492 = smul.addr %s491, 8
          %s493 = scalar_lea.vmem %s5, %s492
        $region115: #{tpu_custom_call.1} parent=19 // pred_fallthru
          _
      $region20: #{tpu_custom_call.1} parent=5 // pred_fallthru
        _
      %p494 = scmp.le.s32.totalorder 1, %s14
      %p495 = scmp.lt.s32.totalorder %s14, 3
      %p496 = pnand %p494, %p495
      %p497 = pneg %p496
      // Predicated region
      $region116: #{tpu_custom_call.1} parent=5 // pred_check
        _
      $region117: #{tpu_custom_call.1} parent=5 // pred_check_branch
        %499 = sbr.rel (%p496) target = $region119
      $region118: #{tpu_custom_call.1} parent=5 // pred_region
        %s500 = ssub.s32 %s14, 1
        %s501 = sand.u32 %s79, 1
        %s502 = sand.u32 %s79, 1
        %s503 = smul.addr %s502, 32
        %s504 = scalar_lea.vmem [#allocation2], %s503
        // Predicated region
        $region120: #{tpu_custom_call.1} parent=118 // pred_check
          %p505 = pneg %p92
        $region121: #{tpu_custom_call.1} parent=118 // pred_check_branch
          %507 = sbr.rel (%p505) target = $region123
        $region122: #{tpu_custom_call.1} parent=118 // pred_region
          _
        $region123: #{tpu_custom_call.1} parent=118 // pred_fallthru
          _
        %s508 = sand.u32 %s105, 1
        %s509 = sand.u32 %s105, 1
        %s510 = smul.addr %s509, 128
        %s511 = scalar_lea.vmem [#allocation3], %s510
        // Predicated region
        $region124: #{tpu_custom_call.1} parent=118 // pred_check
          %p512 = pneg %p118
        $region125: #{tpu_custom_call.1} parent=118 // pred_check_branch
          %514 = sbr.rel (%p512) target = $region127
        $region126: #{tpu_custom_call.1} parent=118 // pred_region
          _
        $region127: #{tpu_custom_call.1} parent=118 // pred_fallthru
          _
        %s515 = smul.u32 8, %s19
        %p516 = scmp.lt.s32.totalorder %s515, 15
        %s517 = scalar_select %p516, %s515, 15
        %s518 = smul.addr %s517, 4
        %s519 = scalar_lea.vmem %s0, %s518
        %p520 = pneg %p40
        %p521 = pneg %p37
        %s522 = smul.u32 8, %s19
        %p523 = scmp.lt.s32.totalorder %s522, 15
        %s524 = scalar_select %p523, %s522, 15
        %s525 = smul.addr %s524, 4
        %s526 = scalar_lea.vmem %s1, %s525
        %p527 = pneg %p66
        %p528 = pneg %p63
        %s529 = sand.u32 %s79, 1
        %s530 = sand.u32 %s79, 1
        %s531 = smul.addr %s530, 32
        %s532 = scalar_lea.vmem [#allocation2], %s531
        %p533 = pneg %p92
        %p534 = pneg %p89
        %s535 = sand.u32 %s105, 1
        %s536 = sand.u32 %s105, 1
        %s537 = smul.addr %s536, 128
        %s538 = scalar_lea.vmem [#allocation3], %s537
        %p539 = pneg %p118
        %p540 = pneg %p115
        %s541 = smul.u32 8, %s19
        %p542 = scmp.lt.s32.totalorder %s541, 15
        %s543 = scalar_select %p542, %s541, 15
        %s544 = smul.addr %s543, 4
        %s545 = scalar_lea.vmem %s4, %s544
        %p546 = pneg %p144
        %p547 = pneg %p141
        %p548 = scmp.lt.s32.totalorder %s19, 1
        %s549 = scalar_select %p548, %s19, 1
        %s550 = smul.addr %s549, 8
        %s551 = scalar_lea.vmem %s5, %s550
        %p552 = pneg %p170
        %p553 = pneg %p167
        %p554 = pneg %p191
        %p555 = pneg %p188
        %p556 = pneg %p212
        %p557 = pneg %p209
        %s558 = smul.u32 8, %s19
        %p559 = scmp.lt.s32.totalorder %s558, 15
        %s560 = scalar_select %p559, %s558, 15
        %s561 = smul.addr %s560, 4
        %s562 = scalar_lea.vmem %s0, %s561
        %s563 = smul.u32 8, %s19
        %s564 = smul.u32 8, %s19
        %p565 = scmp.lt.s32.totalorder %s564, 15
        %s566 = scalar_select %p565, %s564, 15
        %s567 = smul.addr %s566, 4
        %s568 = scalar_lea.vmem %s1, %s567
        %s569 = smul.u32 8, %s19
        %s570 = smul.u32 8, %s19
        %s571 = smul.u32 8, %s19
        %p572 = scmp.lt.s32.totalorder %s571, 15
        %s573 = scalar_select %p572, %s571, 15
        %s574 = smul.addr %s573, 4
        %s575 = scalar_lea.vmem %s4, %s574
        %s576 = smul.u32 8, %s19
        %p577 = scmp.lt.s32.totalorder %s19, 1
        %s578 = scalar_select %p577, %s19, 1
        %s579 = smul.addr %s578, 8
        %s580 = scalar_lea.vmem %s5, %s579
        %v581 = vld [vmem:[%s562] sm:$0x7]
        %v582 = vld [vmem:[%s562 + $0x4] sm:$0x7]
        %v583 = vld [vmem:[%s562 + $0x8] sm:$0x7]
        %v584 = vld [vmem:[%s562 + $0xc] sm:$0x7]
        %v585 = vld [vmem:[%s562 + $0x10] sm:$0x7]
        %v586 = vld [vmem:[%s562 + $0x14] sm:$0x7]
        %v587 = vld [vmem:[%s562 + $0x18] sm:$0x7]
        %v588 = vld [vmem:[%s562 + $0x1c] sm:$0x7]
        %v589 = vld [vmem:[%s568] sm:$0x7]
        %v590 = vld [vmem:[%s568 + $0x4] sm:$0x7]
        %v591 = vld [vmem:[%s568 + $0x8] sm:$0x7]
        %v592 = vld [vmem:[%s568 + $0xc] sm:$0x7]
        %v593 = vld [vmem:[%s568 + $0x10] sm:$0x7]
        %v594 = vld [vmem:[%s568 + $0x14] sm:$0x7]
        %v595 = vld [vmem:[%s568 + $0x18] sm:$0x7]
        %v596 = vld [vmem:[%s568 + $0x1c] sm:$0x7]
        %598 = vset.pattern.permute.xlu0 0
        %599 = vperm.xlu0 %598, %v581
        %v600 = vpop.permute.xlu0 %599
        %603 = vset.pattern.permute.xlu0 0
        %604 = vperm.xlu0 %603, %v582
        %v605 = vpop.permute.xlu0 %604
        %608 = vset.pattern.permute.xlu0 0
        %609 = vperm.xlu0 %608, %v583
        %v610 = vpop.permute.xlu0 %609
        %613 = vset.pattern.permute.xlu0 0
        %614 = vperm.xlu0 %613, %v584
        %v615 = vpop.permute.xlu0 %614
        %618 = vset.pattern.permute.xlu0 0
        %619 = vperm.xlu0 %618, %v585
        %v620 = vpop.permute.xlu0 %619
        %623 = vset.pattern.permute.xlu0 0
        %624 = vperm.xlu0 %623, %v586
        %v625 = vpop.permute.xlu0 %624
        %628 = vset.pattern.permute.xlu0 0
        %629 = vperm.xlu0 %628, %v587
        %v630 = vpop.permute.xlu0 %629
        %633 = vset.pattern.permute.xlu0 0
        %634 = vperm.xlu0 %633, %v588
        %v635 = vpop.permute.xlu0 %634
        %s637 = scalar_lea.vmem %s511, 32 [#allocation3]
        %v638 = vld [vmem:[%s637] sm:$0xf]
        %v639 = vld [vmem:[%s637 + $0x4] sm:$0xf]
        %v640 = vld [vmem:[%s637 + $0x8] sm:$0xf]
        %v641 = vld [vmem:[%s637 + $0xc] sm:$0xf]
        %v642 = vld [vmem:[%s637 + $0x10] sm:$0xf]
        %v643 = vld [vmem:[%s637 + $0x14] sm:$0xf]
        %v644 = vld [vmem:[%s637 + $0x18] sm:$0xf]
        %v645 = vld [vmem:[%s637 + $0x1c] sm:$0xf]
        %v646 = vunpack.c.l.bf16 %v638
        %v647 = vunpack.c.l.bf16 %v639
        %v648 = vunpack.c.l.bf16 %v640
        %v649 = vunpack.c.l.bf16 %v641
        %v650 = vunpack.c.l.bf16 %v642
        %v651 = vunpack.c.l.bf16 %v643
        %v652 = vunpack.c.l.bf16 %v644
        %v653 = vunpack.c.l.bf16 %v645
        %s654 = scalar_lea.vmem %s504, 8 [#allocation2]
        %v655 = vld [vmem:[%s654] sm:$0xff]
        %v657 = vcombine.high %v655, %v655
        %v659 = vunpack.c.l.s4 1966171168
        %v660 = vunpack.c.0.s8 %v659
        %v661 = vlaneseq
        %v662 = vshrl.u32 %v661, 7
        %v663 = vsub.s32 %v660, %v662
        %v664 = vrot.slane %v655, %v663
        %v666 = vunpack.c.l.s4 1966171168
        %v667 = vunpack.c.0.s8 %v666
        %v668 = vlaneseq
        %v669 = vshrl.u32 %v668, 7
        %v670 = vsub.s32 %v667, %v669
        %v671 = vrot.slane %v657, %v670
        %v672 = vcombine.high %v664, %v664
        %v673 = vcombine.high %v671, %v671
        %v675 = vunpack.c.l.s4 1966171168
        %v676 = vunpack.c.0.s8 %v675
        %v677 = vlaneseq
        %v678 = vshrl.u32 %v677, 7
        %v679 = vsub.s32 %v676, %v678
        %v680 = vrot.slane %v664, %v679
        %v682 = vunpack.c.l.s4 1966171168
        %v683 = vunpack.c.0.s8 %v682
        %v684 = vlaneseq
        %v685 = vshrl.u32 %v684, 7
        %v686 = vsub.s32 %v683, %v685
        %v687 = vrot.slane %v671, %v686
        %v689 = vunpack.c.l.s4 1966171168
        %v690 = vunpack.c.0.s8 %v689
        %v691 = vlaneseq
        %v692 = vshrl.u32 %v691, 7
        %v693 = vsub.s32 %v690, %v692
        %v694 = vrot.slane %v672, %v693
        %v696 = vunpack.c.l.s4 1966171168
        %v697 = vunpack.c.0.s8 %v696
        %v698 = vlaneseq
        %v699 = vshrl.u32 %v698, 7
        %v700 = vsub.s32 %v697, %v699
        %v701 = vrot.slane %v673, %v700
        %v702 = vcombine.high %v680, %v680
        %v703 = vcombine.high %v687, %v687
        %v704 = vcombine.high %v694, %v694
        %v705 = vcombine.high %v701, %v701
        %vm706 = vcmask 64512
        %v707 = vsel %vm706, %v600, 0
        %709 = vmatprep.subr.mxu0 0.0
        %710 = vmatpush1.msra.mxu0 %v646
        %711 = vmatprep.subr.mxu0 0.0
        %712 = vmatpush1.msra.mxu0 0.0
        %713 = vmatprep.subr.mxu0 0.0
        %714 = vmatpush1.msra.mxu0 0.0
        %715 = vmatprep.subr.mxu0 0.0
        %716 = vmatpush1.msra.mxu0 0.0
        %717 = vmatprep.subr.mxu0 0.0
        %718 = vmatpush1.msra.mxu0 0.0
        %719 = vmatprep.subr.mxu0 0.0
        %720 = vmatpush1.msra.mxu0 0.0
        %721 = vmatprep.subr.mxu0 0.0
        %722 = vmatpush1.msra.mxu0 0.0
        %723 = vmatprep.subr.mxu0 0.0
        %724 = vmatpush1.msra.mxu0 0.0
        %725 = vmatprep.subr.mxu0 0.0
        %726 = vmatpush1.msra.mxu0 0.0
        %727 = vmatprep.subr.mxu0 0.0
        %728 = vmatpush1.msra.mxu0 0.0
        %729 = vmatprep.subr.mxu0 0.0
        %730 = vmatpush1.msra.mxu0 0.0
        %731 = vmatprep.subr.mxu0 0.0
        %732 = vmatpush1.msra.mxu0 0.0
        %733 = vmatprep.subr.mxu0 0.0
        %734 = vmatpush1.msra.mxu0 0.0
        %735 = vmatprep.subr.mxu0 0.0
        %736 = vmatpush1.msra.mxu0 0.0
        %737 = vmatprep.subr.mxu0 0.0
        %738 = vmatpush1.msra.mxu0 0.0
        %739 = vmatprep.subr.mxu0 0.0
        %740 = vmatpush1.msra.mxu0 0.0
        %741 = vmatprep.subr.mxu0 0.0
        %742 = vmatpush1.msra.mxu0 0.0
        %743 = vmatprep.subr.mxu0 0.0
        %744 = vmatpush1.msra.mxu0 0.0
        %745 = vmatprep.subr.mxu0 0.0
        %746 = vmatpush1.msra.mxu0 0.0
        %747 = vmatprep.subr.mxu0 0.0
        %748 = vmatpush1.msra.mxu0 0.0
        %749 = vmatprep.subr.mxu0 0.0
        %750 = vmatpush1.msra.mxu0 0.0
        %751 = vmatprep.subr.mxu0 0.0
        %752 = vmatpush1.msra.mxu0 0.0
        %753 = vmatprep.subr.mxu0 0.0
        %754 = vmatpush1.msra.mxu0 0.0
        %755 = vmatprep.subr.mxu0 0.0
        %756 = vmatpush1.msra.mxu0 0.0
        %757 = vmatprep.subr.mxu0 0.0
        %758 = vmatpush1.msra.mxu0 0.0
        %759 = vmatprep.subr.mxu0 0.0
        %760 = vmatpush1.msra.mxu0 0.0
        %761 = vmatprep.subr.mxu0 0.0
        %762 = vmatpush1.msra.mxu0 0.0
        %763 = vmatprep.subr.mxu0 0.0
        %764 = vmatpush1.msra.mxu0 0.0
        %765 = vmatprep.subr.mxu0 0.0
        %766 = vmatpush1.msra.mxu0 0.0
        %767 = vmatprep.subr.mxu0 0.0
        %768 = vmatpush1.msra.mxu0 0.0
        %769 = vmatprep.subr.mxu0 0.0
        %770 = vmatpush1.msra.mxu0 0.0
        %771 = vmatprep.subr.mxu0 0.0
        %772 = vmatpush1.msra.mxu0 0.0
        %773 = vmatprep.mubr.f32.mxu0 0.0
        %774 = vmatmul.mubr.f32.gmra.mrb[0].mxu0 %v707
        %v775 = vpop.f32.mrb[0].mxu0
        %v776 = vadd.f32 %v589, %v775
        %v777 = vpop.f32.mrb[0].mxu0
        %778 = vdwg.mxu0
        %v779 = vsel %vm706, %v605, 0
        %781 = vmatprep.subr.mxu0 0.0
        %782 = vmatpush1.msra.mxu0 %v647
        %783 = vmatprep.subr.mxu0 0.0
        %784 = vmatpush1.msra.mxu0 0.0
        %785 = vmatprep.subr.mxu0 0.0
        %786 = vmatpush1.msra.mxu0 0.0
        %787 = vmatprep.subr.mxu0 0.0
        %788 = vmatpush1.msra.mxu0 0.0
        %789 = vmatprep.subr.mxu0 0.0
        %790 = vmatpush1.msra.mxu0 0.0
        %791 = vmatprep.subr.mxu0 0.0
        %792 = vmatpush1.msra.mxu0 0.0
        %793 = vmatprep.subr.mxu0 0.0
        %794 = vmatpush1.msra.mxu0 0.0
        %795 = vmatprep.subr.mxu0 0.0
        %796 = vmatpush1.msra.mxu0 0.0
        %797 = vmatprep.subr.mxu0 0.0
        %798 = vmatpush1.msra.mxu0 0.0
        %799 = vmatprep.subr.mxu0 0.0
        %800 = vmatpush1.msra.mxu0 0.0
        %801 = vmatprep.subr.mxu0 0.0
        %802 = vmatpush1.msra.mxu0 0.0
        %803 = vmatprep.subr.mxu0 0.0
        %804 = vmatpush1.msra.mxu0 0.0
        %805 = vmatprep.subr.mxu0 0.0
        %806 = vmatpush1.msra.mxu0 0.0
        %807 = vmatprep.subr.mxu0 0.0
        %808 = vmatpush1.msra.mxu0 0.0
        %809 = vmatprep.subr.mxu0 0.0
        %810 = vmatpush1.msra.mxu0 0.0
        %811 = vmatprep.subr.mxu0 0.0
        %812 = vmatpush1.msra.mxu0 0.0
        %813 = vmatprep.subr.mxu0 0.0
        %814 = vmatpush1.msra.mxu0 0.0
        %815 = vmatprep.subr.mxu0 0.0
        %816 = vmatpush1.msra.mxu0 0.0
        %817 = vmatprep.subr.mxu0 0.0
        %818 = vmatpush1.msra.mxu0 0.0
        %819 = vmatprep.subr.mxu0 0.0
        %820 = vmatpush1.msra.mxu0 0.0
        %821 = vmatprep.subr.mxu0 0.0
        %822 = vmatpush1.msra.mxu0 0.0
        %823 = vmatprep.subr.mxu0 0.0
        %824 = vmatpush1.msra.mxu0 0.0
        %825 = vmatprep.subr.mxu0 0.0
        %826 = vmatpush1.msra.mxu0 0.0
        %827 = vmatprep.subr.mxu0 0.0
        %828 = vmatpush1.msra.mxu0 0.0
        %829 = vmatprep.subr.mxu0 0.0
        %830 = vmatpush1.msra.mxu0 0.0
        %831 = vmatprep.subr.mxu0 0.0
        %832 = vmatpush1.msra.mxu0 0.0
        %833 = vmatprep.subr.mxu0 0.0
        %834 = vmatpush1.msra.mxu0 0.0
        %835 = vmatprep.subr.mxu0 0.0
        %836 = vmatpush1.msra.mxu0 0.0
        %837 = vmatprep.subr.mxu0 0.0
        %838 = vmatpush1.msra.mxu0 0.0
        %839 = vmatprep.subr.mxu0 0.0
        %840 = vmatpush1.msra.mxu0 0.0
        %841 = vmatprep.subr.mxu0 0.0
        %842 = vmatpush1.msra.mxu0 0.0
        %843 = vmatprep.subr.mxu0 0.0
        %844 = vmatpush1.msra.mxu0 0.0
        %845 = vmatprep.mubr.f32.mxu0 0.0
        %846 = vmatmul.mubr.f32.gmra.mrb[0].mxu0 %v779
        %v847 = vpop.f32.mrb[0].mxu0
        %v848 = vadd.f32 %v590, %v847
        %v849 = vpop.f32.mrb[0].mxu0
        %850 = vdwg.mxu0
        %v851 = vsel %vm706, %v610, 0
        %853 = vmatprep.subr.mxu0 0.0
        %854 = vmatpush1.msra.mxu0 %v648
        %855 = vmatprep.subr.mxu0 0.0
        %856 = vmatpush1.msra.mxu0 0.0
        %857 = vmatprep.subr.mxu0 0.0
        %858 = vmatpush1.msra.mxu0 0.0
        %859 = vmatprep.subr.mxu0 0.0
        %860 = vmatpush1.msra.mxu0 0.0
        %861 = vmatprep.subr.mxu0 0.0
        %862 = vmatpush1.msra.mxu0 0.0
        %863 = vmatprep.subr.mxu0 0.0
        %864 = vmatpush1.msra.mxu0 0.0
        %865 = vmatprep.subr.mxu0 0.0
        %866 = vmatpush1.msra.mxu0 0.0
        %867 = vmatprep.subr.mxu0 0.0
        %868 = vmatpush1.msra.mxu0 0.0
        %869 = vmatprep.subr.mxu0 0.0
        %870 = vmatpush1.msra.mxu0 0.0
        %871 = vmatprep.subr.mxu0 0.0
        %872 = vmatpush1.msra.mxu0 0.0
        %873 = vmatprep.subr.mxu0 0.0
        %874 = vmatpush1.msra.mxu0 0.0
        %875 = vmatprep.subr.mxu0 0.0
        %876 = vmatpush1.msra.mxu0 0.0
        %877 = vmatprep.subr.mxu0 0.0
        %878 = vmatpush1.msra.mxu0 0.0
        %879 = vmatprep.subr.mxu0 0.0
        %880 = vmatpush1.msra.mxu0 0.0
        %881 = vmatprep.subr.mxu0 0.0
        %882 = vmatpush1.msra.mxu0 0.0
        %883 = vmatprep.subr.mxu0 0.0
        %884 = vmatpush1.msra.mxu0 0.0
        %885 = vmatprep.subr.mxu0 0.0
        %886 = vmatpush1.msra.mxu0 0.0
        %887 = vmatprep.subr.mxu0 0.0
        %888 = vmatpush1.msra.mxu0 0.0
        %889 = vmatprep.subr.mxu0 0.0
        %890 = vmatpush1.msra.mxu0 0.0
        %891 = vmatprep.subr.mxu0 0.0
        %892 = vmatpush1.msra.mxu0 0.0
        %893 = vmatprep.subr.mxu0 0.0
        %894 = vmatpush1.msra.mxu0 0.0
        %895 = vmatprep.subr.mxu0 0.0
        %896 = vmatpush1.msra.mxu0 0.0
        %897 = vmatprep.subr.mxu0 0.0
        %898 = vmatpush1.msra.mxu0 0.0
        %899 = vmatprep.subr.mxu0 0.0
        %900 = vmatpush1.msra.mxu0 0.0
        %901 = vmatprep.subr.mxu0 0.0
        %902 = vmatpush1.msra.mxu0 0.0
        %903 = vmatprep.subr.mxu0 0.0
        %904 = vmatpush1.msra.mxu0 0.0
        %905 = vmatprep.subr.mxu0 0.0
        %906 = vmatpush1.msra.mxu0 0.0
        %907 = vmatprep.subr.mxu0 0.0
        %908 = vmatpush1.msra.mxu0 0.0
        %909 = vmatprep.subr.mxu0 0.0
        %910 = vmatpush1.msra.mxu0 0.0
        %911 = vmatprep.subr.mxu0 0.0
        %912 = vmatpush1.msra.mxu0 0.0
        %913 = vmatprep.subr.mxu0 0.0
        %914 = vmatpush1.msra.mxu0 0.0
        %915 = vmatprep.subr.mxu0 0.0
        %916 = vmatpush1.msra.mxu0 0.0
        %917 = vmatprep.mubr.f32.mxu0 0.0
        %918 = vmatmul.mubr.f32.gmra.mrb[0].mxu0 %v851
        %v919 = vpop.f32.mrb[0].mxu0
        %v920 = vadd.f32 %v591, %v919
        %v921 = vpop.f32.mrb[0].mxu0
        %922 = vdwg.mxu0
        %v923 = vsel %vm706, %v615, 0
        %925 = vmatprep.subr.mxu0 0.0
        %926 = vmatpush1.msra.mxu0 %v649
        %927 = vmatprep.subr.mxu0 0.0
        %928 = vmatpush1.msra.mxu0 0.0
        %929 = vmatprep.subr.mxu0 0.0
        %930 = vmatpush1.msra.mxu0 0.0
        %931 = vmatprep.subr.mxu0 0.0
        %932 = vmatpush1.msra.mxu0 0.0
        %933 = vmatprep.subr.mxu0 0.0
        %934 = vmatpush1.msra.mxu0 0.0
        %935 = vmatprep.subr.mxu0 0.0
        %936 = vmatpush1.msra.mxu0 0.0
        %937 = vmatprep.subr.mxu0 0.0
        %938 = vmatpush1.msra.mxu0 0.0
        %939 = vmatprep.subr.mxu0 0.0
        %940 = vmatpush1.msra.mxu0 0.0
        %941 = vmatprep.subr.mxu0 0.0
        %942 = vmatpush1.msra.mxu0 0.0
        %943 = vmatprep.subr.mxu0 0.0
        %944 = vmatpush1.msra.mxu0 0.0
        %945 = vmatprep.subr.mxu0 0.0
        %946 = vmatpush1.msra.mxu0 0.0
        %947 = vmatprep.subr.mxu0 0.0
        %948 = vmatpush1.msra.mxu0 0.0
        %949 = vmatprep.subr.mxu0 0.0
        %950 = vmatpush1.msra.mxu0 0.0
        %951 = vmatprep.subr.mxu0 0.0
        %952 = vmatpush1.msra.mxu0 0.0
        %953 = vmatprep.subr.mxu0 0.0
        %954 = vmatpush1.msra.mxu0 0.0
        %955 = vmatprep.subr.mxu0 0.0
        %956 = vmatpush1.msra.mxu0 0.0
        %957 = vmatprep.subr.mxu0 0.0
        %958 = vmatpush1.msra.mxu0 0.0
        %959 = vmatprep.subr.mxu0 0.0
        %960 = vmatpush1.msra.mxu0 0.0
        %961 = vmatprep.subr.mxu0 0.0
        %962 = vmatpush1.msra.mxu0 0.0
        %963 = vmatprep.subr.mxu0 0.0
        %964 = vmatpush1.msra.mxu0 0.0
        %965 = vmatprep.subr.mxu0 0.0
        %966 = vmatpush1.msra.mxu0 0.0
        %967 = vmatprep.subr.mxu0 0.0
        %968 = vmatpush1.msra.mxu0 0.0
        %969 = vmatprep.subr.mxu0 0.0
        %970 = vmatpush1.msra.mxu0 0.0
        %971 = vmatprep.subr.mxu0 0.0
        %972 = vmatpush1.msra.mxu0 0.0
        %973 = vmatprep.subr.mxu0 0.0
        %974 = vmatpush1.msra.mxu0 0.0
        %975 = vmatprep.subr.mxu0 0.0
        %976 = vmatpush1.msra.mxu0 0.0
        %977 = vmatprep.subr.mxu0 0.0
        %978 = vmatpush1.msra.mxu0 0.0
        %979 = vmatprep.subr.mxu0 0.0
        %980 = vmatpush1.msra.mxu0 0.0
        %981 = vmatprep.subr.mxu0 0.0
        %982 = vmatpush1.msra.mxu0 0.0
        %983 = vmatprep.subr.mxu0 0.0
        %984 = vmatpush1.msra.mxu0 0.0
        %985 = vmatprep.subr.mxu0 0.0
        %986 = vmatpush1.msra.mxu0 0.0
        %987 = vmatprep.subr.mxu0 0.0
        %988 = vmatpush1.msra.mxu0 0.0
        %989 = vmatprep.mubr.f32.mxu0 0.0
        %990 = vmatmul.mubr.f32.gmra.mrb[0].mxu0 %v923
        %v991 = vpop.f32.mrb[0].mxu0
        %v992 = vadd.f32 %v592, %v991
        %v993 = vpop.f32.mrb[0].mxu0
        %994 = vdwg.mxu0
        %v995 = vsel %vm706, %v620, 0
        %997 = vmatprep.subr.mxu0 0.0
        %998 = vmatpush1.msra.mxu0 %v650
        %999 = vmatprep.subr.mxu0 0.0
        %1000 = vmatpush1.msra.mxu0 0.0
        %1001 = vmatprep.subr.mxu0 0.0
        %1002 = vmatpush1.msra.mxu0 0.0
        %1003 = vmatprep.subr.mxu0 0.0
        %1004 = vmatpush1.msra.mxu0 0.0
        %1005 = vmatprep.subr.mxu0 0.0
        %1006 = vmatpush1.msra.mxu0 0.0
        %1007 = vmatprep.subr.mxu0 0.0
        %1008 = vmatpush1.msra.mxu0 0.0
        %1009 = vmatprep.subr.mxu0 0.0
        %1010 = vmatpush1.msra.mxu0 0.0
        %1011 = vmatprep.subr.mxu0 0.0
        %1012 = vmatpush1.msra.mxu0 0.0
        %1013 = vmatprep.subr.mxu0 0.0
        %1014 = vmatpush1.msra.mxu0 0.0
        %1015 = vmatprep.subr.mxu0 0.0
        %1016 = vmatpush1.msra.mxu0 0.0
        %1017 = vmatprep.subr.mxu0 0.0
        %1018 = vmatpush1.msra.mxu0 0.0
        %1019 = vmatprep.subr.mxu0 0.0
        %1020 = vmatpush1.msra.mxu0 0.0
        %1021 = vmatprep.subr.mxu0 0.0
        %1022 = vmatpush1.msra.mxu0 0.0
        %1023 = vmatprep.subr.mxu0 0.0
        %1024 = vmatpush1.msra.mxu0 0.0
        %1025 = vmatprep.subr.mxu0 0.0
        %1026 = vmatpush1.msra.mxu0 0.0
        %1027 = vmatprep.subr.mxu0 0.0
        %1028 = vmatpush1.msra.mxu0 0.0
        %1029 = vmatprep.subr.mxu0 0.0
        %1030 = vmatpush1.msra.mxu0 0.0
        %1031 = vmatprep.subr.mxu0 0.0
        %1032 = vmatpush1.msra.mxu0 0.0
        %1033 = vmatprep.subr.mxu0 0.0
        %1034 = vmatpush1.msra.mxu0 0.0
        %1035 = vmatprep.subr.mxu0 0.0
        %1036 = vmatpush1.msra.mxu0 0.0
        %1037 = vmatprep.subr.mxu0 0.0
        %1038 = vmatpush1.msra.mxu0 0.0
        %1039 = vmatprep.subr.mxu0 0.0
        %1040 = vmatpush1.msra.mxu0 0.0
        %1041 = vmatprep.subr.mxu0 0.0
        %1042 = vmatpush1.msra.mxu0 0.0
        %1043 = vmatprep.subr.mxu0 0.0
        %1044 = vmatpush1.msra.mxu0 0.0
        %1045 = vmatprep.subr.mxu0 0.0
        %1046 = vmatpush1.msra.mxu0 0.0
        %1047 = vmatprep.subr.mxu0 0.0
        %1048 = vmatpush1.msra.mxu0 0.0
        %1049 = vmatprep.subr.mxu0 0.0
        %1050 = vmatpush1.msra.mxu0 0.0
        %1051 = vmatprep.subr.mxu0 0.0
        %1052 = vmatpush1.msra.mxu0 0.0
        %1053 = vmatprep.subr.mxu0 0.0
        %1054 = vmatpush1.msra.mxu0 0.0
        %1055 = vmatprep.subr.mxu0 0.0
        %1056 = vmatpush1.msra.mxu0 0.0
        %1057 = vmatprep.subr.mxu0 0.0
        %1058 = vmatpush1.msra.mxu0 0.0
        %1059 = vmatprep.subr.mxu0 0.0
        %1060 = vmatpush1.msra.mxu0 0.0
        %1061 = vmatprep.mubr.f32.mxu0 0.0
        %1062 = vmatmul.mubr.f32.gmra.mrb[0].mxu0 %v995
        %v1063 = vpop.f32.mrb[0].mxu0
        %v1064 = vadd.f32 %v593, %v1063
        %v1065 = vpop.f32.mrb[0].mxu0
        %1066 = vdwg.mxu0
        %v1067 = vsel %vm706, %v625, 0
        %1069 = vmatprep.subr.mxu0 0.0
        %1070 = vmatpush1.msra.mxu0 %v651
        %1071 = vmatprep.subr.mxu0 0.0
        %1072 = vmatpush1.msra.mxu0 0.0
        %1073 = vmatprep.subr.mxu0 0.0
        %1074 = vmatpush1.msra.mxu0 0.0
        %1075 = vmatprep.subr.mxu0 0.0
        %1076 = vmatpush1.msra.mxu0 0.0
        %1077 = vmatprep.subr.mxu0 0.0
        %1078 = vmatpush1.msra.mxu0 0.0
        %1079 = vmatprep.subr.mxu0 0.0
        %1080 = vmatpush1.msra.mxu0 0.0
        %1081 = vmatprep.subr.mxu0 0.0
        %1082 = vmatpush1.msra.mxu0 0.0
        %1083 = vmatprep.subr.mxu0 0.0
        %1084 = vmatpush1.msra.mxu0 0.0
        %1085 = vmatprep.subr.mxu0 0.0
        %1086 = vmatpush1.msra.mxu0 0.0
        %1087 = vmatprep.subr.mxu0 0.0
        %1088 = vmatpush1.msra.mxu0 0.0
        %1089 = vmatprep.subr.mxu0 0.0
        %1090 = vmatpush1.msra.mxu0 0.0
        %1091 = vmatprep.subr.mxu0 0.0
        %1092 = vmatpush1.msra.mxu0 0.0
        %1093 = vmatprep.subr.mxu0 0.0
        %1094 = vmatpush1.msra.mxu0 0.0
        %1095 = vmatprep.subr.mxu0 0.0
        %1096 = vmatpush1.msra.mxu0 0.0
        %1097 = vmatprep.subr.mxu0 0.0
        %1098 = vmatpush1.msra.mxu0 0.0
        %1099 = vmatprep.subr.mxu0 0.0
        %1100 = vmatpush1.msra.mxu0 0.0
        %1101 = vmatprep.subr.mxu0 0.0
        %1102 = vmatpush1.msra.mxu0 0.0
        %1103 = vmatprep.subr.mxu0 0.0
        %1104 = vmatpush1.msra.mxu0 0.0
        %1105 = vmatprep.subr.mxu0 0.0
        %1106 = vmatpush1.msra.mxu0 0.0
        %1107 = vmatprep.subr.mxu0 0.0
        %1108 = vmatpush1.msra.mxu0 0.0
        %1109 = vmatprep.subr.mxu0 0.0
        %1110 = vmatpush1.msra.mxu0 0.0
        %1111 = vmatprep.subr.mxu0 0.0
        %1112 = vmatpush1.msra.mxu0 0.0
        %1113 = vmatprep.subr.mxu0 0.0
        %1114 = vmatpush1.msra.mxu0 0.0
        %1115 = vmatprep.subr.mxu0 0.0
        %1116 = vmatpush1.msra.mxu0 0.0
        %1117 = vmatprep.subr.mxu0 0.0
        %1118 = vmatpush1.msra.mxu0 0.0
        %1119 = vmatprep.subr.mxu0 0.0
        %1120 = vmatpush1.msra.mxu0 0.0
        %1121 = vmatprep.subr.mxu0 0.0
        %1122 = vmatpush1.msra.mxu0 0.0
        %1123 = vmatprep.subr.mxu0 0.0
        %1124 = vmatpush1.msra.mxu0 0.0
        %1125 = vmatprep.subr.mxu0 0.0
        %1126 = vmatpush1.msra.mxu0 0.0
        %1127 = vmatprep.subr.mxu0 0.0
        %1128 = vmatpush1.msra.mxu0 0.0
        %1129 = vmatprep.subr.mxu0 0.0
        %1130 = vmatpush1.msra.mxu0 0.0
        %1131 = vmatprep.subr.mxu0 0.0
        %1132 = vmatpush1.msra.mxu0 0.0
        %1133 = vmatprep.mubr.f32.mxu0 0.0
        %1134 = vmatmul.mubr.f32.gmra.mrb[0].mxu0 %v1067
        %v1135 = vpop.f32.mrb[0].mxu0
        %v1136 = vadd.f32 %v594, %v1135
        %v1137 = vpop.f32.mrb[0].mxu0
        %1138 = vdwg.mxu0
        %v1139 = vsel %vm706, %v630, 0
        %1141 = vmatprep.subr.mxu0 0.0
        %1142 = vmatpush1.msra.mxu0 %v652
        %1143 = vmatprep.subr.mxu0 0.0
        %1144 = vmatpush1.msra.mxu0 0.0
        %1145 = vmatprep.subr.mxu0 0.0
        %1146 = vmatpush1.msra.mxu0 0.0
        %1147 = vmatprep.subr.mxu0 0.0
        %1148 = vmatpush1.msra.mxu0 0.0
        %1149 = vmatprep.subr.mxu0 0.0
        %1150 = vmatpush1.msra.mxu0 0.0
        %1151 = vmatprep.subr.mxu0 0.0
        %1152 = vmatpush1.msra.mxu0 0.0
        %1153 = vmatprep.subr.mxu0 0.0
        %1154 = vmatpush1.msra.mxu0 0.0
        %1155 = vmatprep.subr.mxu0 0.0
        %1156 = vmatpush1.msra.mxu0 0.0
        %1157 = vmatprep.subr.mxu0 0.0
        %1158 = vmatpush1.msra.mxu0 0.0
        %1159 = vmatprep.subr.mxu0 0.0
        %1160 = vmatpush1.msra.mxu0 0.0
        %1161 = vmatprep.subr.mxu0 0.0
        %1162 = vmatpush1.msra.mxu0 0.0
        %1163 = vmatprep.subr.mxu0 0.0
        %1164 = vmatpush1.msra.mxu0 0.0
        %1165 = vmatprep.subr.mxu0 0.0
        %1166 = vmatpush1.msra.mxu0 0.0
        %1167 = vmatprep.subr.mxu0 0.0
        %1168 = vmatpush1.msra.mxu0 0.0
        %1169 = vmatprep.subr.mxu0 0.0
        %1170 = vmatpush1.msra.mxu0 0.0
        %1171 = vmatprep.subr.mxu0 0.0
        %1172 = vmatpush1.msra.mxu0 0.0
        %1173 = vmatprep.subr.mxu0 0.0
        %1174 = vmatpush1.msra.mxu0 0.0
        %1175 = vmatprep.subr.mxu0 0.0
        %1176 = vmatpush1.msra.mxu0 0.0
        %1177 = vmatprep.subr.mxu0 0.0
        %1178 = vmatpush1.msra.mxu0 0.0
        %1179 = vmatprep.subr.mxu0 0.0
        %1180 = vmatpush1.msra.mxu0 0.0
        %1181 = vmatprep.subr.mxu0 0.0
        %1182 = vmatpush1.msra.mxu0 0.0
        %1183 = vmatprep.subr.mxu0 0.0
        %1184 = vmatpush1.msra.mxu0 0.0
        %1185 = vmatprep.subr.mxu0 0.0
        %1186 = vmatpush1.msra.mxu0 0.0
        %1187 = vmatprep.subr.mxu0 0.0
        %1188 = vmatpush1.msra.mxu0 0.0
        %1189 = vmatprep.subr.mxu0 0.0
        %1190 = vmatpush1.msra.mxu0 0.0
        %1191 = vmatprep.subr.mxu0 0.0
        %1192 = vmatpush1.msra.mxu0 0.0
        %1193 = vmatprep.subr.mxu0 0.0
        %1194 = vmatpush1.msra.mxu0 0.0
        %1195 = vmatprep.subr.mxu0 0.0
        %1196 = vmatpush1.msra.mxu0 0.0
        %1197 = vmatprep.subr.mxu0 0.0
        %1198 = vmatpush1.msra.mxu0 0.0
        %1199 = vmatprep.subr.mxu0 0.0
        %1200 = vmatpush1.msra.mxu0 0.0
        %1201 = vmatprep.subr.mxu0 0.0
        %1202 = vmatpush1.msra.mxu0 0.0
        %1203 = vmatprep.subr.mxu0 0.0
        %1204 = vmatpush1.msra.mxu0 0.0
        %1205 = vmatprep.mubr.f32.mxu0 0.0
        %1206 = vmatmul.mubr.f32.gmra.mrb[0].mxu0 %v1139
        %v1207 = vpop.f32.mrb[0].mxu0
        %v1208 = vadd.f32 %v595, %v1207
        %v1209 = vpop.f32.mrb[0].mxu0
        %1210 = vdwg.mxu0
        %v1211 = vsel %vm706, %v635, 0
        %1213 = vmatprep.subr.mxu0 0.0
        %1214 = vmatpush1.msra.mxu0 %v653
        %1215 = vmatprep.subr.mxu0 0.0
        %1216 = vmatpush1.msra.mxu0 0.0
        %1217 = vmatprep.subr.mxu0 0.0
        %1218 = vmatpush1.msra.mxu0 0.0
        %1219 = vmatprep.subr.mxu0 0.0
        %1220 = vmatpush1.msra.mxu0 0.0
        %1221 = vmatprep.subr.mxu0 0.0
        %1222 = vmatpush1.msra.mxu0 0.0
        %1223 = vmatprep.subr.mxu0 0.0
        %1224 = vmatpush1.msra.mxu0 0.0
        %1225 = vmatprep.subr.mxu0 0.0
        %1226 = vmatpush1.msra.mxu0 0.0
        %1227 = vmatprep.subr.mxu0 0.0
        %1228 = vmatpush1.msra.mxu0 0.0
        %1229 = vmatprep.subr.mxu0 0.0
        %1230 = vmatpush1.msra.mxu0 0.0
        %1231 = vmatprep.subr.mxu0 0.0
        %1232 = vmatpush1.msra.mxu0 0.0
        %1233 = vmatprep.subr.mxu0 0.0
        %1234 = vmatpush1.msra.mxu0 0.0
        %1235 = vmatprep.subr.mxu0 0.0
        %1236 = vmatpush1.msra.mxu0 0.0
        %1237 = vmatprep.subr.mxu0 0.0
        %1238 = vmatpush1.msra.mxu0 0.0
        %1239 = vmatprep.subr.mxu0 0.0
        %1240 = vmatpush1.msra.mxu0 0.0
        %1241 = vmatprep.subr.mxu0 0.0
        %1242 = vmatpush1.msra.mxu0 0.0
        %1243 = vmatprep.subr.mxu0 0.0
        %1244 = vmatpush1.msra.mxu0 0.0
        %1245 = vmatprep.subr.mxu0 0.0
        %1246 = vmatpush1.msra.mxu0 0.0
        %1247 = vmatprep.subr.mxu0 0.0
        %1248 = vmatpush1.msra.mxu0 0.0
        %1249 = vmatprep.subr.mxu0 0.0
        %1250 = vmatpush1.msra.mxu0 0.0
        %1251 = vmatprep.subr.mxu0 0.0
        %1252 = vmatpush1.msra.mxu0 0.0
        %1253 = vmatprep.subr.mxu0 0.0
        %1254 = vmatpush1.msra.mxu0 0.0
        %1255 = vmatprep.subr.mxu0 0.0
        %1256 = vmatpush1.msra.mxu0 0.0
        %1257 = vmatprep.subr.mxu0 0.0
        %1258 = vmatpush1.msra.mxu0 0.0
        %1259 = vmatprep.subr.mxu0 0.0
        %1260 = vmatpush1.msra.mxu0 0.0
        %1261 = vmatprep.subr.mxu0 0.0
        %1262 = vmatpush1.msra.mxu0 0.0
        %1263 = vmatprep.subr.mxu0 0.0
        %1264 = vmatpush1.msra.mxu0 0.0
        %1265 = vmatprep.subr.mxu0 0.0
        %1266 = vmatpush1.msra.mxu0 0.0
        %1267 = vmatprep.subr.mxu0 0.0
        %1268 = vmatpush1.msra.mxu0 0.0
        %1269 = vmatprep.subr.mxu0 0.0
        %1270 = vmatpush1.msra.mxu0 0.0
        %1271 = vmatprep.subr.mxu0 0.0
        %1272 = vmatpush1.msra.mxu0 0.0
        %1273 = vmatprep.subr.mxu0 0.0
        %1274 = vmatpush1.msra.mxu0 0.0
        %1275 = vmatprep.subr.mxu0 0.0
        %1276 = vmatpush1.msra.mxu0 0.0
        %1277 = vmatprep.mubr.f32.mxu0 0.0
        %1278 = vmatmul.mubr.f32.gmra.mrb[0].mxu0 %v1211
        %v1279 = vpop.f32.mrb[0].mxu0
        %v1280 = vadd.f32 %v596, %v1279
        %v1281 = vpop.f32.mrb[0].mxu0
        %1282 = vdwg.mxu0
        %v1283 = vsub.f32 %v776, %v600
        %v1284 = vsub.f32 %v848, %v605
        %v1285 = vsub.f32 %v920, %v610
        %v1286 = vsub.f32 %v992, %v615
        %v1287 = vsub.f32 %v1064, %v620
        %v1288 = vsub.f32 %v1136, %v625
        %v1289 = vsub.f32 %v1208, %v630
        %v1290 = vsub.f32 %v1280, %v635
        %v1291 = vlaneseq
        %v1292 = vshrl.u32 %v1291, 7
        %v1293 = vsub.s32 0, %v1292
        %v1294 = vrot.slane %v680, %v1293
        %v1295 = vlaneseq
        %v1296 = vshrl.u32 %v1295, 7
        %v1297 = vsub.s32 0, %v1296
        %v1298 = vrot.slane %v694, %v1297
        %v1299 = vlaneseq
        %v1300 = vshrl.u32 %v1299, 7
        %v1301 = vsub.s32 0, %v1300
        %v1302 = vrot.slane %v702, %v1301
        %v1303 = vlaneseq
        %v1304 = vshrl.u32 %v1303, 7
        %v1305 = vsub.s32 0, %v1304
        %v1306 = vrot.slane %v704, %v1305
        %v1307 = vlaneseq
        %v1308 = vshrl.u32 %v1307, 7
        %v1309 = vsub.s32 0, %v1308
        %v1310 = vrot.slane %v687, %v1309
        %v1311 = vlaneseq
        %v1312 = vshrl.u32 %v1311, 7
        %v1313 = vsub.s32 0, %v1312
        %v1314 = vrot.slane %v701, %v1313
        %v1315 = vlaneseq
        %v1316 = vshrl.u32 %v1315, 7
        %v1317 = vsub.s32 0, %v1316
        %v1318 = vrot.slane %v703, %v1317
        %v1319 = vlaneseq
        %v1320 = vshrl.u32 %v1319, 7
        %v1321 = vsub.s32 0, %v1320
        %v1322 = vrot.slane %v705, %v1321
        %v1331 = vmul.f32 %v1294, %v1283
        %v1332 = vmul.f32 %v1298, %v1284
        %v1333 = vmul.f32 %v1302, %v1285
        %v1334 = vmul.f32 %v1306, %v1286
        %v1335 = vmul.f32 %v1310, %v1287
        %v1336 = vmul.f32 %v1314, %v1288
        %v1337 = vmul.f32 %v1318, %v1289
        %v1338 = vmul.f32 %v1322, %v1290
        %v1339 = vadd.f32 %v600, %v1331
        %v1340 = vadd.f32 %v605, %v1332
        %v1341 = vadd.f32 %v610, %v1333
        %v1342 = vadd.f32 %v615, %v1334
        %v1343 = vadd.f32 %v620, %v1335
        %v1344 = vadd.f32 %v625, %v1336
        %v1345 = vadd.f32 %v630, %v1337
        %v1346 = vadd.f32 %v635, %v1338
        %s1347 = scalar_lea.vmem %s511, 64 [#allocation3]
        %v1348 = vld [vmem:[%s1347] sm:$0xf]
        %v1349 = vld [vmem:[%s1347 + $0x4] sm:$0xf]
        %v1350 = vld [vmem:[%s1347 + $0x8] sm:$0xf]
        %v1351 = vld [vmem:[%s1347 + $0xc] sm:$0xf]
        %v1352 = vld [vmem:[%s1347 + $0x10] sm:$0xf]
        %v1353 = vld [vmem:[%s1347 + $0x14] sm:$0xf]
        %v1354 = vld [vmem:[%s1347 + $0x18] sm:$0xf]
        %v1355 = vld [vmem:[%s1347 + $0x1c] sm:$0xf]
        %v1356 = vunpack.c.l.bf16 %v1348
        %v1357 = vunpack.c.l.bf16 %v1349
        %v1358 = vunpack.c.l.bf16 %v1350
        %v1359 = vunpack.c.l.bf16 %v1351
        %v1360 = vunpack.c.l.bf16 %v1352
        %v1361 = vunpack.c.l.bf16 %v1353
        %v1362 = vunpack.c.l.bf16 %v1354
        %v1363 = vunpack.c.l.bf16 %v1355
        %s1364 = scalar_lea.vmem %s504, 16 [#allocation2]
        %v1365 = vld [vmem:[%s1364] sm:$0xff]
        %v1367 = vcombine.high %v1365, %v1365
        %v1369 = vunpack.c.l.s4 1966171168
        %v1370 = vunpack.c.0.s8 %v1369
        %v1371 = vlaneseq
        %v1372 = vshrl.u32 %v1371, 7
        %v1373 = vsub.s32 %v1370, %v1372
        %v1374 = vrot.slane %v1365, %v1373
        %v1376 = vunpack.c.l.s4 1966171168
        %v1377 = vunpack.c.0.s8 %v1376
        %v1378 = vlaneseq
        %v1379 = vshrl.u32 %v1378, 7
        %v1380 = vsub.s32 %v1377, %v1379
        %v1381 = vrot.slane %v1367, %v1380
        %v1382 = vcombine.high %v1374, %v1374
        %v1383 = vcombine.high %v1381, %v1381
        %v1385 = vunpack.c.l.s4 1966171168
        %v1386 = vunpack.c.0.s8 %v1385
        %v1387 = vlaneseq
        %v1388 = vshrl.u32 %v1387, 7
        %v1389 = vsub.s32 %v1386, %v1388
        %v1390 = vrot.slane %v1374, %v1389
        %v1392 = vunpack.c.l.s4 1966171168
        %v1393 = vunpack.c.0.s8 %v1392
        %v1394 = vlaneseq
        %v1395 = vshrl.u32 %v1394, 7
        %v1396 = vsub.s32 %v1393, %v1395
        %v1397 = vrot.slane %v1381, %v1396
        %v1399 = vunpack.c.l.s4 1966171168
        %v1400 = vunpack.c.0.s8 %v1399
        %v1401 = vlaneseq
        %v1402 = vshrl.u32 %v1401, 7
        %v1403 = vsub.s32 %v1400, %v1402
        %v1404 = vrot.slane %v1382, %v1403
        %v1406 = vunpack.c.l.s4 1966171168
        %v1407 = vunpack.c.0.s8 %v1406
        %v1408 = vlaneseq
        %v1409 = vshrl.u32 %v1408, 7
        %v1410 = vsub.s32 %v1407, %v1409
        %v1411 = vrot.slane %v1383, %v1410
        %v1412 = vcombine.high %v1390, %v1390
        %v1413 = vcombine.high %v1397, %v1397
        %v1414 = vcombine.high %v1404, %v1404
        %v1415 = vcombine.high %v1411, %v1411
        %v1417 = vsel %vm706, %v1339, 0
        %1419 = vmatprep.subr.mxu0 0.0
        %1420 = vmatpush1.msra.mxu0 %v1356
        %1421 = vmatprep.subr.mxu0 0.0
        %1422 = vmatpush1.msra.mxu0 0.0
        %1423 = vmatprep.subr.mxu0 0.0
        %1424 = vmatpush1.msra.mxu0 0.0
        %1425 = vmatprep.subr.mxu0 0.0
        %1426 = vmatpush1.msra.mxu0 0.0
        %1427 = vmatprep.subr.mxu0 0.0
        %1428 = vmatpush1.msra.mxu0 0.0
        %1429 = vmatprep.subr.mxu0 0.0
        %1430 = vmatpush1.msra.mxu0 0.0
        %1431 = vmatprep.subr.mxu0 0.0
        %1432 = vmatpush1.msra.mxu0 0.0
        %1433 = vmatprep.subr.mxu0 0.0
        %1434 = vmatpush1.msra.mxu0 0.0
        %1435 = vmatprep.subr.mxu0 0.0
        %1436 = vmatpush1.msra.mxu0 0.0
        %1437 = vmatprep.subr.mxu0 0.0
        %1438 = vmatpush1.msra.mxu0 0.0
        %1439 = vmatprep.subr.mxu0 0.0
        %1440 = vmatpush1.msra.mxu0 0.0
        %1441 = vmatprep.subr.mxu0 0.0
        %1442 = vmatpush1.msra.mxu0 0.0
        %1443 = vmatprep.subr.mxu0 0.0
        %1444 = vmatpush1.msra.mxu0 0.0
        %1445 = vmatprep.subr.mxu0 0.0
        %1446 = vmatpush1.msra.mxu0 0.0
        %1447 = vmatprep.subr.mxu0 0.0
        %1448 = vmatpush1.msra.mxu0 0.0
        %1449 = vmatprep.subr.mxu0 0.0
        %1450 = vmatpush1.msra.mxu0 0.0
        %1451 = vmatprep.subr.mxu0 0.0
        %1452 = vmatpush1.msra.mxu0 0.0
        %1453 = vmatprep.subr.mxu0 0.0
        %1454 = vmatpush1.msra.mxu0 0.0
        %1455 = vmatprep.subr.mxu0 0.0
        %1456 = vmatpush1.msra.mxu0 0.0
        %1457 = vmatprep.subr.mxu0 0.0
        %1458 = vmatpush1.msra.mxu0 0.0
        %1459 = vmatprep.subr.mxu0 0.0
        %1460 = vmatpush1.msra.mxu0 0.0
        %1461 = vmatprep.subr.mxu0 0.0
        %1462 = vmatpush1.msra.mxu0 0.0
        %1463 = vmatprep.subr.mxu0 0.0
        %1464 = vmatpush1.msra.mxu0 0.0
        %1465 = vmatprep.subr.mxu0 0.0
        %1466 = vmatpush1.msra.mxu0 0.0
        %1467 = vmatprep.subr.mxu0 0.0
        %1468 = vmatpush1.msra.mxu0 0.0
        %1469 = vmatprep.subr.mxu0 0.0
        %1470 = vmatpush1.msra.mxu0 0.0
        %1471 = vmatprep.subr.mxu0 0.0
        %1472 = vmatpush1.msra.mxu0 0.0
        %1473 = vmatprep.subr.mxu0 0.0
        %1474 = vmatpush1.msra.mxu0 0.0
        %1475 = vmatprep.subr.mxu0 0.0
        %1476 = vmatpush1.msra.mxu0 0.0
        %1477 = vmatprep.subr.mxu0 0.0
        %1478 = vmatpush1.msra.mxu0 0.0
        %1479 = vmatprep.subr.mxu0 0.0
        %1480 = vmatpush1.msra.mxu0 0.0
        %1481 = vmatprep.subr.mxu0 0.0
        %1482 = vmatpush1.msra.mxu0 0.0
        %1483 = vmatprep.mubr.f32.mxu0 0.0
        %1484 = vmatmul.mubr.f32.gmra.mrb[0].mxu0 %v1417
        %v1485 = vpop.f32.mrb[0].mxu0
        %v1486 = vadd.f32 %v589, %v1485
        %v1487 = vpop.f32.mrb[0].mxu0
        %1488 = vdwg.mxu0
        %v1490 = vsel %vm706, %v1340, 0
        %1492 = vmatprep.subr.mxu0 0.0
        %1493 = vmatpush1.msra.mxu0 %v1357
        %1494 = vmatprep.subr.mxu0 0.0
        %1495 = vmatpush1.msra.mxu0 0.0
        %1496 = vmatprep.subr.mxu0 0.0
        %1497 = vmatpush1.msra.mxu0 0.0
        %1498 = vmatprep.subr.mxu0 0.0
        %1499 = vmatpush1.msra.mxu0 0.0
        %1500 = vmatprep.subr.mxu0 0.0
        %1501 = vmatpush1.msra.mxu0 0.0
        %1502 = vmatprep.subr.mxu0 0.0
        %1503 = vmatpush1.msra.mxu0 0.0
        %1504 = vmatprep.subr.mxu0 0.0
        %1505 = vmatpush1.msra.mxu0 0.0
        %1506 = vmatprep.subr.mxu0 0.0
        %1507 = vmatpush1.msra.mxu0 0.0
        %1508 = vmatprep.subr.mxu0 0.0
        %1509 = vmatpush1.msra.mxu0 0.0
        %1510 = vmatprep.subr.mxu0 0.0
        %1511 = vmatpush1.msra.mxu0 0.0
        %1512 = vmatprep.subr.mxu0 0.0
        %1513 = vmatpush1.msra.mxu0 0.0
        %1514 = vmatprep.subr.mxu0 0.0
        %1515 = vmatpush1.msra.mxu0 0.0
        %1516 = vmatprep.subr.mxu0 0.0
        %1517 = vmatpush1.msra.mxu0 0.0
        %1518 = vmatprep.subr.mxu0 0.0
        %1519 = vmatpush1.msra.mxu0 0.0
        %1520 = vmatprep.subr.mxu0 0.0
        %1521 = vmatpush1.msra.mxu0 0.0
        %1522 = vmatprep.subr.mxu0 0.0
        %1523 = vmatpush1.msra.mxu0 0.0
        %1524 = vmatprep.subr.mxu0 0.0
        %1525 = vmatpush1.msra.mxu0 0.0
        %1526 = vmatprep.subr.mxu0 0.0
        %1527 = vmatpush1.msra.mxu0 0.0
        %1528 = vmatprep.subr.mxu0 0.0
        %1529 = vmatpush1.msra.mxu0 0.0
        %1530 = vmatprep.subr.mxu0 0.0
        %1531 = vmatpush1.msra.mxu0 0.0
        %1532 = vmatprep.subr.mxu0 0.0
        %1533 = vmatpush1.msra.mxu0 0.0
        %1534 = vmatprep.subr.mxu0 0.0
        %1535 = vmatpush1.msra.mxu0 0.0
        %1536 = vmatprep.subr.mxu0 0.0
        %1537 = vmatpush1.msra.mxu0 0.0
        %1538 = vmatprep.subr.mxu0 0.0
        %1539 = vmatpush1.msra.mxu0 0.0
        %1540 = vmatprep.subr.mxu0 0.0
        %1541 = vmatpush1.msra.mxu0 0.0
        %1542 = vmatprep.subr.mxu0 0.0
        %1543 = vmatpush1.msra.mxu0 0.0
        %1544 = vmatprep.subr.mxu0 0.0
        %1545 = vmatpush1.msra.mxu0 0.0
        %1546 = vmatprep.subr.mxu0 0.0
        %1547 = vmatpush1.msra.mxu0 0.0
        %1548 = vmatprep.subr.mxu0 0.0
        %1549 = vmatpush1.msra.mxu0 0.0
        %1550 = vmatprep.subr.mxu0 0.0
        %1551 = vmatpush1.msra.mxu0 0.0
        %1552 = vmatprep.subr.mxu0 0.0
        %1553 = vmatpush1.msra.mxu0 0.0
        %1554 = vmatprep.subr.mxu0 0.0
        %1555 = vmatpush1.msra.mxu0 0.0
        %1556 = vmatprep.mubr.f32.mxu0 0.0
        %1557 = vmatmul.mubr.f32.gmra.mrb[0].mxu0 %v1490
        %v1558 = vpop.f32.mrb[0].mxu0
        %v1559 = vadd.f32 %v590, %v1558
        %v1560 = vpop.f32.mrb[0].mxu0
        %1561 = vdwg.mxu0
        %v1563 = vsel %vm706, %v1341, 0
        %1565 = vmatprep.subr.mxu0 0.0
        %1566 = vmatpush1.msra.mxu0 %v1358
        %1567 = vmatprep.subr.mxu0 0.0
        %1568 = vmatpush1.msra.mxu0 0.0
        %1569 = vmatprep.subr.mxu0 0.0
        %1570 = vmatpush1.msra.mxu0 0.0
        %1571 = vmatprep.subr.mxu0 0.0
        %1572 = vmatpush1.msra.mxu0 0.0
        %1573 = vmatprep.subr.mxu0 0.0
        %1574 = vmatpush1.msra.mxu0 0.0
        %1575 = vmatprep.subr.mxu0 0.0
        %1576 = vmatpush1.msra.mxu0 0.0
        %1577 = vmatprep.subr.mxu0 0.0
        %1578 = vmatpush1.msra.mxu0 0.0
        %1579 = vmatprep.subr.mxu0 0.0
        %1580 = vmatpush1.msra.mxu0 0.0
        %1581 = vmatprep.subr.mxu0 0.0
        %1582 = vmatpush1.msra.mxu0 0.0
        %1583 = vmatprep.subr.mxu0 0.0
        %1584 = vmatpush1.msra.mxu0 0.0
        %1585 = vmatprep.subr.mxu0 0.0
        %1586 = vmatpush1.msra.mxu0 0.0
        %1587 = vmatprep.subr.mxu0 0.0
        %1588 = vmatpush1.msra.mxu0 0.0
        %1589 = vmatprep.subr.mxu0 0.0
        %1590 = vmatpush1.msra.mxu0 0.0
        %1591 = vmatprep.subr.mxu0 0.0
        %1592 = vmatpush1.msra.mxu0 0.0
        %1593 = vmatprep.subr.mxu0 0.0
        %1594 = vmatpush1.msra.mxu0 0.0
        %1595 = vmatprep.subr.mxu0 0.0
        %1596 = vmatpush1.msra.mxu0 0.0
        %1597 = vmatprep.subr.mxu0 0.0
        %1598 = vmatpush1.msra.mxu0 0.0
        %1599 = vmatprep.subr.mxu0 0.0
        %1600 = vmatpush1.msra.mxu0 0.0
        %1601 = vmatprep.subr.mxu0 0.0
        %1602 = vmatpush1.msra.mxu0 0.0
        %1603 = vmatprep.subr.mxu0 0.0
        %1604 = vmatpush1.msra.mxu0 0.0
        %1605 = vmatprep.subr.mxu0 0.0
        %1606 = vmatpush1.msra.mxu0 0.0
        %1607 = vmatprep.subr.mxu0 0.0
        %1608 = vmatpush1.msra.mxu0 0.0
        %1609 = vmatprep.subr.mxu0 0.0
        %1610 = vmatpush1.msra.mxu0 0.0
        %1611 = vmatprep.subr.mxu0 0.0
        %1612 = vmatpush1.msra.mxu0 0.0
        %1613 = vmatprep.subr.mxu0 0.0
        %1614 = vmatpush1.msra.mxu0 0.0
        %1615 = vmatprep.subr.mxu0 0.0
        %1616 = vmatpush1.msra.mxu0 0.0
        %1617 = vmatprep.subr.mxu0 0.0
        %1618 = vmatpush1.msra.mxu0 0.0
        %1619 = vmatprep.subr.mxu0 0.0
        %1620 = vmatpush1.msra.mxu0 0.0
        %1621 = vmatprep.subr.mxu0 0.0
        %1622 = vmatpush1.msra.mxu0 0.0
        %1623 = vmatprep.subr.mxu0 0.0
        %1624 = vmatpush1.msra.mxu0 0.0
        %1625 = vmatprep.subr.mxu0 0.0
        %1626 = vmatpush1.msra.mxu0 0.0
        %1627 = vmatprep.subr.mxu0 0.0
        %1628 = vmatpush1.msra.mxu0 0.0
        %1629 = vmatprep.mubr.f32.mxu0 0.0
        %1630 = vmatmul.mubr.f32.gmra.mrb[0].mxu0 %v1563
        %v1631 = vpop.f32.mrb[0].mxu0
        %v1632 = vadd.f32 %v591, %v1631
        %v1633 = vpop.f32.mrb[0].mxu0
        %1634 = vdwg.mxu0
        %v1636 = vsel %vm706, %v1342, 0
        %1638 = vmatprep.subr.mxu0 0.0
        %1639 = vmatpush1.msra.mxu0 %v1359
        %1640 = vmatprep.subr.mxu0 0.0
        %1641 = vmatpush1.msra.mxu0 0.0
        %1642 = vmatprep.subr.mxu0 0.0
        %1643 = vmatpush1.msra.mxu0 0.0
        %1644 = vmatprep.subr.mxu0 0.0
        %1645 = vmatpush1.msra.mxu0 0.0
        %1646 = vmatprep.subr.mxu0 0.0
        %1647 = vmatpush1.msra.mxu0 0.0
        %1648 = vmatprep.subr.mxu0 0.0
        %1649 = vmatpush1.msra.mxu0 0.0
        %1650 = vmatprep.subr.mxu0 0.0
        %1651 = vmatpush1.msra.mxu0 0.0
        %1652 = vmatprep.subr.mxu0 0.0
        %1653 = vmatpush1.msra.mxu0 0.0
        %1654 = vmatprep.subr.mxu0 0.0
        %1655 = vmatpush1.msra.mxu0 0.0
        %1656 = vmatprep.subr.mxu0 0.0
        %1657 = vmatpush1.msra.mxu0 0.0
        %1658 = vmatprep.subr.mxu0 0.0
        %1659 = vmatpush1.msra.mxu0 0.0
        %1660 = vmatprep.subr.mxu0 0.0
        %1661 = vmatpush1.msra.mxu0 0.0
        %1662 = vmatprep.subr.mxu0 0.0
        %1663 = vmatpush1.msra.mxu0 0.0
        %1664 = vmatprep.subr.mxu0 0.0
        %1665 = vmatpush1.msra.mxu0 0.0
        %1666 = vmatprep.subr.mxu0 0.0
        %1667 = vmatpush1.msra.mxu0 0.0
        %1668 = vmatprep.subr.mxu0 0.0
        %1669 = vmatpush1.msra.mxu0 0.0
        %1670 = vmatprep.subr.mxu0 0.0
        %1671 = vmatpush1.msra.mxu0 0.0
        %1672 = vmatprep.subr.mxu0 0.0
        %1673 = vmatpush1.msra.mxu0 0.0
        %1674 = vmatprep.subr.mxu0 0.0
        %1675 = vmatpush1.msra.mxu0 0.0
        %1676 = vmatprep.subr.mxu0 0.0
        %1677 = vmatpush1.msra.mxu0 0.0
        %1678 = vmatprep.subr.mxu0 0.0
        %1679 = vmatpush1.msra.mxu0 0.0
        %1680 = vmatprep.subr.mxu0 0.0
        %1681 = vmatpush1.msra.mxu0 0.0
        %1682 = vmatprep.subr.mxu0 0.0
        %1683 = vmatpush1.msra.mxu0 0.0
        %1684 = vmatprep.subr.mxu0 0.0
        %1685 = vmatpush1.msra.mxu0 0.0
        %1686 = vmatprep.subr.mxu0 0.0
        %1687 = vmatpush1.msra.mxu0 0.0
        %1688 = vmatprep.subr.mxu0 0.0
        %1689 = vmatpush1.msra.mxu0 0.0
        %1690 = vmatprep.subr.mxu0 0.0
        %1691 = vmatpush1.msra.mxu0 0.0
        %1692 = vmatprep.subr.mxu0 0.0
        %1693 = vmatpush1.msra.mxu0 0.0
        %1694 = vmatprep.subr.mxu0 0.0
        %1695 = vmatpush1.msra.mxu0 0.0
        %1696 = vmatprep.subr.mxu0 0.0
        %1697 = vmatpush1.msra.mxu0 0.0
        %1698 = vmatprep.subr.mxu0 0.0
        %1699 = vmatpush1.msra.mxu0 0.0
        %1700 = vmatprep.subr.mxu0 0.0
        %1701 = vmatpush1.msra.mxu0 0.0
        %1702 = vmatprep.mubr.f32.mxu0 0.0
        %1703 = vmatmul.mubr.f32.gmra.mrb[0].mxu0 %v1636
        %v1704 = vpop.f32.mrb[0].mxu0
        %v1705 = vadd.f32 %v592, %v1704
        %v1706 = vpop.f32.mrb[0].mxu0
        %1707 = vdwg.mxu0
        %v1709 = vsel %vm706, %v1343, 0
        %1711 = vmatprep.subr.mxu0 0.0
        %1712 = vmatpush1.msra.mxu0 %v1360
        %1713 = vmatprep.subr.mxu0 0.0
        %1714 = vmatpush1.msra.mxu0 0.0
        %1715 = vmatprep.subr.mxu0 0.0
        %1716 = vmatpush1.msra.mxu0 0.0
        %1717 = vmatprep.subr.mxu0 0.0
        %1718 = vmatpush1.msra.mxu0 0.0
        %1719 = vmatprep.subr.mxu0 0.0
        %1720 = vmatpush1.msra.mxu0 0.0
        %1721 = vmatprep.subr.mxu0 0.0
        %1722 = vmatpush1.msra.mxu0 0.0
        %1723 = vmatprep.subr.mxu0 0.0
        %1724 = vmatpush1.msra.mxu0 0.0
        %1725 = vmatprep.subr.mxu0 0.0
        %1726 = vmatpush1.msra.mxu0 0.0
        %1727 = vmatprep.subr.mxu0 0.0
        %1728 = vmatpush1.msra.mxu0 0.0
        %1729 = vmatprep.subr.mxu0 0.0
        %1730 = vmatpush1.msra.mxu0 0.0
        %1731 = vmatprep.subr.mxu0 0.0
        %1732 = vmatpush1.msra.mxu0 0.0
        %1733 = vmatprep.subr.mxu0 0.0
        %1734 = vmatpush1.msra.mxu0 0.0
        %1735 = vmatprep.subr.mxu0 0.0
        %1736 = vmatpush1.msra.mxu0 0.0
        %1737 = vmatprep.subr.mxu0 0.0
        %1738 = vmatpush1.msra.mxu0 0.0
        %1739 = vmatprep.subr.mxu0 0.0
        %1740 = vmatpush1.msra.mxu0 0.0
        %1741 = vmatprep.subr.mxu0 0.0
        %1742 = vmatpush1.msra.mxu0 0.0
        %1743 = vmatprep.subr.mxu0 0.0
        %1744 = vmatpush1.msra.mxu0 0.0
        %1745 = vmatprep.subr.mxu0 0.0
        %1746 = vmatpush1.msra.mxu0 0.0
        %1747 = vmatprep.subr.mxu0 0.0
        %1748 = vmatpush1.msra.mxu0 0.0
        %1749 = vmatprep.subr.mxu0 0.0
        %1750 = vmatpush1.msra.mxu0 0.0
        %1751 = vmatprep.subr.mxu0 0.0
        %1752 = vmatpush1.msra.mxu0 0.0
        %1753 = vmatprep.subr.mxu0 0.0
        %1754 = vmatpush1.msra.mxu0 0.0
        %1755 = vmatprep.subr.mxu0 0.0
        %1756 = vmatpush1.msra.mxu0 0.0
        %1757 = vmatprep.subr.mxu0 0.0
        %1758 = vmatpush1.msra.mxu0 0.0
        %1759 = vmatprep.subr.mxu0 0.0
        %1760 = vmatpush1.msra.mxu0 0.0
        %1761 = vmatprep.subr.mxu0 0.0
        %1762 = vmatpush1.msra.mxu0 0.0
        %1763 = vmatprep.subr.mxu0 0.0
        %1764 = vmatpush1.msra.mxu0 0.0
        %1765 = vmatprep.subr.mxu0 0.0
        %1766 = vmatpush1.msra.mxu0 0.0
        %1767 = vmatprep.subr.mxu0 0.0
        %1768 = vmatpush1.msra.mxu0 0.0
        %1769 = vmatprep.subr.mxu0 0.0
        %1770 = vmatpush1.msra.mxu0 0.0
        %1771 = vmatprep.subr.mxu0 0.0
        %1772 = vmatpush1.msra.mxu0 0.0
        %1773 = vmatprep.subr.mxu0 0.0
        %1774 = vmatpush1.msra.mxu0 0.0
        %1775 = vmatprep.mubr.f32.mxu0 0.0
        %1776 = vmatmul.mubr.f32.gmra.mrb[0].mxu0 %v1709
        %v1777 = vpop.f32.mrb[0].mxu0
        %v1778 = vadd.f32 %v593, %v1777
        %v1779 = vpop.f32.mrb[0].mxu0
        %1780 = vdwg.mxu0
        %v1782 = vsel %vm706, %v1344, 0
        %1784 = vmatprep.subr.mxu0 0.0
        %1785 = vmatpush1.msra.mxu0 %v1361
        %1786 = vmatprep.subr.mxu0 0.0
        %1787 = vmatpush1.msra.mxu0 0.0
        %1788 = vmatprep.subr.mxu0 0.0
        %1789 = vmatpush1.msra.mxu0 0.0
        %1790 = vmatprep.subr.mxu0 0.0
        %1791 = vmatpush1.msra.mxu0 0.0
        %1792 = vmatprep.subr.mxu0 0.0
        %1793 = vmatpush1.msra.mxu0 0.0
        %1794 = vmatprep.subr.mxu0 0.0
        %1795 = vmatpush1.msra.mxu0 0.0
        %1796 = vmatprep.subr.mxu0 0.0
        %1797 = vmatpush1.msra.mxu0 0.0
        %1798 = vmatprep.subr.mxu0 0.0
        %1799 = vmatpush1.msra.mxu0 0.0
        %1800 = vmatprep.subr.mxu0 0.0
        %1801 = vmatpush1.msra.mxu0 0.0
        %1802 = vmatprep.subr.mxu0 0.0
        %1803 = vmatpush1.msra.mxu0 0.0
        %1804 = vmatprep.subr.mxu0 0.0
        %1805 = vmatpush1.msra.mxu0 0.0
        %1806 = vmatprep.subr.mxu0 0.0
        %1807 = vmatpush1.msra.mxu0 0.0
        %1808 = vmatprep.subr.mxu0 0.0
        %1809 = vmatpush1.msra.mxu0 0.0
        %1810 = vmatprep.subr.mxu0 0.0
        %1811 = vmatpush1.msra.mxu0 0.0
        %1812 = vmatprep.subr.mxu0 0.0
        %1813 = vmatpush1.msra.mxu0 0.0
        %1814 = vmatprep.subr.mxu0 0.0
        %1815 = vmatpush1.msra.mxu0 0.0
        %1816 = vmatprep.subr.mxu0 0.0
        %1817 = vmatpush1.msra.mxu0 0.0
        %1818 = vmatprep.subr.mxu0 0.0
        %1819 = vmatpush1.msra.mxu0 0.0
        %1820 = vmatprep.subr.mxu0 0.0
        %1821 = vmatpush1.msra.mxu0 0.0
        %1822 = vmatprep.subr.mxu0 0.0
        %1823 = vmatpush1.msra.mxu0 0.0
        %1824 = vmatprep.subr.mxu0 0.0
        %1825 = vmatpush1.msra.mxu0 0.0
        %1826 = vmatprep.subr.mxu0 0.0
        %1827 = vmatpush1.msra.mxu0 0.0
        %1828 = vmatprep.subr.mxu0 0.0
        %1829 = vmatpush1.msra.mxu0 0.0
        %1830 = vmatprep.subr.mxu0 0.0
        %1831 = vmatpush1.msra.mxu0 0.0
        %1832 = vmatprep.subr.mxu0 0.0
        %1833 = vmatpush1.msra.mxu0 0.0
        %1834 = vmatprep.subr.mxu0 0.0
        %1835 = vmatpush1.msra.mxu0 0.0
        %1836 = vmatprep.subr.mxu0 0.0
        %1837 = vmatpush1.msra.mxu0 0.0
        %1838 = vmatprep.subr.mxu0 0.0
        %1839 = vmatpush1.msra.mxu0 0.0
        %1840 = vmatprep.subr.mxu0 0.0
        %1841 = vmatpush1.msra.mxu0 0.0
        %1842 = vmatprep.subr.mxu0 0.0
        %1843 = vmatpush1.msra.mxu0 0.0
        %1844 = vmatprep.subr.mxu0 0.0
        %1845 = vmatpush1.msra.mxu0 0.0
        %1846 = vmatprep.subr.mxu0 0.0
        %1847 = vmatpush1.msra.mxu0 0.0
        %1848 = vmatprep.mubr.f32.mxu0 0.0
        %1849 = vmatmul.mubr.f32.gmra.mrb[0].mxu0 %v1782
        %v1850 = vpop.f32.mrb[0].mxu0
        %v1851 = vadd.f32 %v594, %v1850
        %v1852 = vpop.f32.mrb[0].mxu0
        %1853 = vdwg.mxu0
        %v1855 = vsel %vm706, %v1345, 0
        %1857 = vmatprep.subr.mxu0 0.0
        %1858 = vmatpush1.msra.mxu0 %v1362
        %1859 = vmatprep.subr.mxu0 0.0
        %1860 = vmatpush1.msra.mxu0 0.0
        %1861 = vmatprep.subr.mxu0 0.0
        %1862 = vmatpush1.msra.mxu0 0.0
        %1863 = vmatprep.subr.mxu0 0.0
        %1864 = vmatpush1.msra.mxu0 0.0
        %1865 = vmatprep.subr.mxu0 0.0
        %1866 = vmatpush1.msra.mxu0 0.0
        %1867 = vmatprep.subr.mxu0 0.0
        %1868 = vmatpush1.msra.mxu0 0.0
        %1869 = vmatprep.subr.mxu0 0.0
        %1870 = vmatpush1.msra.mxu0 0.0
        %1871 = vmatprep.subr.mxu0 0.0
        %1872 = vmatpush1.msra.mxu0 0.0
        %1873 = vmatprep.subr.mxu0 0.0
        %1874 = vmatpush1.msra.mxu0 0.0
        %1875 = vmatprep.subr.mxu0 0.0
        %1876 = vmatpush1.msra.mxu0 0.0
        %1877 = vmatprep.subr.mxu0 0.0
        %1878 = vmatpush1.msra.mxu0 0.0
        %1879 = vmatprep.subr.mxu0 0.0
        %1880 = vmatpush1.msra.mxu0 0.0
        %1881 = vmatprep.subr.mxu0 0.0
        %1882 = vmatpush1.msra.mxu0 0.0
        %1883 = vmatprep.subr.mxu0 0.0
        %1884 = vmatpush1.msra.mxu0 0.0
        %1885 = vmatprep.subr.mxu0 0.0
        %1886 = vmatpush1.msra.mxu0 0.0
        %1887 = vmatprep.subr.mxu0 0.0
        %1888 = vmatpush1.msra.mxu0 0.0
        %1889 = vmatprep.subr.mxu0 0.0
        %1890 = vmatpush1.msra.mxu0 0.0
        %1891 = vmatprep.subr.mxu0 0.0
        %1892 = vmatpush1.msra.mxu0 0.0
        %1893 = vmatprep.subr.mxu0 0.0
        %1894 = vmatpush1.msra.mxu0 0.0
        %1895 = vmatprep.subr.mxu0 0.0
        %1896 = vmatpush1.msra.mxu0 0.0
        %1897 = vmatprep.subr.mxu0 0.0
        %1898 = vmatpush1.msra.mxu0 0.0
        %1899 = vmatprep.subr.mxu0 0.0
        %1900 = vmatpush1.msra.mxu0 0.0
        %1901 = vmatprep.subr.mxu0 0.0
        %1902 = vmatpush1.msra.mxu0 0.0
        %1903 = vmatprep.subr.mxu0 0.0
        %1904 = vmatpush1.msra.mxu0 0.0
        %1905 = vmatprep.subr.mxu0 0.0
        %1906 = vmatpush1.msra.mxu0 0.0
        %1907 = vmatprep.subr.mxu0 0.0
        %1908 = vmatpush1.msra.mxu0 0.0
        %1909 = vmatprep.subr.mxu0 0.0
        %1910 = vmatpush1.msra.mxu0 0.0
        %1911 = vmatprep.subr.mxu0 0.0
        %1912 = vmatpush1.msra.mxu0 0.0
        %1913 = vmatprep.subr.mxu0 0.0
        %1914 = vmatpush1.msra.mxu0 0.0
        %1915 = vmatprep.subr.mxu0 0.0
        %1916 = vmatpush1.msra.mxu0 0.0
        %1917 = vmatprep.subr.mxu0 0.0
        %1918 = vmatpush1.msra.mxu0 0.0
        %1919 = vmatprep.subr.mxu0 0.0
        %1920 = vmatpush1.msra.mxu0 0.0
        %1921 = vmatprep.mubr.f32.mxu0 0.0
        %1922 = vmatmul.mubr.f32.gmra.mrb[0].mxu0 %v1855
        %v1923 = vpop.f32.mrb[0].mxu0
        %v1924 = vadd.f32 %v595, %v1923
        %v1925 = vpop.f32.mrb[0].mxu0
        %1926 = vdwg.mxu0
        %v1928 = vsel %vm706, %v1346, 0
        %1930 = vmatprep.subr.mxu0 0.0
        %1931 = vmatpush1.msra.mxu0 %v1363
        %1932 = vmatprep.subr.mxu0 0.0
        %1933 = vmatpush1.msra.mxu0 0.0
        %1934 = vmatprep.subr.mxu0 0.0
        %1935 = vmatpush1.msra.mxu0 0.0
        %1936 = vmatprep.subr.mxu0 0.0
        %1937 = vmatpush1.msra.mxu0 0.0
        %1938 = vmatprep.subr.mxu0 0.0
        %1939 = vmatpush1.msra.mxu0 0.0
        %1940 = vmatprep.subr.mxu0 0.0
        %1941 = vmatpush1.msra.mxu0 0.0
        %1942 = vmatprep.subr.mxu0 0.0
        %1943 = vmatpush1.msra.mxu0 0.0
        %1944 = vmatprep.subr.mxu0 0.0
        %1945 = vmatpush1.msra.mxu0 0.0
        %1946 = vmatprep.subr.mxu0 0.0
        %1947 = vmatpush1.msra.mxu0 0.0
        %1948 = vmatprep.subr.mxu0 0.0
        %1949 = vmatpush1.msra.mxu0 0.0
        %1950 = vmatprep.subr.mxu0 0.0
        %1951 = vmatpush1.msra.mxu0 0.0
        %1952 = vmatprep.subr.mxu0 0.0
        %1953 = vmatpush1.msra.mxu0 0.0
        %1954 = vmatprep.subr.mxu0 0.0
        %1955 = vmatpush1.msra.mxu0 0.0
        %1956 = vmatprep.subr.mxu0 0.0
        %1957 = vmatpush1.msra.mxu0 0.0
        %1958 = vmatprep.subr.mxu0 0.0
        %1959 = vmatpush1.msra.mxu0 0.0
        %1960 = vmatprep.subr.mxu0 0.0
        %1961 = vmatpush1.msra.mxu0 0.0
        %1962 = vmatprep.subr.mxu0 0.0
        %1963 = vmatpush1.msra.mxu0 0.0
        %1964 = vmatprep.subr.mxu0 0.0
        %1965 = vmatpush1.msra.mxu0 0.0
        %1966 = vmatprep.subr.mxu0 0.0
        %1967 = vmatpush1.msra.mxu0 0.0
        %1968 = vmatprep.subr.mxu0 0.0
        %1969 = vmatpush1.msra.mxu0 0.0
        %1970 = vmatprep.subr.mxu0 0.0
        %1971 = vmatpush1.msra.mxu0 0.0
        %1972 = vmatprep.subr.mxu0 0.0
        %1973 = vmatpush1.msra.mxu0 0.0
        %1974 = vmatprep.subr.mxu0 0.0
        %1975 = vmatpush1.msra.mxu0 0.0
        %1976 = vmatprep.subr.mxu0 0.0
        %1977 = vmatpush1.msra.mxu0 0.0
        %1978 = vmatprep.subr.mxu0 0.0
        %1979 = vmatpush1.msra.mxu0 0.0
        %1980 = vmatprep.subr.mxu0 0.0
        %1981 = vmatpush1.msra.mxu0 0.0
        %1982 = vmatprep.subr.mxu0 0.0
        %1983 = vmatpush1.msra.mxu0 0.0
        %1984 = vmatprep.subr.mxu0 0.0
        %1985 = vmatpush1.msra.mxu0 0.0
        %1986 = vmatprep.subr.mxu0 0.0
        %1987 = vmatpush1.msra.mxu0 0.0
        %1988 = vmatprep.subr.mxu0 0.0
        %1989 = vmatpush1.msra.mxu0 0.0
        %1990 = vmatprep.subr.mxu0 0.0
        %1991 = vmatpush1.msra.mxu0 0.0
        %1992 = vmatprep.subr.mxu0 0.0
        %1993 = vmatpush1.msra.mxu0 0.0
        %1994 = vmatprep.mubr.f32.mxu0 0.0
        %1995 = vmatmul.mubr.f32.gmra.mrb[0].mxu0 %v1928
        %v1996 = vpop.f32.mrb[0].mxu0
        %v1997 = vadd.f32 %v596, %v1996
        %v1998 = vpop.f32.mrb[0].mxu0
        %1999 = vdwg.mxu0
        %v2000 = vsub.f32 %v1486, %v1339
        %v2001 = vsub.f32 %v1559, %v1340
        %v2002 = vsub.f32 %v1632, %v1341
        %v2003 = vsub.f32 %v1705, %v1342
        %v2004 = vsub.f32 %v1778, %v1343
        %v2005 = vsub.f32 %v1851, %v1344
        %v2006 = vsub.f32 %v1924, %v1345
        %v2007 = vsub.f32 %v1997, %v1346
        %v2008 = vlaneseq
        %v2009 = vshrl.u32 %v2008, 7
        %v2010 = vsub.s32 0, %v2009
        %v2011 = vrot.slane %v1390, %v2010
        %v2012 = vlaneseq
        %v2013 = vshrl.u32 %v2012, 7
        %v2014 = vsub.s32 0, %v2013
        %v2015 = vrot.slane %v1404, %v2014
        %v2016 = vlaneseq
        %v2017 = vshrl.u32 %v2016, 7
        %v2018 = vsub.s32 0, %v2017
        %v2019 = vrot.slane %v1412, %v2018
        %v2020 = vlaneseq
        %v2021 = vshrl.u32 %v2020, 7
        %v2022 = vsub.s32 0, %v2021
        %v2023 = vrot.slane %v1414, %v2022
        %v2024 = vlaneseq
        %v2025 = vshrl.u32 %v2024, 7
        %v2026 = vsub.s32 0, %v2025
        %v2027 = vrot.slane %v1397, %v2026
        %v2028 = vlaneseq
        %v2029 = vshrl.u32 %v2028, 7
        %v2030 = vsub.s32 0, %v2029
        %v2031 = vrot.slane %v1411, %v2030
        %v2032 = vlaneseq
        %v2033 = vshrl.u32 %v2032, 7
        %v2034 = vsub.s32 0, %v2033
        %v2035 = vrot.slane %v1413, %v2034
        %v2036 = vlaneseq
        %v2037 = vshrl.u32 %v2036, 7
        %v2038 = vsub.s32 0, %v2037
        %v2039 = vrot.slane %v1415, %v2038
        %v2048 = vmul.f32 %v2011, %v2000
        %v2049 = vmul.f32 %v2015, %v2001
        %v2050 = vmul.f32 %v2019, %v2002
        %v2051 = vmul.f32 %v2023, %v2003
        %v2052 = vmul.f32 %v2027, %v2004
        %v2053 = vmul.f32 %v2031, %v2005
        %v2054 = vmul.f32 %v2035, %v2006
        %v2055 = vmul.f32 %v2039, %v2007
        %v2056 = vadd.f32 %v1339, %v2048
        %v2057 = vadd.f32 %v1340, %v2049
        %v2058 = vadd.f32 %v1341, %v2050
        %v2059 = vadd.f32 %v1342, %v2051
        %v2060 = vadd.f32 %v1343, %v2052
        %v2061 = vadd.f32 %v1344, %v2053
        %v2062 = vadd.f32 %v1345, %v2054
        %v2063 = vadd.f32 %v1346, %v2055
        %s2064 = scalar_lea.vmem %s511, 96 [#allocation3]
        %v2065 = vld [vmem:[%s2064] sm:$0xf]
        %v2066 = vld [vmem:[%s2064 + $0x4] sm:$0xf]
        %v2067 = vld [vmem:[%s2064 + $0x8] sm:$0xf]
        %v2068 = vld [vmem:[%s2064 + $0xc] sm:$0xf]
        %v2069 = vld [vmem:[%s2064 + $0x10] sm:$0xf]
        %v2070 = vld [vmem:[%s2064 + $0x14] sm:$0xf]
        %v2071 = vld [vmem:[%s2064 + $0x18] sm:$0xf]
        %v2072 = vld [vmem:[%s2064 + $0x1c] sm:$0xf]
        %v2073 = vunpack.c.l.bf16 %v2065
        %v2074 = vunpack.c.l.bf16 %v2066
        %v2075 = vunpack.c.l.bf16 %v2067
        %v2076 = vunpack.c.l.bf16 %v2068
        %v2077 = vunpack.c.l.bf16 %v2069
        %v2078 = vunpack.c.l.bf16 %v2070
        %v2079 = vunpack.c.l.bf16 %v2071
        %v2080 = vunpack.c.l.bf16 %v2072
        %s2081 = scalar_lea.vmem %s504, 24 [#allocation2]
        %v2082 = vld [vmem:[%s2081] sm:$0xff]
        %v2084 = vcombine.high %v2082, %v2082
        %v2086 = vunpack.c.l.s4 1966171168
        %v2087 = vunpack.c.0.s8 %v2086
        %v2088 = vlaneseq
        %v2089 = vshrl.u32 %v2088, 7
        %v2090 = vsub.s32 %v2087, %v2089
        %v2091 = vrot.slane %v2082, %v2090
        %v2093 = vunpack.c.l.s4 1966171168
        %v2094 = vunpack.c.0.s8 %v2093
        %v2095 = vlaneseq
        %v2096 = vshrl.u32 %v2095, 7
        %v2097 = vsub.s32 %v2094, %v2096
        %v2098 = vrot.slane %v2084, %v2097
        %v2099 = vcombine.high %v2091, %v2091
        %v2100 = vcombine.high %v2098, %v2098
        %v2102 = vunpack.c.l.s4 1966171168
        %v2103 = vunpack.c.0.s8 %v2102
        %v2104 = vlaneseq
        %v2105 = vshrl.u32 %v2104, 7
        %v2106 = vsub.s32 %v2103, %v2105
        %v2107 = vrot.slane %v2091, %v2106
        %v2109 = vunpack.c.l.s4 1966171168
        %v2110 = vunpack.c.0.s8 %v2109
        %v2111 = vlaneseq
        %v2112 = vshrl.u32 %v2111, 7
        %v2113 = vsub.s32 %v2110, %v2112
        %v2114 = vrot.slane %v2098, %v2113
        %v2116 = vunpack.c.l.s4 1966171168
        %v2117 = vunpack.c.0.s8 %v2116
        %v2118 = vlaneseq
        %v2119 = vshrl.u32 %v2118, 7
        %v2120 = vsub.s32 %v2117, %v2119
        %v2121 = vrot.slane %v2099, %v2120
        %v2123 = vunpack.c.l.s4 1966171168
        %v2124 = vunpack.c.0.s8 %v2123
        %v2125 = vlaneseq
        %v2126 = vshrl.u32 %v2125, 7
        %v2127 = vsub.s32 %v2124, %v2126
        %v2128 = vrot.slane %v2100, %v2127
        %v2129 = vcombine.high %v2107, %v2107
        %v2130 = vcombine.high %v2114, %v2114
        %v2131 = vcombine.high %v2121, %v2121
        %v2132 = vcombine.high %v2128, %v2128
        %v2134 = vsel %vm706, %v2056, 0
        %2136 = vmatprep.subr.mxu0 0.0
        %2137 = vmatpush1.msra.mxu0 %v2073
        %2138 = vmatprep.subr.mxu0 0.0
        %2139 = vmatpush1.msra.mxu0 0.0
        %2140 = vmatprep.subr.mxu0 0.0
        %2141 = vmatpush1.msra.mxu0 0.0
        %2142 = vmatprep.subr.mxu0 0.0
        %2143 = vmatpush1.msra.mxu0 0.0
        %2144 = vmatprep.subr.mxu0 0.0
        %2145 = vmatpush1.msra.mxu0 0.0
        %2146 = vmatprep.subr.mxu0 0.0
        %2147 = vmatpush1.msra.mxu0 0.0
        %2148 = vmatprep.subr.mxu0 0.0
        %2149 = vmatpush1.msra.mxu0 0.0
        %2150 = vmatprep.subr.mxu0 0.0
        %2151 = vmatpush1.msra.mxu0 0.0
        %2152 = vmatprep.subr.mxu0 0.0
        %2153 = vmatpush1.msra.mxu0 0.0
        %2154 = vmatprep.subr.mxu0 0.0
        %2155 = vmatpush1.msra.mxu0 0.0
        %2156 = vmatprep.subr.mxu0 0.0
        %2157 = vmatpush1.msra.mxu0 0.0
        %2158 = vmatprep.subr.mxu0 0.0
        %2159 = vmatpush1.msra.mxu0 0.0
        %2160 = vmatprep.subr.mxu0 0.0
        %2161 = vmatpush1.msra.mxu0 0.0
        %2162 = vmatprep.subr.mxu0 0.0
        %2163 = vmatpush1.msra.mxu0 0.0
        %2164 = vmatprep.subr.mxu0 0.0
        %2165 = vmatpush1.msra.mxu0 0.0
        %2166 = vmatprep.subr.mxu0 0.0
        %2167 = vmatpush1.msra.mxu0 0.0
        %2168 = vmatprep.subr.mxu0 0.0
        %2169 = vmatpush1.msra.mxu0 0.0
        %2170 = vmatprep.subr.mxu0 0.0
        %2171 = vmatpush1.msra.mxu0 0.0
        %2172 = vmatprep.subr.mxu0 0.0
        %2173 = vmatpush1.msra.mxu0 0.0
        %2174 = vmatprep.subr.mxu0 0.0
        %2175 = vmatpush1.msra.mxu0 0.0
        %2176 = vmatprep.subr.mxu0 0.0
        %2177 = vmatpush1.msra.mxu0 0.0
        %2178 = vmatprep.subr.mxu0 0.0
        %2179 = vmatpush1.msra.mxu0 0.0
        %2180 = vmatprep.subr.mxu0 0.0
        %2181 = vmatpush1.msra.mxu0 0.0
        %2182 = vmatprep.subr.mxu0 0.0
        %2183 = vmatpush1.msra.mxu0 0.0
        %2184 = vmatprep.subr.mxu0 0.0
        %2185 = vmatpush1.msra.mxu0 0.0
        %2186 = vmatprep.subr.mxu0 0.0
        %2187 = vmatpush1.msra.mxu0 0.0
        %2188 = vmatprep.subr.mxu0 0.0
        %2189 = vmatpush1.msra.mxu0 0.0
        %2190 = vmatprep.subr.mxu0 0.0
        %2191 = vmatpush1.msra.mxu0 0.0
        %2192 = vmatprep.subr.mxu0 0.0
        %2193 = vmatpush1.msra.mxu0 0.0
        %2194 = vmatprep.subr.mxu0 0.0
        %2195 = vmatpush1.msra.mxu0 0.0
        %2196 = vmatprep.subr.mxu0 0.0
        %2197 = vmatpush1.msra.mxu0 0.0
        %2198 = vmatprep.subr.mxu0 0.0
        %2199 = vmatpush1.msra.mxu0 0.0
        %2200 = vmatprep.mubr.f32.mxu0 0.0
        %2201 = vmatmul.mubr.f32.gmra.mrb[0].mxu0 %v2134
        %v2202 = vpop.f32.mrb[0].mxu0
        %v2203 = vadd.f32 %v589, %v2202
        %v2204 = vpop.f32.mrb[0].mxu0
        %2205 = vdwg.mxu0
        %v2207 = vsel %vm706, %v2057, 0
        %2209 = vmatprep.subr.mxu0 0.0
        %2210 = vmatpush1.msra.mxu0 %v2074
        %2211 = vmatprep.subr.mxu0 0.0
        %2212 = vmatpush1.msra.mxu0 0.0
        %2213 = vmatprep.subr.mxu0 0.0
        %2214 = vmatpush1.msra.mxu0 0.0
        %2215 = vmatprep.subr.mxu0 0.0
        %2216 = vmatpush1.msra.mxu0 0.0
        %2217 = vmatprep.subr.mxu0 0.0
        %2218 = vmatpush1.msra.mxu0 0.0
        %2219 = vmatprep.subr.mxu0 0.0
        %2220 = vmatpush1.msra.mxu0 0.0
        %2221 = vmatprep.subr.mxu0 0.0
        %2222 = vmatpush1.msra.mxu0 0.0
        %2223 = vmatprep.subr.mxu0 0.0
        %2224 = vmatpush1.msra.mxu0 0.0
        %2225 = vmatprep.subr.mxu0 0.0
        %2226 = vmatpush1.msra.mxu0 0.0
        %2227 = vmatprep.subr.mxu0 0.0
        %2228 = vmatpush1.msra.mxu0 0.0
        %2229 = vmatprep.subr.mxu0 0.0
        %2230 = vmatpush1.msra.mxu0 0.0
        %2231 = vmatprep.subr.mxu0 0.0
        %2232 = vmatpush1.msra.mxu0 0.0
        %2233 = vmatprep.subr.mxu0 0.0
        %2234 = vmatpush1.msra.mxu0 0.0
        %2235 = vmatprep.subr.mxu0 0.0
        %2236 = vmatpush1.msra.mxu0 0.0
        %2237 = vmatprep.subr.mxu0 0.0
        %2238 = vmatpush1.msra.mxu0 0.0
        %2239 = vmatprep.subr.mxu0 0.0
        %2240 = vmatpush1.msra.mxu0 0.0
        %2241 = vmatprep.subr.mxu0 0.0
        %2242 = vmatpush1.msra.mxu0 0.0
        %2243 = vmatprep.subr.mxu0 0.0
        %2244 = vmatpush1.msra.mxu0 0.0
        %2245 = vmatprep.subr.mxu0 0.0
        %2246 = vmatpush1.msra.mxu0 0.0
        %2247 = vmatprep.subr.mxu0 0.0
        %2248 = vmatpush1.msra.mxu0 0.0
        %2249 = vmatprep.subr.mxu0 0.0
        %2250 = vmatpush1.msra.mxu0 0.0
        %2251 = vmatprep.subr.mxu0 0.0
        %2252 = vmatpush1.msra.mxu0 0.0
        %2253 = vmatprep.subr.mxu0 0.0
        %2254 = vmatpush1.msra.mxu0 0.0
        %2255 = vmatprep.subr.mxu0 0.0
        %2256 = vmatpush1.msra.mxu0 0.0
        %2257 = vmatprep.subr.mxu0 0.0
        %2258 = vmatpush1.msra.mxu0 0.0
        %2259 = vmatprep.subr.mxu0 0.0
        %2260 = vmatpush1.msra.mxu0 0.0
        %2261 = vmatprep.subr.mxu0 0.0
        %2262 = vmatpush1.msra.mxu0 0.0
        %2263 = vmatprep.subr.mxu0 0.0
        %2264 = vmatpush1.msra.mxu0 0.0
        %2265 = vmatprep.subr.mxu0 0.0
        %2266 = vmatpush1.msra.mxu0 0.0
        %2267 = vmatprep.subr.mxu0 0.0
        %2268 = vmatpush1.msra.mxu0 0.0
        %2269 = vmatprep.subr.mxu0 0.0
        %2270 = vmatpush1.msra.mxu0 0.0
        %2271 = vmatprep.subr.mxu0 0.0
        %2272 = vmatpush1.msra.mxu0 0.0
        %2273 = vmatprep.mubr.f32.mxu0 0.0
        %2274 = vmatmul.mubr.f32.gmra.mrb[0].mxu0 %v2207
        %v2275 = vpop.f32.mrb[0].mxu0
        %v2276 = vadd.f32 %v590, %v2275
        %v2277 = vpop.f32.mrb[0].mxu0
        %2278 = vdwg.mxu0
        %v2280 = vsel %vm706, %v2058, 0
        %2282 = vmatprep.subr.mxu0 0.0
        %2283 = vmatpush1.msra.mxu0 %v2075
        %2284 = vmatprep.subr.mxu0 0.0
        %2285 = vmatpush1.msra.mxu0 0.0
        %2286 = vmatprep.subr.mxu0 0.0
        %2287 = vmatpush1.msra.mxu0 0.0
        %2288 = vmatprep.subr.mxu0 0.0
        %2289 = vmatpush1.msra.mxu0 0.0
        %2290 = vmatprep.subr.mxu0 0.0
        %2291 = vmatpush1.msra.mxu0 0.0
        %2292 = vmatprep.subr.mxu0 0.0
        %2293 = vmatpush1.msra.mxu0 0.0
        %2294 = vmatprep.subr.mxu0 0.0
        %2295 = vmatpush1.msra.mxu0 0.0
        %2296 = vmatprep.subr.mxu0 0.0
        %2297 = vmatpush1.msra.mxu0 0.0
        %2298 = vmatprep.subr.mxu0 0.0
        %2299 = vmatpush1.msra.mxu0 0.0
        %2300 = vmatprep.subr.mxu0 0.0
        %2301 = vmatpush1.msra.mxu0 0.0
        %2302 = vmatprep.subr.mxu0 0.0
        %2303 = vmatpush1.msra.mxu0 0.0
        %2304 = vmatprep.subr.mxu0 0.0
        %2305 = vmatpush1.msra.mxu0 0.0
        %2306 = vmatprep.subr.mxu0 0.0
        %2307 = vmatpush1.msra.mxu0 0.0
        %2308 = vmatprep.subr.mxu0 0.0
        %2309 = vmatpush1.msra.mxu0 0.0
        %2310 = vmatprep.subr.mxu0 0.0
        %2311 = vmatpush1.msra.mxu0 0.0
        %2312 = vmatprep.subr.mxu0 0.0
        %2313 = vmatpush1.msra.mxu0 0.0
        %2314 = vmatprep.subr.mxu0 0.0
        %2315 = vmatpush1.msra.mxu0 0.0
        %2316 = vmatprep.subr.mxu0 0.0
        %2317 = vmatpush1.msra.mxu0 0.0
        %2318 = vmatprep.subr.mxu0 0.0
        %2319 = vmatpush1.msra.mxu0 0.0
        %2320 = vmatprep.subr.mxu0 0.0
        %2321 = vmatpush1.msra.mxu0 0.0
        %2322 = vmatprep.subr.mxu0 0.0
        %2323 = vmatpush1.msra.mxu0 0.0
        %2324 = vmatprep.subr.mxu0 0.0
        %2325 = vmatpush1.msra.mxu0 0.0
        %2326 = vmatprep.subr.mxu0 0.0
        %2327 = vmatpush1.msra.mxu0 0.0
        %2328 = vmatprep.subr.mxu0 0.0
        %2329 = vmatpush1.msra.mxu0 0.0
        %2330 = vmatprep.subr.mxu0 0.0
        %2331 = vmatpush1.msra.mxu0 0.0
        %2332 = vmatprep.subr.mxu0 0.0
        %2333 = vmatpush1.msra.mxu0 0.0
        %2334 = vmatprep.subr.mxu0 0.0
        %2335 = vmatpush1.msra.mxu0 0.0
        %2336 = vmatprep.subr.mxu0 0.0
        %2337 = vmatpush1.msra.mxu0 0.0
        %2338 = vmatprep.subr.mxu0 0.0
        %2339 = vmatpush1.msra.mxu0 0.0
        %2340 = vmatprep.subr.mxu0 0.0
        %2341 = vmatpush1.msra.mxu0 0.0
        %2342 = vmatprep.subr.mxu0 0.0
        %2343 = vmatpush1.msra.mxu0 0.0
        %2344 = vmatprep.subr.mxu0 0.0
        %2345 = vmatpush1.msra.mxu0 0.0
        %2346 = vmatprep.mubr.f32.mxu0 0.0
        %2347 = vmatmul.mubr.f32.gmra.mrb[0].mxu0 %v2280
        %v2348 = vpop.f32.mrb[0].mxu0
        %v2349 = vadd.f32 %v591, %v2348
        %v2350 = vpop.f32.mrb[0].mxu0
        %2351 = vdwg.mxu0
        %v2353 = vsel %vm706, %v2059, 0
        %2355 = vmatprep.subr.mxu0 0.0
        %2356 = vmatpush1.msra.mxu0 %v2076
        %2357 = vmatprep.subr.mxu0 0.0
        %2358 = vmatpush1.msra.mxu0 0.0
        %2359 = vmatprep.subr.mxu0 0.0
        %2360 = vmatpush1.msra.mxu0 0.0
        %2361 = vmatprep.subr.mxu0 0.0
        %2362 = vmatpush1.msra.mxu0 0.0
        %2363 = vmatprep.subr.mxu0 0.0
        %2364 = vmatpush1.msra.mxu0 0.0
        %2365 = vmatprep.subr.mxu0 0.0
        %2366 = vmatpush1.msra.mxu0 0.0
        %2367 = vmatprep.subr.mxu0 0.0
        %2368 = vmatpush1.msra.mxu0 0.0
        %2369 = vmatprep.subr.mxu0 0.0
        %2370 = vmatpush1.msra.mxu0 0.0
        %2371 = vmatprep.subr.mxu0 0.0
        %2372 = vmatpush1.msra.mxu0 0.0
        %2373 = vmatprep.subr.mxu0 0.0
        %2374 = vmatpush1.msra.mxu0 0.0
        %2375 = vmatprep.subr.mxu0 0.0
        %2376 = vmatpush1.msra.mxu0 0.0
        %2377 = vmatprep.subr.mxu0 0.0
        %2378 = vmatpush1.msra.mxu0 0.0
        %2379 = vmatprep.subr.mxu0 0.0
        %2380 = vmatpush1.msra.mxu0 0.0
        %2381 = vmatprep.subr.mxu0 0.0
        %2382 = vmatpush1.msra.mxu0 0.0
        %2383 = vmatprep.subr.mxu0 0.0
        %2384 = vmatpush1.msra.mxu0 0.0
        %2385 = vmatprep.subr.mxu0 0.0
        %2386 = vmatpush1.msra.mxu0 0.0
        %2387 = vmatprep.subr.mxu0 0.0
        %2388 = vmatpush1.msra.mxu0 0.0
        %2389 = vmatprep.subr.mxu0 0.0
        %2390 = vmatpush1.msra.mxu0 0.0
        %2391 = vmatprep.subr.mxu0 0.0
        %2392 = vmatpush1.msra.mxu0 0.0
        %2393 = vmatprep.subr.mxu0 0.0
        %2394 = vmatpush1.msra.mxu0 0.0
        %2395 = vmatprep.subr.mxu0 0.0
        %2396 = vmatpush1.msra.mxu0 0.0
        %2397 = vmatprep.subr.mxu0 0.0
        %2398 = vmatpush1.msra.mxu0 0.0
        %2399 = vmatprep.subr.mxu0 0.0
        %2400 = vmatpush1.msra.mxu0 0.0
        %2401 = vmatprep.subr.mxu0 0.0
        %2402 = vmatpush1.msra.mxu0 0.0
        %2403 = vmatprep.subr.mxu0 0.0
        %2404 = vmatpush1.msra.mxu0 0.0
        %2405 = vmatprep.subr.mxu0 0.0
        %2406 = vmatpush1.msra.mxu0 0.0
        %2407 = vmatprep.subr.mxu0 0.0
        %2408 = vmatpush1.msra.mxu0 0.0
        %2409 = vmatprep.subr.mxu0 0.0
        %2410 = vmatpush1.msra.mxu0 0.0
        %2411 = vmatprep.subr.mxu0 0.0
        %2412 = vmatpush1.msra.mxu0 0.0
        %2413 = vmatprep.subr.mxu0 0.0
        %2414 = vmatpush1.msra.mxu0 0.0
        %2415 = vmatprep.subr.mxu0 0.0
        %2416 = vmatpush1.msra.mxu0 0.0
        %2417 = vmatprep.subr.mxu0 0.0
        %2418 = vmatpush1.msra.mxu0 0.0
        %2419 = vmatprep.mubr.f32.mxu0 0.0
        %2420 = vmatmul.mubr.f32.gmra.mrb[0].mxu0 %v2353
        %v2421 = vpop.f32.mrb[0].mxu0
        %v2422 = vadd.f32 %v592, %v2421
        %v2423 = vpop.f32.mrb[0].mxu0
        %2424 = vdwg.mxu0
        %v2426 = vsel %vm706, %v2060, 0
        %2428 = vmatprep.subr.mxu0 0.0
        %2429 = vmatpush1.msra.mxu0 %v2077
        %2430 = vmatprep.subr.mxu0 0.0
        %2431 = vmatpush1.msra.mxu0 0.0
        %2432 = vmatprep.subr.mxu0 0.0
        %2433 = vmatpush1.msra.mxu0 0.0
        %2434 = vmatprep.subr.mxu0 0.0
        %2435 = vmatpush1.msra.mxu0 0.0
        %2436 = vmatprep.subr.mxu0 0.0
        %2437 = vmatpush1.msra.mxu0 0.0
        %2438 = vmatprep.subr.mxu0 0.0
        %2439 = vmatpush1.msra.mxu0 0.0
        %2440 = vmatprep.subr.mxu0 0.0
        %2441 = vmatpush1.msra.mxu0 0.0
        %2442 = vmatprep.subr.mxu0 0.0
        %2443 = vmatpush1.msra.mxu0 0.0
        %2444 = vmatprep.subr.mxu0 0.0
        %2445 = vmatpush1.msra.mxu0 0.0
        %2446 = vmatprep.subr.mxu0 0.0
        %2447 = vmatpush1.msra.mxu0 0.0
        %2448 = vmatprep.subr.mxu0 0.0
        %2449 = vmatpush1.msra.mxu0 0.0
        %2450 = vmatprep.subr.mxu0 0.0
        %2451 = vmatpush1.msra.mxu0 0.0
        %2452 = vmatprep.subr.mxu0 0.0
        %2453 = vmatpush1.msra.mxu0 0.0
        %2454 = vmatprep.subr.mxu0 0.0
        %2455 = vmatpush1.msra.mxu0 0.0
        %2456 = vmatprep.subr.mxu0 0.0
        %2457 = vmatpush1.msra.mxu0 0.0
        %2458 = vmatprep.subr.mxu0 0.0
        %2459 = vmatpush1.msra.mxu0 0.0
        %2460 = vmatprep.subr.mxu0 0.0
        %2461 = vmatpush1.msra.mxu0 0.0
        %2462 = vmatprep.subr.mxu0 0.0
        %2463 = vmatpush1.msra.mxu0 0.0
        %2464 = vmatprep.subr.mxu0 0.0
        %2465 = vmatpush1.msra.mxu0 0.0
        %2466 = vmatprep.subr.mxu0 0.0
        %2467 = vmatpush1.msra.mxu0 0.0
        %2468 = vmatprep.subr.mxu0 0.0
        %2469 = vmatpush1.msra.mxu0 0.0
        %2470 = vmatprep.subr.mxu0 0.0
        %2471 = vmatpush1.msra.mxu0 0.0
        %2472 = vmatprep.subr.mxu0 0.0
        %2473 = vmatpush1.msra.mxu0 0.0
        %2474 = vmatprep.subr.mxu0 0.0
        %2475 = vmatpush1.msra.mxu0 0.0
        %2476 = vmatprep.subr.mxu0 0.0
        %2477 = vmatpush1.msra.mxu0 0.0
        %2478 = vmatprep.subr.mxu0 0.0
        %2479 = vmatpush1.msra.mxu0 0.0
        %2480 = vmatprep.subr.mxu0 0.0
        %2481 = vmatpush1.msra.mxu0 0.0
        %2482 = vmatprep.subr.mxu0 0.0
        %2483 = vmatpush1.msra.mxu0 0.0
        %2484 = vmatprep.subr.mxu0 0.0
        %2485 = vmatpush1.msra.mxu0 0.0
        %2486 = vmatprep.subr.mxu0 0.0
        %2487 = vmatpush1.msra.mxu0 0.0
        %2488 = vmatprep.subr.mxu0 0.0
        %2489 = vmatpush1.msra.mxu0 0.0
        %2490 = vmatprep.subr.mxu0 0.0
        %2491 = vmatpush1.msra.mxu0 0.0
        %2492 = vmatprep.mubr.f32.mxu0 0.0
        %2493 = vmatmul.mubr.f32.gmra.mrb[0].mxu0 %v2426
        %v2494 = vpop.f32.mrb[0].mxu0
        %v2495 = vadd.f32 %v593, %v2494
        %v2496 = vpop.f32.mrb[0].mxu0
        %2497 = vdwg.mxu0
        %v2499 = vsel %vm706, %v2061, 0
        %2501 = vmatprep.subr.mxu0 0.0
        %2502 = vmatpush1.msra.mxu0 %v2078
        %2503 = vmatprep.subr.mxu0 0.0
        %2504 = vmatpush1.msra.mxu0 0.0
        %2505 = vmatprep.subr.mxu0 0.0
        %2506 = vmatpush1.msra.mxu0 0.0
        %2507 = vmatprep.subr.mxu0 0.0
        %2508 = vmatpush1.msra.mxu0 0.0
        %2509 = vmatprep.subr.mxu0 0.0
        %2510 = vmatpush1.msra.mxu0 0.0
        %2511 = vmatprep.subr.mxu0 0.0
        %2512 = vmatpush1.msra.mxu0 0.0
        %2513 = vmatprep.subr.mxu0 0.0
        %2514 = vmatpush1.msra.mxu0 0.0
        %2515 = vmatprep.subr.mxu0 0.0
        %2516 = vmatpush1.msra.mxu0 0.0
        %2517 = vmatprep.subr.mxu0 0.0
        %2518 = vmatpush1.msra.mxu0 0.0
        %2519 = vmatprep.subr.mxu0 0.0
        %2520 = vmatpush1.msra.mxu0 0.0
        %2521 = vmatprep.subr.mxu0 0.0
        %2522 = vmatpush1.msra.mxu0 0.0
        %2523 = vmatprep.subr.mxu0 0.0
        %2524 = vmatpush1.msra.mxu0 0.0
        %2525 = vmatprep.subr.mxu0 0.0
        %2526 = vmatpush1.msra.mxu0 0.0
        %2527 = vmatprep.subr.mxu0 0.0
        %2528 = vmatpush1.msra.mxu0 0.0
        %2529 = vmatprep.subr.mxu0 0.0
        %2530 = vmatpush1.msra.mxu0 0.0
        %2531 = vmatprep.subr.mxu0 0.0
        %2532 = vmatpush1.msra.mxu0 0.0
        %2533 = vmatprep.subr.mxu0 0.0
        %2534 = vmatpush1.msra.mxu0 0.0
        %2535 = vmatprep.subr.mxu0 0.0
        %2536 = vmatpush1.msra.mxu0 0.0
        %2537 = vmatprep.subr.mxu0 0.0
        %2538 = vmatpush1.msra.mxu0 0.0
        %2539 = vmatprep.subr.mxu0 0.0
        %2540 = vmatpush1.msra.mxu0 0.0
        %2541 = vmatprep.subr.mxu0 0.0
        %2542 = vmatpush1.msra.mxu0 0.0
        %2543 = vmatprep.subr.mxu0 0.0
        %2544 = vmatpush1.msra.mxu0 0.0
        %2545 = vmatprep.subr.mxu0 0.0
        %2546 = vmatpush1.msra.mxu0 0.0
        %2547 = vmatprep.subr.mxu0 0.0
        %2548 = vmatpush1.msra.mxu0 0.0
        %2549 = vmatprep.subr.mxu0 0.0
        %2550 = vmatpush1.msra.mxu0 0.0
        %2551 = vmatprep.subr.mxu0 0.0
        %2552 = vmatpush1.msra.mxu0 0.0
        %2553 = vmatprep.subr.mxu0 0.0
        %2554 = vmatpush1.msra.mxu0 0.0
        %2555 = vmatprep.subr.mxu0 0.0
        %2556 = vmatpush1.msra.mxu0 0.0
        %2557 = vmatprep.subr.mxu0 0.0
        %2558 = vmatpush1.msra.mxu0 0.0
        %2559 = vmatprep.subr.mxu0 0.0
        %2560 = vmatpush1.msra.mxu0 0.0
        %2561 = vmatprep.subr.mxu0 0.0
        %2562 = vmatpush1.msra.mxu0 0.0
        %2563 = vmatprep.subr.mxu0 0.0
        %2564 = vmatpush1.msra.mxu0 0.0
        %2565 = vmatprep.mubr.f32.mxu0 0.0
        %2566 = vmatmul.mubr.f32.gmra.mrb[0].mxu0 %v2499
        %v2567 = vpop.f32.mrb[0].mxu0
        %v2568 = vadd.f32 %v594, %v2567
        %v2569 = vpop.f32.mrb[0].mxu0
        %2570 = vdwg.mxu0
        %v2572 = vsel %vm706, %v2062, 0
        %2574 = vmatprep.subr.mxu0 0.0
        %2575 = vmatpush1.msra.mxu0 %v2079
        %2576 = vmatprep.subr.mxu0 0.0
        %2577 = vmatpush1.msra.mxu0 0.0
        %2578 = vmatprep.subr.mxu0 0.0
        %2579 = vmatpush1.msra.mxu0 0.0
        %2580 = vmatprep.subr.mxu0 0.0
        %2581 = vmatpush1.msra.mxu0 0.0
        %2582 = vmatprep.subr.mxu0 0.0
        %2583 = vmatpush1.msra.mxu0 0.0
        %2584 = vmatprep.subr.mxu0 0.0
        %2585 = vmatpush1.msra.mxu0 0.0
        %2586 = vmatprep.subr.mxu0 0.0
        %2587 = vmatpush1.msra.mxu0 0.0
        %2588 = vmatprep.subr.mxu0 0.0
        %2589 = vmatpush1.msra.mxu0 0.0
        %2590 = vmatprep.subr.mxu0 0.0
        %2591 = vmatpush1.msra.mxu0 0.0
        %2592 = vmatprep.subr.mxu0 0.0
        %2593 = vmatpush1.msra.mxu0 0.0
        %2594 = vmatprep.subr.mxu0 0.0
        %2595 = vmatpush1.msra.mxu0 0.0
        %2596 = vmatprep.subr.mxu0 0.0
        %2597 = vmatpush1.msra.mxu0 0.0
        %2598 = vmatprep.subr.mxu0 0.0
        %2599 = vmatpush1.msra.mxu0 0.0
        %2600 = vmatprep.subr.mxu0 0.0
        %2601 = vmatpush1.msra.mxu0 0.0
        %2602 = vmatprep.subr.mxu0 0.0
        %2603 = vmatpush1.msra.mxu0 0.0
        %2604 = vmatprep.subr.mxu0 0.0
        %2605 = vmatpush1.msra.mxu0 0.0
        %2606 = vmatprep.subr.mxu0 0.0
        %2607 = vmatpush1.msra.mxu0 0.0
        %2608 = vmatprep.subr.mxu0 0.0
        %2609 = vmatpush1.msra.mxu0 0.0
        %2610 = vmatprep.subr.mxu0 0.0
        %2611 = vmatpush1.msra.mxu0 0.0
        %2612 = vmatprep.subr.mxu0 0.0
        %2613 = vmatpush1.msra.mxu0 0.0
        %2614 = vmatprep.subr.mxu0 0.0
        %2615 = vmatpush1.msra.mxu0 0.0
        %2616 = vmatprep.subr.mxu0 0.0
        %2617 = vmatpush1.msra.mxu0 0.0
        %2618 = vmatprep.subr.mxu0 0.0
        %2619 = vmatpush1.msra.mxu0 0.0
        %2620 = vmatprep.subr.mxu0 0.0
        %2621 = vmatpush1.msra.mxu0 0.0
        %2622 = vmatprep.subr.mxu0 0.0
        %2623 = vmatpush1.msra.mxu0 0.0
        %2624 = vmatprep.subr.mxu0 0.0
        %2625 = vmatpush1.msra.mxu0 0.0
        %2626 = vmatprep.subr.mxu0 0.0
        %2627 = vmatpush1.msra.mxu0 0.0
        %2628 = vmatprep.subr.mxu0 0.0
        %2629 = vmatpush1.msra.mxu0 0.0
        %2630 = vmatprep.subr.mxu0 0.0
        %2631 = vmatpush1.msra.mxu0 0.0
        %2632 = vmatprep.subr.mxu0 0.0
        %2633 = vmatpush1.msra.mxu0 0.0
        %2634 = vmatprep.subr.mxu0 0.0
        %2635 = vmatpush1.msra.mxu0 0.0
        %2636 = vmatprep.subr.mxu0 0.0
        %2637 = vmatpush1.msra.mxu0 0.0
        %2638 = vmatprep.mubr.f32.mxu0 0.0
        %2639 = vmatmul.mubr.f32.gmra.mrb[0].mxu0 %v2572
        %v2640 = vpop.f32.mrb[0].mxu0
        %v2641 = vadd.f32 %v595, %v2640
        %v2642 = vpop.f32.mrb[0].mxu0
        %2643 = vdwg.mxu0
        %v2645 = vsel %vm706, %v2063, 0
        %2647 = vmatprep.subr.mxu0 0.0
        %2648 = vmatpush1.msra.mxu0 %v2080
        %2649 = vmatprep.subr.mxu0 0.0
        %2650 = vmatpush1.msra.mxu0 0.0
        %2651 = vmatprep.subr.mxu0 0.0
        %2652 = vmatpush1.msra.mxu0 0.0
        %2653 = vmatprep.subr.mxu0 0.0
        %2654 = vmatpush1.msra.mxu0 0.0
        %2655 = vmatprep.subr.mxu0 0.0
        %2656 = vmatpush1.msra.mxu0 0.0
        %2657 = vmatprep.subr.mxu0 0.0
        %2658 = vmatpush1.msra.mxu0 0.0
        %2659 = vmatprep.subr.mxu0 0.0
        %2660 = vmatpush1.msra.mxu0 0.0
        %2661 = vmatprep.subr.mxu0 0.0
        %2662 = vmatpush1.msra.mxu0 0.0
        %2663 = vmatprep.subr.mxu0 0.0
        %2664 = vmatpush1.msra.mxu0 0.0
        %2665 = vmatprep.subr.mxu0 0.0
        %2666 = vmatpush1.msra.mxu0 0.0
        %2667 = vmatprep.subr.mxu0 0.0
        %2668 = vmatpush1.msra.mxu0 0.0
        %2669 = vmatprep.subr.mxu0 0.0
        %2670 = vmatpush1.msra.mxu0 0.0
        %2671 = vmatprep.subr.mxu0 0.0
        %2672 = vmatpush1.msra.mxu0 0.0
        %2673 = vmatprep.subr.mxu0 0.0
        %2674 = vmatpush1.msra.mxu0 0.0
        %2675 = vmatprep.subr.mxu0 0.0
        %2676 = vmatpush1.msra.mxu0 0.0
        %2677 = vmatprep.subr.mxu0 0.0
        %2678 = vmatpush1.msra.mxu0 0.0
        %2679 = vmatprep.subr.mxu0 0.0
        %2680 = vmatpush1.msra.mxu0 0.0
        %2681 = vmatprep.subr.mxu0 0.0
        %2682 = vmatpush1.msra.mxu0 0.0
        %2683 = vmatprep.subr.mxu0 0.0
        %2684 = vmatpush1.msra.mxu0 0.0
        %2685 = vmatprep.subr.mxu0 0.0
        %2686 = vmatpush1.msra.mxu0 0.0
        %2687 = vmatprep.subr.mxu0 0.0
        %2688 = vmatpush1.msra.mxu0 0.0
        %2689 = vmatprep.subr.mxu0 0.0
        %2690 = vmatpush1.msra.mxu0 0.0
        %2691 = vmatprep.subr.mxu0 0.0
        %2692 = vmatpush1.msra.mxu0 0.0
        %2693 = vmatprep.subr.mxu0 0.0
        %2694 = vmatpush1.msra.mxu0 0.0
        %2695 = vmatprep.subr.mxu0 0.0
        %2696 = vmatpush1.msra.mxu0 0.0
        %2697 = vmatprep.subr.mxu0 0.0
        %2698 = vmatpush1.msra.mxu0 0.0
        %2699 = vmatprep.subr.mxu0 0.0
        %2700 = vmatpush1.msra.mxu0 0.0
        %2701 = vmatprep.subr.mxu0 0.0
        %2702 = vmatpush1.msra.mxu0 0.0
        %2703 = vmatprep.subr.mxu0 0.0
        %2704 = vmatpush1.msra.mxu0 0.0
        %2705 = vmatprep.subr.mxu0 0.0
        %2706 = vmatpush1.msra.mxu0 0.0
        %2707 = vmatprep.subr.mxu0 0.0
        %2708 = vmatpush1.msra.mxu0 0.0
        %2709 = vmatprep.subr.mxu0 0.0
        %2710 = vmatpush1.msra.mxu0 0.0
        %2711 = vmatprep.mubr.f32.mxu0 0.0
        %2712 = vmatmul.mubr.f32.gmra.mrb[0].mxu0 %v2645
        %v2713 = vpop.f32.mrb[0].mxu0
        %v2714 = vadd.f32 %v596, %v2713
        %v2715 = vpop.f32.mrb[0].mxu0
        %2716 = vdwg.mxu0
        %v2717 = vsub.f32 %v2203, %v2056
        %v2718 = vsub.f32 %v2276, %v2057
        %v2719 = vsub.f32 %v2349, %v2058
        %v2720 = vsub.f32 %v2422, %v2059
        %v2721 = vsub.f32 %v2495, %v2060
        %v2722 = vsub.f32 %v2568, %v2061
        %v2723 = vsub.f32 %v2641, %v2062
        %v2724 = vsub.f32 %v2714, %v2063
        %v2725 = vlaneseq
        %v2726 = vshrl.u32 %v2725, 7
        %v2727 = vsub.s32 0, %v2726
        %v2728 = vrot.slane %v2107, %v2727
        %v2729 = vlaneseq
        %v2730 = vshrl.u32 %v2729, 7
        %v2731 = vsub.s32 0, %v2730
        %v2732 = vrot.slane %v2121, %v2731
        %v2733 = vlaneseq
        %v2734 = vshrl.u32 %v2733, 7
        %v2735 = vsub.s32 0, %v2734
        %v2736 = vrot.slane %v2129, %v2735
        %v2737 = vlaneseq
        %v2738 = vshrl.u32 %v2737, 7
        %v2739 = vsub.s32 0, %v2738
        %v2740 = vrot.slane %v2131, %v2739
        %v2741 = vlaneseq
        %v2742 = vshrl.u32 %v2741, 7
        %v2743 = vsub.s32 0, %v2742
        %v2744 = vrot.slane %v2114, %v2743
        %v2745 = vlaneseq
        %v2746 = vshrl.u32 %v2745, 7
        %v2747 = vsub.s32 0, %v2746
        %v2748 = vrot.slane %v2128, %v2747
        %v2749 = vlaneseq
        %v2750 = vshrl.u32 %v2749, 7
        %v2751 = vsub.s32 0, %v2750
        %v2752 = vrot.slane %v2130, %v2751
        %v2753 = vlaneseq
        %v2754 = vshrl.u32 %v2753, 7
        %v2755 = vsub.s32 0, %v2754
        %v2756 = vrot.slane %v2132, %v2755
        %v2765 = vmul.f32 %v2728, %v2717
        %v2766 = vmul.f32 %v2732, %v2718
        %v2767 = vmul.f32 %v2736, %v2719
        %v2768 = vmul.f32 %v2740, %v2720
        %v2769 = vmul.f32 %v2744, %v2721
        %v2770 = vmul.f32 %v2748, %v2722
        %v2771 = vmul.f32 %v2752, %v2723
        %v2772 = vmul.f32 %v2756, %v2724
        %v2773 = vadd.f32 %v2056, %v2765
        %v2774 = vadd.f32 %v2057, %v2766
        %v2775 = vadd.f32 %v2058, %v2767
        %v2776 = vadd.f32 %v2059, %v2768
        %v2777 = vadd.f32 %v2060, %v2769
        %v2778 = vadd.f32 %v2061, %v2770
        %v2779 = vadd.f32 %v2062, %v2771
        %v2780 = vadd.f32 %v2063, %v2772
        %v2781 = vld [vmem:[%s580] sm:$0xff]
        %v2783 = vcombine.high %v2781, %v2781
        %v2785 = vunpack.c.l.s4 1966171168
        %v2786 = vunpack.c.0.s8 %v2785
        %v2787 = vlaneseq
        %v2788 = vshrl.u32 %v2787, 7
        %v2789 = vsub.s32 %v2786, %v2788
        %v2790 = vrot.slane %v2781, %v2789
        %v2792 = vunpack.c.l.s4 1966171168
        %v2793 = vunpack.c.0.s8 %v2792
        %v2794 = vlaneseq
        %v2795 = vshrl.u32 %v2794, 7
        %v2796 = vsub.s32 %v2793, %v2795
        %v2797 = vrot.slane %v2783, %v2796
        %v2798 = vcombine.high %v2790, %v2790
        %v2799 = vcombine.high %v2797, %v2797
        %v2801 = vunpack.c.l.s4 1966171168
        %v2802 = vunpack.c.0.s8 %v2801
        %v2803 = vlaneseq
        %v2804 = vshrl.u32 %v2803, 7
        %v2805 = vsub.s32 %v2802, %v2804
        %v2806 = vrot.slane %v2790, %v2805
        %v2808 = vunpack.c.l.s4 1966171168
        %v2809 = vunpack.c.0.s8 %v2808
        %v2810 = vlaneseq
        %v2811 = vshrl.u32 %v2810, 7
        %v2812 = vsub.s32 %v2809, %v2811
        %v2813 = vrot.slane %v2797, %v2812
        %v2815 = vunpack.c.l.s4 1966171168
        %v2816 = vunpack.c.0.s8 %v2815
        %v2817 = vlaneseq
        %v2818 = vshrl.u32 %v2817, 7
        %v2819 = vsub.s32 %v2816, %v2818
        %v2820 = vrot.slane %v2798, %v2819
        %v2822 = vunpack.c.l.s4 1966171168
        %v2823 = vunpack.c.0.s8 %v2822
        %v2824 = vlaneseq
        %v2825 = vshrl.u32 %v2824, 7
        %v2826 = vsub.s32 %v2823, %v2825
        %v2827 = vrot.slane %v2799, %v2826
        %v2828 = vcombine.high %v2806, %v2806
        %v2829 = vcombine.high %v2813, %v2813
        %v2830 = vcombine.high %v2820, %v2820
        %v2831 = vcombine.high %v2827, %v2827
        %v2832 = vlaneseq
        %v2833 = vshrl.u32 %v2832, 7
        %v2834 = vsub.s32 0, %v2833
        %v2835 = vrot.slane %v2806, %v2834
        %v2836 = vlaneseq
        %v2837 = vshrl.u32 %v2836, 7
        %v2838 = vsub.s32 0, %v2837
        %v2839 = vrot.slane %v2820, %v2838
        %v2840 = vlaneseq
        %v2841 = vshrl.u32 %v2840, 7
        %v2842 = vsub.s32 0, %v2841
        %v2843 = vrot.slane %v2828, %v2842
        %v2844 = vlaneseq
        %v2845 = vshrl.u32 %v2844, 7
        %v2846 = vsub.s32 0, %v2845
        %v2847 = vrot.slane %v2830, %v2846
        %v2848 = vlaneseq
        %v2849 = vshrl.u32 %v2848, 7
        %v2850 = vsub.s32 0, %v2849
        %v2851 = vrot.slane %v2813, %v2850
        %v2852 = vlaneseq
        %v2853 = vshrl.u32 %v2852, 7
        %v2854 = vsub.s32 0, %v2853
        %v2855 = vrot.slane %v2827, %v2854
        %v2856 = vlaneseq
        %v2857 = vshrl.u32 %v2856, 7
        %v2858 = vsub.s32 0, %v2857
        %v2859 = vrot.slane %v2829, %v2858
        %v2860 = vlaneseq
        %v2861 = vshrl.u32 %v2860, 7
        %v2862 = vsub.s32 0, %v2861
        %v2863 = vrot.slane %v2831, %v2862
        %v2872 = vmul.f32 %v2835, %v2773
        %v2873 = vmul.f32 %v2839, %v2774
        %v2874 = vmul.f32 %v2843, %v2775
        %v2875 = vmul.f32 %v2847, %v2776
        %v2876 = vmul.f32 %v2851, %v2777
        %v2877 = vmul.f32 %v2855, %v2778
        %v2878 = vmul.f32 %v2859, %v2779
        %v2879 = vmul.f32 %v2863, %v2780
        %vm2880 = vcmask 59392
        %v2881 = vsel %vm2880, %v2872, 0.0
        %2882 = vadd.xlane.f32.xlu0 %v2881
        %v2883 = vpop.xlane.xlu0 %2882
        %v2884 = vsel %vm2880, %v2873, 0.0
        %2885 = vadd.xlane.f32.xlu0 %v2884
        %v2886 = vpop.xlane.xlu0 %2885
        %v2887 = vsel %vm2880, %v2874, 0.0
        %2888 = vadd.xlane.f32.xlu0 %v2887
        %v2889 = vpop.xlane.xlu0 %2888
        %v2890 = vsel %vm2880, %v2875, 0.0
        %2891 = vadd.xlane.f32.xlu0 %v2890
        %v2892 = vpop.xlane.xlu0 %2891
        %v2893 = vsel %vm2880, %v2876, 0.0
        %2894 = vadd.xlane.f32.xlu0 %v2893
        %v2895 = vpop.xlane.xlu0 %2894
        %v2896 = vsel %vm2880, %v2877, 0.0
        %2897 = vadd.xlane.f32.xlu0 %v2896
        %v2898 = vpop.xlane.xlu0 %2897
        %v2899 = vsel %vm2880, %v2878, 0.0
        %2900 = vadd.xlane.f32.xlu0 %v2899
        %v2901 = vpop.xlane.xlu0 %2900
        %v2902 = vsel %vm2880, %v2879, 0.0
        %2903 = vadd.xlane.f32.xlu0 %v2902
        %v2904 = vpop.xlane.xlu0 %2903
        %v2905 = vsub.f32 %v2773, %v2883
        %v2906 = vsub.f32 %v2774, %v2886
        %v2907 = vsub.f32 %v2775, %v2889
        %v2908 = vsub.f32 %v2776, %v2892
        %v2909 = vsub.f32 %v2777, %v2895
        %v2910 = vsub.f32 %v2778, %v2898
        %v2911 = vsub.f32 %v2779, %v2901
        %v2912 = vsub.f32 %v2780, %v2904
        %v2913 = vadd.f32 %v2905, %v600
        %v2914 = vadd.f32 %v2906, %v605
        %v2915 = vadd.f32 %v2907, %v610
        %v2916 = vadd.f32 %v2908, %v615
        %v2917 = vadd.f32 %v2909, %v620
        %v2918 = vadd.f32 %v2910, %v625
        %v2919 = vadd.f32 %v2911, %v630
        %v2920 = vadd.f32 %v2912, %v635
        %v2921 = vld [vmem:[%s575] sm:$0xf]
        %v2922 = vld [vmem:[%s575 + $0x4] sm:$0xf]
        %v2923 = vld [vmem:[%s575 + $0x8] sm:$0xf]
        %v2924 = vld [vmem:[%s575 + $0xc] sm:$0xf]
        %v2925 = vld [vmem:[%s575 + $0x10] sm:$0xf]
        %v2926 = vld [vmem:[%s575 + $0x14] sm:$0xf]
        %v2927 = vld [vmem:[%s575 + $0x18] sm:$0xf]
        %v2928 = vld [vmem:[%s575 + $0x1c] sm:$0xf]
        %v2929 = vunpack.c.l.bf16 %v2921
        %v2930 = vunpack.c.l.bf16 %v2922
        %v2931 = vunpack.c.l.bf16 %v2923
        %v2932 = vunpack.c.l.bf16 %v2924
        %v2933 = vunpack.c.l.bf16 %v2925
        %v2934 = vunpack.c.l.bf16 %v2926
        %v2935 = vunpack.c.l.bf16 %v2927
        %v2936 = vunpack.c.l.bf16 %v2928
        %v2938 = vsel %vm706, %v2913, 0
        %2940 = vmatprep.subr.mxu0 0.0
        %2941 = vmatpush1.msra.mxu0 %v2929
        %2942 = vmatprep.subr.mxu0 0.0
        %2943 = vmatpush1.msra.mxu0 0.0
        %2944 = vmatprep.subr.mxu0 0.0
        %2945 = vmatpush1.msra.mxu0 0.0
        %2946 = vmatprep.subr.mxu0 0.0
        %2947 = vmatpush1.msra.mxu0 0.0
        %2948 = vmatprep.subr.mxu0 0.0
        %2949 = vmatpush1.msra.mxu0 0.0
        %2950 = vmatprep.subr.mxu0 0.0
        %2951 = vmatpush1.msra.mxu0 0.0
        %2952 = vmatprep.subr.mxu0 0.0
        %2953 = vmatpush1.msra.mxu0 0.0
        %2954 = vmatprep.subr.mxu0 0.0
        %2955 = vmatpush1.msra.mxu0 0.0
        %2956 = vmatprep.subr.mxu0 0.0
        %2957 = vmatpush1.msra.mxu0 0.0
        %2958 = vmatprep.subr.mxu0 0.0
        %2959 = vmatpush1.msra.mxu0 0.0
        %2960 = vmatprep.subr.mxu0 0.0
        %2961 = vmatpush1.msra.mxu0 0.0
        %2962 = vmatprep.subr.mxu0 0.0
        %2963 = vmatpush1.msra.mxu0 0.0
        %2964 = vmatprep.subr.mxu0 0.0
        %2965 = vmatpush1.msra.mxu0 0.0
        %2966 = vmatprep.subr.mxu0 0.0
        %2967 = vmatpush1.msra.mxu0 0.0
        %2968 = vmatprep.subr.mxu0 0.0
        %2969 = vmatpush1.msra.mxu0 0.0
        %2970 = vmatprep.subr.mxu0 0.0
        %2971 = vmatpush1.msra.mxu0 0.0
        %2972 = vmatprep.subr.mxu0 0.0
        %2973 = vmatpush1.msra.mxu0 0.0
        %2974 = vmatprep.subr.mxu0 0.0
        %2975 = vmatpush1.msra.mxu0 0.0
        %2976 = vmatprep.subr.mxu0 0.0
        %2977 = vmatpush1.msra.mxu0 0.0
        %2978 = vmatprep.subr.mxu0 0.0
        %2979 = vmatpush1.msra.mxu0 0.0
        %2980 = vmatprep.subr.mxu0 0.0
        %2981 = vmatpush1.msra.mxu0 0.0
        %2982 = vmatprep.subr.mxu0 0.0
        %2983 = vmatpush1.msra.mxu0 0.0
        %2984 = vmatprep.subr.mxu0 0.0
        %2985 = vmatpush1.msra.mxu0 0.0
        %2986 = vmatprep.subr.mxu0 0.0
        %2987 = vmatpush1.msra.mxu0 0.0
        %2988 = vmatprep.subr.mxu0 0.0
        %2989 = vmatpush1.msra.mxu0 0.0
        %2990 = vmatprep.subr.mxu0 0.0
        %2991 = vmatpush1.msra.mxu0 0.0
        %2992 = vmatprep.subr.mxu0 0.0
        %2993 = vmatpush1.msra.mxu0 0.0
        %2994 = vmatprep.subr.mxu0 0.0
        %2995 = vmatpush1.msra.mxu0 0.0
        %2996 = vmatprep.subr.mxu0 0.0
        %2997 = vmatpush1.msra.mxu0 0.0
        %2998 = vmatprep.subr.mxu0 0.0
        %2999 = vmatpush1.msra.mxu0 0.0
        %3000 = vmatprep.subr.mxu0 0.0
        %3001 = vmatpush1.msra.mxu0 0.0
        %3002 = vmatprep.subr.mxu0 0.0
        %3003 = vmatpush1.msra.mxu0 0.0
        %3004 = vmatprep.mubr.f32.mxu0 0.0
        %3005 = vmatmul.mubr.f32.gmra.mrb[0].mxu0 %v2938
        %v3006 = vpop.f32.mrb[0].mxu0
        %v3007 = vadd.f32 0.0, %v3006
        %v3008 = vpop.f32.mrb[0].mxu0
        %3009 = vdwg.mxu0
        %v3011 = vsel %vm706, %v2914, 0
        %3013 = vmatprep.subr.mxu0 0.0
        %3014 = vmatpush1.msra.mxu0 %v2930
        %3015 = vmatprep.subr.mxu0 0.0
        %3016 = vmatpush1.msra.mxu0 0.0
        %3017 = vmatprep.subr.mxu0 0.0
        %3018 = vmatpush1.msra.mxu0 0.0
        %3019 = vmatprep.subr.mxu0 0.0
        %3020 = vmatpush1.msra.mxu0 0.0
        %3021 = vmatprep.subr.mxu0 0.0
        %3022 = vmatpush1.msra.mxu0 0.0
        %3023 = vmatprep.subr.mxu0 0.0
        %3024 = vmatpush1.msra.mxu0 0.0
        %3025 = vmatprep.subr.mxu0 0.0
        %3026 = vmatpush1.msra.mxu0 0.0
        %3027 = vmatprep.subr.mxu0 0.0
        %3028 = vmatpush1.msra.mxu0 0.0
        %3029 = vmatprep.subr.mxu0 0.0
        %3030 = vmatpush1.msra.mxu0 0.0
        %3031 = vmatprep.subr.mxu0 0.0
        %3032 = vmatpush1.msra.mxu0 0.0
        %3033 = vmatprep.subr.mxu0 0.0
        %3034 = vmatpush1.msra.mxu0 0.0
        %3035 = vmatprep.subr.mxu0 0.0
        %3036 = vmatpush1.msra.mxu0 0.0
        %3037 = vmatprep.subr.mxu0 0.0
        %3038 = vmatpush1.msra.mxu0 0.0
        %3039 = vmatprep.subr.mxu0 0.0
        %3040 = vmatpush1.msra.mxu0 0.0
        %3041 = vmatprep.subr.mxu0 0.0
        %3042 = vmatpush1.msra.mxu0 0.0
        %3043 = vmatprep.subr.mxu0 0.0
        %3044 = vmatpush1.msra.mxu0 0.0
        %3045 = vmatprep.subr.mxu0 0.0
        %3046 = vmatpush1.msra.mxu0 0.0
        %3047 = vmatprep.subr.mxu0 0.0
        %3048 = vmatpush1.msra.mxu0 0.0
        %3049 = vmatprep.subr.mxu0 0.0
        %3050 = vmatpush1.msra.mxu0 0.0
        %3051 = vmatprep.subr.mxu0 0.0
        %3052 = vmatpush1.msra.mxu0 0.0
        %3053 = vmatprep.subr.mxu0 0.0
        %3054 = vmatpush1.msra.mxu0 0.0
        %3055 = vmatprep.subr.mxu0 0.0
        %3056 = vmatpush1.msra.mxu0 0.0
        %3057 = vmatprep.subr.mxu0 0.0
        %3058 = vmatpush1.msra.mxu0 0.0
        %3059 = vmatprep.subr.mxu0 0.0
        %3060 = vmatpush1.msra.mxu0 0.0
        %3061 = vmatprep.subr.mxu0 0.0
        %3062 = vmatpush1.msra.mxu0 0.0
        %3063 = vmatprep.subr.mxu0 0.0
        %3064 = vmatpush1.msra.mxu0 0.0
        %3065 = vmatprep.subr.mxu0 0.0
        %3066 = vmatpush1.msra.mxu0 0.0
        %3067 = vmatprep.subr.mxu0 0.0
        %3068 = vmatpush1.msra.mxu0 0.0
        %3069 = vmatprep.subr.mxu0 0.0
        %3070 = vmatpush1.msra.mxu0 0.0
        %3071 = vmatprep.subr.mxu0 0.0
        %3072 = vmatpush1.msra.mxu0 0.0
        %3073 = vmatprep.subr.mxu0 0.0
        %3074 = vmatpush1.msra.mxu0 0.0
        %3075 = vmatprep.subr.mxu0 0.0
        %3076 = vmatpush1.msra.mxu0 0.0
        %3077 = vmatprep.mubr.f32.mxu0 0.0
        %3078 = vmatmul.mubr.f32.gmra.mrb[0].mxu0 %v3011
        %v3079 = vpop.f32.mrb[0].mxu0
        %v3080 = vadd.f32 0.0, %v3079
        %v3081 = vpop.f32.mrb[0].mxu0
        %3082 = vdwg.mxu0
        %v3084 = vsel %vm706, %v2915, 0
        %3086 = vmatprep.subr.mxu0 0.0
        %3087 = vmatpush1.msra.mxu0 %v2931
        %3088 = vmatprep.subr.mxu0 0.0
        %3089 = vmatpush1.msra.mxu0 0.0
        %3090 = vmatprep.subr.mxu0 0.0
        %3091 = vmatpush1.msra.mxu0 0.0
        %3092 = vmatprep.subr.mxu0 0.0
        %3093 = vmatpush1.msra.mxu0 0.0
        %3094 = vmatprep.subr.mxu0 0.0
        %3095 = vmatpush1.msra.mxu0 0.0
        %3096 = vmatprep.subr.mxu0 0.0
        %3097 = vmatpush1.msra.mxu0 0.0
        %3098 = vmatprep.subr.mxu0 0.0
        %3099 = vmatpush1.msra.mxu0 0.0
        %3100 = vmatprep.subr.mxu0 0.0
        %3101 = vmatpush1.msra.mxu0 0.0
        %3102 = vmatprep.subr.mxu0 0.0
        %3103 = vmatpush1.msra.mxu0 0.0
        %3104 = vmatprep.subr.mxu0 0.0
        %3105 = vmatpush1.msra.mxu0 0.0
        %3106 = vmatprep.subr.mxu0 0.0
        %3107 = vmatpush1.msra.mxu0 0.0
        %3108 = vmatprep.subr.mxu0 0.0
        %3109 = vmatpush1.msra.mxu0 0.0
        %3110 = vmatprep.subr.mxu0 0.0
        %3111 = vmatpush1.msra.mxu0 0.0
        %3112 = vmatprep.subr.mxu0 0.0
        %3113 = vmatpush1.msra.mxu0 0.0
        %3114 = vmatprep.subr.mxu0 0.0
        %3115 = vmatpush1.msra.mxu0 0.0
        %3116 = vmatprep.subr.mxu0 0.0
        %3117 = vmatpush1.msra.mxu0 0.0
        %3118 = vmatprep.subr.mxu0 0.0
        %3119 = vmatpush1.msra.mxu0 0.0
        %3120 = vmatprep.subr.mxu0 0.0
        %3121 = vmatpush1.msra.mxu0 0.0
        %3122 = vmatprep.subr.mxu0 0.0
        %3123 = vmatpush1.msra.mxu0 0.0
        %3124 = vmatprep.subr.mxu0 0.0
        %3125 = vmatpush1.msra.mxu0 0.0
        %3126 = vmatprep.subr.mxu0 0.0
        %3127 = vmatpush1.msra.mxu0 0.0
        %3128 = vmatprep.subr.mxu0 0.0
        %3129 = vmatpush1.msra.mxu0 0.0
        %3130 = vmatprep.subr.mxu0 0.0
        %3131 = vmatpush1.msra.mxu0 0.0
        %3132 = vmatprep.subr.mxu0 0.0
        %3133 = vmatpush1.msra.mxu0 0.0
        %3134 = vmatprep.subr.mxu0 0.0
        %3135 = vmatpush1.msra.mxu0 0.0
        %3136 = vmatprep.subr.mxu0 0.0
        %3137 = vmatpush1.msra.mxu0 0.0
        %3138 = vmatprep.subr.mxu0 0.0
        %3139 = vmatpush1.msra.mxu0 0.0
        %3140 = vmatprep.subr.mxu0 0.0
        %3141 = vmatpush1.msra.mxu0 0.0
        %3142 = vmatprep.subr.mxu0 0.0
        %3143 = vmatpush1.msra.mxu0 0.0
        %3144 = vmatprep.subr.mxu0 0.0
        %3145 = vmatpush1.msra.mxu0 0.0
        %3146 = vmatprep.subr.mxu0 0.0
        %3147 = vmatpush1.msra.mxu0 0.0
        %3148 = vmatprep.subr.mxu0 0.0
        %3149 = vmatpush1.msra.mxu0 0.0
        %3150 = vmatprep.mubr.f32.mxu0 0.0
        %3151 = vmatmul.mubr.f32.gmra.mrb[0].mxu0 %v3084
        %v3152 = vpop.f32.mrb[0].mxu0
        %v3153 = vadd.f32 0.0, %v3152
        %v3154 = vpop.f32.mrb[0].mxu0
        %3155 = vdwg.mxu0
        %v3157 = vsel %vm706, %v2916, 0
        %3159 = vmatprep.subr.mxu0 0.0
        %3160 = vmatpush1.msra.mxu0 %v2932
        %3161 = vmatprep.subr.mxu0 0.0
        %3162 = vmatpush1.msra.mxu0 0.0
        %3163 = vmatprep.subr.mxu0 0.0
        %3164 = vmatpush1.msra.mxu0 0.0
        %3165 = vmatprep.subr.mxu0 0.0
        %3166 = vmatpush1.msra.mxu0 0.0
        %3167 = vmatprep.subr.mxu0 0.0
        %3168 = vmatpush1.msra.mxu0 0.0
        %3169 = vmatprep.subr.mxu0 0.0
        %3170 = vmatpush1.msra.mxu0 0.0
        %3171 = vmatprep.subr.mxu0 0.0
        %3172 = vmatpush1.msra.mxu0 0.0
        %3173 = vmatprep.subr.mxu0 0.0
        %3174 = vmatpush1.msra.mxu0 0.0
        %3175 = vmatprep.subr.mxu0 0.0
        %3176 = vmatpush1.msra.mxu0 0.0
        %3177 = vmatprep.subr.mxu0 0.0
        %3178 = vmatpush1.msra.mxu0 0.0
        %3179 = vmatprep.subr.mxu0 0.0
        %3180 = vmatpush1.msra.mxu0 0.0
        %3181 = vmatprep.subr.mxu0 0.0
        %3182 = vmatpush1.msra.mxu0 0.0
        %3183 = vmatprep.subr.mxu0 0.0
        %3184 = vmatpush1.msra.mxu0 0.0
        %3185 = vmatprep.subr.mxu0 0.0
        %3186 = vmatpush1.msra.mxu0 0.0
        %3187 = vmatprep.subr.mxu0 0.0
        %3188 = vmatpush1.msra.mxu0 0.0
        %3189 = vmatprep.subr.mxu0 0.0
        %3190 = vmatpush1.msra.mxu0 0.0
        %3191 = vmatprep.subr.mxu0 0.0
        %3192 = vmatpush1.msra.mxu0 0.0
        %3193 = vmatprep.subr.mxu0 0.0
        %3194 = vmatpush1.msra.mxu0 0.0
        %3195 = vmatprep.subr.mxu0 0.0
        %3196 = vmatpush1.msra.mxu0 0.0
        %3197 = vmatprep.subr.mxu0 0.0
        %3198 = vmatpush1.msra.mxu0 0.0
        %3199 = vmatprep.subr.mxu0 0.0
        %3200 = vmatpush1.msra.mxu0 0.0
        %3201 = vmatprep.subr.mxu0 0.0
        %3202 = vmatpush1.msra.mxu0 0.0
        %3203 = vmatprep.subr.mxu0 0.0
        %3204 = vmatpush1.msra.mxu0 0.0
        %3205 = vmatprep.subr.mxu0 0.0
        %3206 = vmatpush1.msra.mxu0 0.0
        %3207 = vmatprep.subr.mxu0 0.0
        %3208 = vmatpush1.msra.mxu0 0.0
        %3209 = vmatprep.subr.mxu0 0.0
        %3210 = vmatpush1.msra.mxu0 0.0
        %3211 = vmatprep.subr.mxu0 0.0
        %3212 = vmatpush1.msra.mxu0 0.0
        %3213 = vmatprep.subr.mxu0 0.0
        %3214 = vmatpush1.msra.mxu0 0.0
        %3215 = vmatprep.subr.mxu0 0.0
        %3216 = vmatpush1.msra.mxu0 0.0
        %3217 = vmatprep.subr.mxu0 0.0
        %3218 = vmatpush1.msra.mxu0 0.0
        %3219 = vmatprep.subr.mxu0 0.0
        %3220 = vmatpush1.msra.mxu0 0.0
        %3221 = vmatprep.subr.mxu0 0.0
        %3222 = vmatpush1.msra.mxu0 0.0
        %3223 = vmatprep.mubr.f32.mxu0 0.0
        %3224 = vmatmul.mubr.f32.gmra.mrb[0].mxu0 %v3157
        %v3225 = vpop.f32.mrb[0].mxu0
        %v3226 = vadd.f32 0.0, %v3225
        %v3227 = vpop.f32.mrb[0].mxu0
        %3228 = vdwg.mxu0
        %v3230 = vsel %vm706, %v2917, 0
        %3232 = vmatprep.subr.mxu0 0.0
        %3233 = vmatpush1.msra.mxu0 %v2933
        %3234 = vmatprep.subr.mxu0 0.0
        %3235 = vmatpush1.msra.mxu0 0.0
        %3236 = vmatprep.subr.mxu0 0.0
        %3237 = vmatpush1.msra.mxu0 0.0
        %3238 = vmatprep.subr.mxu0 0.0
        %3239 = vmatpush1.msra.mxu0 0.0
        %3240 = vmatprep.subr.mxu0 0.0
        %3241 = vmatpush1.msra.mxu0 0.0
        %3242 = vmatprep.subr.mxu0 0.0
        %3243 = vmatpush1.msra.mxu0 0.0
        %3244 = vmatprep.subr.mxu0 0.0
        %3245 = vmatpush1.msra.mxu0 0.0
        %3246 = vmatprep.subr.mxu0 0.0
        %3247 = vmatpush1.msra.mxu0 0.0
        %3248 = vmatprep.subr.mxu0 0.0
        %3249 = vmatpush1.msra.mxu0 0.0
        %3250 = vmatprep.subr.mxu0 0.0
        %3251 = vmatpush1.msra.mxu0 0.0
        %3252 = vmatprep.subr.mxu0 0.0
        %3253 = vmatpush1.msra.mxu0 0.0
        %3254 = vmatprep.subr.mxu0 0.0
        %3255 = vmatpush1.msra.mxu0 0.0
        %3256 = vmatprep.subr.mxu0 0.0
        %3257 = vmatpush1.msra.mxu0 0.0
        %3258 = vmatprep.subr.mxu0 0.0
        %3259 = vmatpush1.msra.mxu0 0.0
        %3260 = vmatprep.subr.mxu0 0.0
        %3261 = vmatpush1.msra.mxu0 0.0
        %3262 = vmatprep.subr.mxu0 0.0
        %3263 = vmatpush1.msra.mxu0 0.0
        %3264 = vmatprep.subr.mxu0 0.0
        %3265 = vmatpush1.msra.mxu0 0.0
        %3266 = vmatprep.subr.mxu0 0.0
        %3267 = vmatpush1.msra.mxu0 0.0
        %3268 = vmatprep.subr.mxu0 0.0
        %3269 = vmatpush1.msra.mxu0 0.0
        %3270 = vmatprep.subr.mxu0 0.0
        %3271 = vmatpush1.msra.mxu0 0.0
        %3272 = vmatprep.subr.mxu0 0.0
        %3273 = vmatpush1.msra.mxu0 0.0
        %3274 = vmatprep.subr.mxu0 0.0
        %3275 = vmatpush1.msra.mxu0 0.0
        %3276 = vmatprep.subr.mxu0 0.0
        %3277 = vmatpush1.msra.mxu0 0.0
        %3278 = vmatprep.subr.mxu0 0.0
        %3279 = vmatpush1.msra.mxu0 0.0
        %3280 = vmatprep.subr.mxu0 0.0
        %3281 = vmatpush1.msra.mxu0 0.0
        %3282 = vmatprep.subr.mxu0 0.0
        %3283 = vmatpush1.msra.mxu0 0.0
        %3284 = vmatprep.subr.mxu0 0.0
        %3285 = vmatpush1.msra.mxu0 0.0
        %3286 = vmatprep.subr.mxu0 0.0
        %3287 = vmatpush1.msra.mxu0 0.0
        %3288 = vmatprep.subr.mxu0 0.0
        %3289 = vmatpush1.msra.mxu0 0.0
        %3290 = vmatprep.subr.mxu0 0.0
        %3291 = vmatpush1.msra.mxu0 0.0
        %3292 = vmatprep.subr.mxu0 0.0
        %3293 = vmatpush1.msra.mxu0 0.0
        %3294 = vmatprep.subr.mxu0 0.0
        %3295 = vmatpush1.msra.mxu0 0.0
        %3296 = vmatprep.mubr.f32.mxu0 0.0
        %3297 = vmatmul.mubr.f32.gmra.mrb[0].mxu0 %v3230
        %v3298 = vpop.f32.mrb[0].mxu0
        %v3299 = vadd.f32 0.0, %v3298
        %v3300 = vpop.f32.mrb[0].mxu0
        %3301 = vdwg.mxu0
        %v3303 = vsel %vm706, %v2918, 0
        %3305 = vmatprep.subr.mxu0 0.0
        %3306 = vmatpush1.msra.mxu0 %v2934
        %3307 = vmatprep.subr.mxu0 0.0
        %3308 = vmatpush1.msra.mxu0 0.0
        %3309 = vmatprep.subr.mxu0 0.0
        %3310 = vmatpush1.msra.mxu0 0.0
        %3311 = vmatprep.subr.mxu0 0.0
        %3312 = vmatpush1.msra.mxu0 0.0
        %3313 = vmatprep.subr.mxu0 0.0
        %3314 = vmatpush1.msra.mxu0 0.0
        %3315 = vmatprep.subr.mxu0 0.0
        %3316 = vmatpush1.msra.mxu0 0.0
        %3317 = vmatprep.subr.mxu0 0.0
        %3318 = vmatpush1.msra.mxu0 0.0
        %3319 = vmatprep.subr.mxu0 0.0
        %3320 = vmatpush1.msra.mxu0 0.0
        %3321 = vmatprep.subr.mxu0 0.0
        %3322 = vmatpush1.msra.mxu0 0.0
        %3323 = vmatprep.subr.mxu0 0.0
        %3324 = vmatpush1.msra.mxu0 0.0
        %3325 = vmatprep.subr.mxu0 0.0
        %3326 = vmatpush1.msra.mxu0 0.0
        %3327 = vmatprep.subr.mxu0 0.0
        %3328 = vmatpush1.msra.mxu0 0.0
        %3329 = vmatprep.subr.mxu0 0.0
        %3330 = vmatpush1.msra.mxu0 0.0
        %3331 = vmatprep.subr.mxu0 0.0
        %3332 = vmatpush1.msra.mxu0 0.0
        %3333 = vmatprep.subr.mxu0 0.0
        %3334 = vmatpush1.msra.mxu0 0.0
        %3335 = vmatprep.subr.mxu0 0.0
        %3336 = vmatpush1.msra.mxu0 0.0
        %3337 = vmatprep.subr.mxu0 0.0
        %3338 = vmatpush1.msra.mxu0 0.0
        %3339 = vmatprep.subr.mxu0 0.0
        %3340 = vmatpush1.msra.mxu0 0.0
        %3341 = vmatprep.subr.mxu0 0.0
        %3342 = vmatpush1.msra.mxu0 0.0
        %3343 = vmatprep.subr.mxu0 0.0
        %3344 = vmatpush1.msra.mxu0 0.0
        %3345 = vmatprep.subr.mxu0 0.0
        %3346 = vmatpush1.msra.mxu0 0.0
        %3347 = vmatprep.subr.mxu0 0.0
        %3348 = vmatpush1.msra.mxu0 0.0
        %3349 = vmatprep.subr.mxu0 0.0
        %3350 = vmatpush1.msra.mxu0 0.0
        %3351 = vmatprep.subr.mxu0 0.0
        %3352 = vmatpush1.msra.mxu0 0.0
        %3353 = vmatprep.subr.mxu0 0.0
        %3354 = vmatpush1.msra.mxu0 0.0
        %3355 = vmatprep.subr.mxu0 0.0
        %3356 = vmatpush1.msra.mxu0 0.0
        %3357 = vmatprep.subr.mxu0 0.0
        %3358 = vmatpush1.msra.mxu0 0.0
        %3359 = vmatprep.subr.mxu0 0.0
        %3360 = vmatpush1.msra.mxu0 0.0
        %3361 = vmatprep.subr.mxu0 0.0
        %3362 = vmatpush1.msra.mxu0 0.0
        %3363 = vmatprep.subr.mxu0 0.0
        %3364 = vmatpush1.msra.mxu0 0.0
        %3365 = vmatprep.subr.mxu0 0.0
        %3366 = vmatpush1.msra.mxu0 0.0
        %3367 = vmatprep.subr.mxu0 0.0
        %3368 = vmatpush1.msra.mxu0 0.0
        %3369 = vmatprep.mubr.f32.mxu0 0.0
        %3370 = vmatmul.mubr.f32.gmra.mrb[0].mxu0 %v3303
        %v3371 = vpop.f32.mrb[0].mxu0
        %v3372 = vadd.f32 0.0, %v3371
        %v3373 = vpop.f32.mrb[0].mxu0
        %3374 = vdwg.mxu0
        %v3376 = vsel %vm706, %v2919, 0
        %3378 = vmatprep.subr.mxu0 0.0
        %3379 = vmatpush1.msra.mxu0 %v2935
        %3380 = vmatprep.subr.mxu0 0.0
        %3381 = vmatpush1.msra.mxu0 0.0
        %3382 = vmatprep.subr.mxu0 0.0
        %3383 = vmatpush1.msra.mxu0 0.0
        %3384 = vmatprep.subr.mxu0 0.0
        %3385 = vmatpush1.msra.mxu0 0.0
        %3386 = vmatprep.subr.mxu0 0.0
        %3387 = vmatpush1.msra.mxu0 0.0
        %3388 = vmatprep.subr.mxu0 0.0
        %3389 = vmatpush1.msra.mxu0 0.0
        %3390 = vmatprep.subr.mxu0 0.0
        %3391 = vmatpush1.msra.mxu0 0.0
        %3392 = vmatprep.subr.mxu0 0.0
        %3393 = vmatpush1.msra.mxu0 0.0
        %3394 = vmatprep.subr.mxu0 0.0
        %3395 = vmatpush1.msra.mxu0 0.0
        %3396 = vmatprep.subr.mxu0 0.0
        %3397 = vmatpush1.msra.mxu0 0.0
        %3398 = vmatprep.subr.mxu0 0.0
        %3399 = vmatpush1.msra.mxu0 0.0
        %3400 = vmatprep.subr.mxu0 0.0
        %3401 = vmatpush1.msra.mxu0 0.0
        %3402 = vmatprep.subr.mxu0 0.0
        %3403 = vmatpush1.msra.mxu0 0.0
        %3404 = vmatprep.subr.mxu0 0.0
        %3405 = vmatpush1.msra.mxu0 0.0
        %3406 = vmatprep.subr.mxu0 0.0
        %3407 = vmatpush1.msra.mxu0 0.0
        %3408 = vmatprep.subr.mxu0 0.0
        %3409 = vmatpush1.msra.mxu0 0.0
        %3410 = vmatprep.subr.mxu0 0.0
        %3411 = vmatpush1.msra.mxu0 0.0
        %3412 = vmatprep.subr.mxu0 0.0
        %3413 = vmatpush1.msra.mxu0 0.0
        %3414 = vmatprep.subr.mxu0 0.0
        %3415 = vmatpush1.msra.mxu0 0.0
        %3416 = vmatprep.subr.mxu0 0.0
        %3417 = vmatpush1.msra.mxu0 0.0
        %3418 = vmatprep.subr.mxu0 0.0
        %3419 = vmatpush1.msra.mxu0 0.0
        %3420 = vmatprep.subr.mxu0 0.0
        %3421 = vmatpush1.msra.mxu0 0.0
        %3422 = vmatprep.subr.mxu0 0.0
        %3423 = vmatpush1.msra.mxu0 0.0
        %3424 = vmatprep.subr.mxu0 0.0
        %3425 = vmatpush1.msra.mxu0 0.0
        %3426 = vmatprep.subr.mxu0 0.0
        %3427 = vmatpush1.msra.mxu0 0.0
        %3428 = vmatprep.subr.mxu0 0.0
        %3429 = vmatpush1.msra.mxu0 0.0
        %3430 = vmatprep.subr.mxu0 0.0
        %3431 = vmatpush1.msra.mxu0 0.0
        %3432 = vmatprep.subr.mxu0 0.0
        %3433 = vmatpush1.msra.mxu0 0.0
        %3434 = vmatprep.subr.mxu0 0.0
        %3435 = vmatpush1.msra.mxu0 0.0
        %3436 = vmatprep.subr.mxu0 0.0
        %3437 = vmatpush1.msra.mxu0 0.0
        %3438 = vmatprep.subr.mxu0 0.0
        %3439 = vmatpush1.msra.mxu0 0.0
        %3440 = vmatprep.subr.mxu0 0.0
        %3441 = vmatpush1.msra.mxu0 0.0
        %3442 = vmatprep.mubr.f32.mxu0 0.0
        %3443 = vmatmul.mubr.f32.gmra.mrb[0].mxu0 %v3376
        %v3444 = vpop.f32.mrb[0].mxu0
        %v3445 = vadd.f32 0.0, %v3444
        %v3446 = vpop.f32.mrb[0].mxu0
        %3447 = vdwg.mxu0
        %v3449 = vsel %vm706, %v2920, 0
        %3451 = vmatprep.subr.mxu0 0.0
        %3452 = vmatpush1.msra.mxu0 %v2936
        %3453 = vmatprep.subr.mxu0 0.0
        %3454 = vmatpush1.msra.mxu0 0.0
        %3455 = vmatprep.subr.mxu0 0.0
        %3456 = vmatpush1.msra.mxu0 0.0
        %3457 = vmatprep.subr.mxu0 0.0
        %3458 = vmatpush1.msra.mxu0 0.0
        %3459 = vmatprep.subr.mxu0 0.0
        %3460 = vmatpush1.msra.mxu0 0.0
        %3461 = vmatprep.subr.mxu0 0.0
        %3462 = vmatpush1.msra.mxu0 0.0
        %3463 = vmatprep.subr.mxu0 0.0
        %3464 = vmatpush1.msra.mxu0 0.0
        %3465 = vmatprep.subr.mxu0 0.0
        %3466 = vmatpush1.msra.mxu0 0.0
        %3467 = vmatprep.subr.mxu0 0.0
        %3468 = vmatpush1.msra.mxu0 0.0
        %3469 = vmatprep.subr.mxu0 0.0
        %3470 = vmatpush1.msra.mxu0 0.0
        %3471 = vmatprep.subr.mxu0 0.0
        %3472 = vmatpush1.msra.mxu0 0.0
        %3473 = vmatprep.subr.mxu0 0.0
        %3474 = vmatpush1.msra.mxu0 0.0
        %3475 = vmatprep.subr.mxu0 0.0
        %3476 = vmatpush1.msra.mxu0 0.0
        %3477 = vmatprep.subr.mxu0 0.0
        %3478 = vmatpush1.msra.mxu0 0.0
        %3479 = vmatprep.subr.mxu0 0.0
        %3480 = vmatpush1.msra.mxu0 0.0
        %3481 = vmatprep.subr.mxu0 0.0
        %3482 = vmatpush1.msra.mxu0 0.0
        %3483 = vmatprep.subr.mxu0 0.0
        %3484 = vmatpush1.msra.mxu0 0.0
        %3485 = vmatprep.subr.mxu0 0.0
        %3486 = vmatpush1.msra.mxu0 0.0
        %3487 = vmatprep.subr.mxu0 0.0
        %3488 = vmatpush1.msra.mxu0 0.0
        %3489 = vmatprep.subr.mxu0 0.0
        %3490 = vmatpush1.msra.mxu0 0.0
        %3491 = vmatprep.subr.mxu0 0.0
        %3492 = vmatpush1.msra.mxu0 0.0
        %3493 = vmatprep.subr.mxu0 0.0
        %3494 = vmatpush1.msra.mxu0 0.0
        %3495 = vmatprep.subr.mxu0 0.0
        %3496 = vmatpush1.msra.mxu0 0.0
        %3497 = vmatprep.subr.mxu0 0.0
        %3498 = vmatpush1.msra.mxu0 0.0
        %3499 = vmatprep.subr.mxu0 0.0
        %3500 = vmatpush1.msra.mxu0 0.0
        %3501 = vmatprep.subr.mxu0 0.0
        %3502 = vmatpush1.msra.mxu0 0.0
        %3503 = vmatprep.subr.mxu0 0.0
        %3504 = vmatpush1.msra.mxu0 0.0
        %3505 = vmatprep.subr.mxu0 0.0
        %3506 = vmatpush1.msra.mxu0 0.0
        %3507 = vmatprep.subr.mxu0 0.0
        %3508 = vmatpush1.msra.mxu0 0.0
        %3509 = vmatprep.subr.mxu0 0.0
        %3510 = vmatpush1.msra.mxu0 0.0
        %3511 = vmatprep.subr.mxu0 0.0
        %3512 = vmatpush1.msra.mxu0 0.0
        %3513 = vmatprep.subr.mxu0 0.0
        %3514 = vmatpush1.msra.mxu0 0.0
        %3515 = vmatprep.mubr.f32.mxu0 0.0
        %3516 = vmatmul.mubr.f32.gmra.mrb[0].mxu0 %v3449
        %v3517 = vpop.f32.mrb[0].mxu0
        %v3518 = vadd.f32 0.0, %v3517
        %v3519 = vpop.f32.mrb[0].mxu0
        %3520 = vdwg.mxu0
        %vm3521 = vcmask 1042432
        %v3522 = vsel %vm3521, %v3007, 0.0
        %v3523 = vsel %vm3521, %v3080, 0.0
        %v3524 = vadd.f32 %v3522, %v3523
        %v3525 = vsel %vm3521, %v3153, 0.0
        %v3526 = vadd.f32 %v3524, %v3525
        %v3527 = vsel %vm3521, %v3226, 0.0
        %v3528 = vadd.f32 %v3526, %v3527
        %v3529 = vsel %vm3521, %v3299, 0.0
        %v3530 = vadd.f32 %v3528, %v3529
        %v3531 = vsel %vm3521, %v3372, 0.0
        %v3532 = vadd.f32 %v3530, %v3531
        %v3533 = vsel %vm3521, %v3445, 0.0
        %v3534 = vadd.f32 %v3532, %v3533
        %v3535 = vsel %vm3521, %v3518, 0.0
        %v3536 = vadd.f32 %v3534, %v3535
        %p3537 = scmp.eq.s32.totalorder %s19, 0
        // Predicated region
        $region128: #{tpu_custom_call.1} parent=118 // pred_check
          %p3538 = pneg %p3537
        $region129: #{tpu_custom_call.1} parent=118 // pred_check_branch
          %3540 = sbr.rel (%p3538) target = $region131
        $region130: #{tpu_custom_call.1} parent=118 // pred_region
          %3541 = vst [vmem:[#allocation4] sm:$0x7] 0.0
        $region131: #{tpu_custom_call.1} parent=118 // pred_fallthru
          _
        %v3542 = vld [vmem:[#allocation4] sm:$0x7]
        %v3543 = vadd.f32 %v3542, %v3536
        %3544 = vst [vmem:[#allocation4] sm:$0x7] %v3543
        %p3545 = scmp.eq.s32.totalorder %s19, 1
        // Predicated region
        $region132: #{tpu_custom_call.1} parent=118 // pred_check
          %p3546 = pneg %p3545
        $region133: #{tpu_custom_call.1} parent=118 // pred_check_branch
          %3548 = sbr.rel (%p3546) target = $region135
        $region134: #{tpu_custom_call.1} parent=118 // pred_region
          %v3549 = vld [vmem:[#allocation4] sm:$0x7]
          %v3550 = vld [vmem:[%s6] sm:$0x1]
          %v3552 = vlaneseq
          %v3553 = vshrl.u32 %v3552, 7
          %v3554 = vsub.s32 0, %v3553
          %v3555 = vrot.slane %v3550, %v3554
          %v3557 = vmul.f32 %v3549, %v3555
          %3558 = vst [vmem:[#allocation4] sm:$0x7] %v3557
        $region135: #{tpu_custom_call.1} parent=118 // pred_fallthru
          _
        // Predicated region
        $region136: #{tpu_custom_call.1} parent=118 // pred_check
          %p3559 = pneg %p209
        $region137: #{tpu_custom_call.1} parent=118 // pred_check_branch
          %3561 = sbr.rel (%p3559) target = $region139
        $region138: #{tpu_custom_call.1} parent=118 // pred_region
          %s3563 = ssub.s32 64, 64
          %3564 = vsyncadd [#allocation5], %s3563
          %s3566 = sshll.u32 [#allocation4], 4
          %s3567 = int_to_ptr.vmem [resolvable:$true] %s3566
          %3569 = dma.vmem_to_hbm [thread:$0]  %s3567, 64, %s7, [#allocation5]
        $region139: #{tpu_custom_call.1} parent=118 // pred_fallthru
          _
        // Predicated region
        $region140: #{tpu_custom_call.1} parent=118 // pred_check
          %p3570 = pneg %p209
        $region141: #{tpu_custom_call.1} parent=118 // pred_check_branch
          %3572 = sbr.rel (%p3570) target = $region143
        $region142: #{tpu_custom_call.1} parent=118 // pred_region
          %3573 = dma.done [#allocation5], 64
        $region143: #{tpu_custom_call.1} parent=118 // pred_fallthru
          _
      $region119: #{tpu_custom_call.1} parent=5 // pred_fallthru
        _
      %p3574 = scmp.le.s32.totalorder 2, %s14
      // Predicated region
      $region144: #{tpu_custom_call.1} parent=5 // pred_check
        %p3575 = pneg %p3574
      $region145: #{tpu_custom_call.1} parent=5 // pred_check_branch
        %3577 = sbr.rel (%p3575) target = $region147
      $region146: #{tpu_custom_call.1} parent=5 // pred_region
        %s3578 = ssub.s32 %s14, 2
      $region147: #{tpu_custom_call.1} parent=5 // pred_fallthru
        _
    $region6: #{tpu_custom_call.1} parent=1 // loop_footer
      %s18 = sadd.s32 1, %s14
    $region7: #{tpu_custom_call.1} parent=1 // loop_footer_branch
      %13 = sbr.rel target = $region3
    $region8: #{tpu_custom_call.1} parent=1 // loop_exit
      _
    %3579 = vsyncpa [#allocation5], 1
    %s3580 = scalar_lea.sflag [#allocation5], 1
    %3581 = vsyncpa %s3580, 1

</llo_original>
